<compile_context>
chip_gen: v5e
topology: v5e:2x2
jax: 0.10.0
libtpu: 0.0.40
codegen_flags: <defaults>
</compile_context>

<pallas_src>
import jax
import jax.numpy as jnp
from jax import lax
from jax.experimental import pallas as pl
from jax.experimental.pallas import tpu as pltpu

B, C, H, W = 2, 60, 16, 16      # small shapes; C divisible by 30 (GroupNorm groups)
GROUPS = 30
CPG = C // GROUPS               # channels per group (pair-average path needs 2)
CP = 128                        # channel dim padded to one full lane tile
HW = H * W
W_BITS = W.bit_length() - 1     # W is a power of two -> mask math via shift/and
EPS = 1e-5                      # GroupNorm eps (PyTorch default)

assert CPG == 2, "GroupNorm pair-average path assumes 2 channels per group"
assert W == (1 << W_BITS), "boundary-mask bit ops assume W is a power of two"


# --------------------------------------------------------------------------
# Pallas kernel: one batch element per grid step, fully fused
#   GN1 -> ReLU -> conv1x1 -> GN2 -> ReLU -> conv3x3(pad=1, roll+mask taps)
#   -> GN3 -> ReLU -> conv1x1 -> + identity
# Conv weights arrive weight-standardized, laid out (Cin, Cout), zero-padded
# to CP channels and cast to bf16 (f32 MXU accumulation).
# --------------------------------------------------------------------------
def expand_block_kernel(x_ref, gnp_ref, w1_ref, w3_ref, w5_ref, o_ref):
    xf = x_ref[...].reshape(HW, CP)                   # one batch element, f32

    # ---- GroupNorm with 2 channels/group: pair-average stats via lane rolls.
    lane = lax.broadcasted_iota(jnp.int32, (1, CP), 1)
    even_lane = jnp.bitwise_and(lane, 1) == 0

    def pair_avg(v):                                  # v: (1, CP) f32
        nxt = pltpu.roll(v, shift=CP - 1, axis=1)     # v[:, c + 1]
        prv = pltpu.roll(v, shift=1, axis=1)          # v[:, c - 1]
        return 0.5 * (v + jnp.where(even_lane, nxt, prv))

    def group_norm(z, gamma, beta):                   # z: (HW, CP) f32
        mean = jnp.mean(z, axis=0, keepdims=True)     # per-channel spatial mean
        msq = jnp.mean(z * z, axis=0, keepdims=True)
        gmean = pair_avg(mean)                        # per-group stats (exact f32)
        var = jnp.maximum(pair_avg(msq) - gmean * gmean, 0.0)
        inv = lax.rsqrt(var + EPS)
        scale = inv * gamma                           # fold affine
        bias = beta - gmean * scale
        return z * scale + bias

    g1, b1 = gnp_ref[0:1, :], gnp_ref[1:2, :]
    g2, b2 = gnp_ref[2:3, :], gnp_ref[3:4, :]
    g3, b3 = gnp_ref[4:5, :], gnp_ref[5:6, :]

    # ---- bn1 -> relu -> conv1x1 (bf16 MXU operands, f32 accumulation)
    h1 = jnp.maximum(group_norm(xf, g1, b1), 0.0)
    y1 = jnp.dot(h1.astype(jnp.bfloat16), w1_ref[...],
                 preferred_element_type=jnp.float32)

    # ---- bn2 -> relu
    h2 = jnp.maximum(group_norm(y1, g2, b2), 0.0)

    # ---- conv3x3 (padding=1): per-tap sublane roll + boundary mask,
    #      9 accumulated (HW,CP)x(CP,CP) matmuls (no im2col buffer).
    ridx = lax.broadcasted_iota(jnp.int32, (HW, 1), 0)
    yy = jnp.right_shift(ridx, W_BITS)                # ridx // W
    xx = jnp.bitwise_and(ridx, W - 1)                 # ridx %  W

    y2 = jnp.zeros((HW, CP), jnp.float32)
    for k in range(9):
        dy, dx = k // 3 - 1, k % 3 - 1
        off = dy * W + dx
        # tap[i] = h2_flat[(i + off) % HW]   (np.roll semantics: out[i]=in[i-s])
        tap = h2 if off == 0 else pltpu.roll(h2, shift=(-off) % HW, axis=0)
        cond = None
        if dy == -1:
            cond = yy >= 1
        elif dy == 1:
            cond = yy <= H - 2
        if dx != 0:
            cx = (xx >= 1) if dx == -1 else (xx <= W - 2)
            cond = cx if cond is None else jnp.logical_and(cond, cx)
        if cond is not None:
            tap = jnp.where(cond, tap, 0.0)           # zero-padding boundary
        y2 = y2 + jnp.dot(tap.astype(jnp.bfloat16), w3_ref[k],
                          preferred_element_type=jnp.float32)

    # ---- bn3 -> relu -> conv1x1
    h3 = jnp.maximum(group_norm(y2, g3, b3), 0.0)
    y3 = jnp.dot(h3.astype(jnp.bfloat16), w5_ref[...],
                 preferred_element_type=jnp.float32)

    # ---- residual add (downsample is None -> identity is the raw input)
    o_ref[...] = (y3 + xf).reshape(1, H, W, CP)


def expand_block_pallas(x_nhwc_p, gnp_p, w1, w3, w5):
    return pl.pallas_call(
        expand_block_kernel,
        out_shape=jax.ShapeDtypeStruct((B, H, W, CP), jnp.float32),
        grid_spec=pltpu.PrefetchScalarGridSpec(
            num_scalar_prefetch=0,
            grid=(B,),                                # one batch element / step
            in_specs=[
                pl.BlockSpec((1, H, W, CP), lambda b: (b, 0, 0, 0)),   # x
                pl.BlockSpec((6, CP), lambda b: (0, 0)),               # GN gamma/beta
                pl.BlockSpec((CP, CP), lambda b: (0, 0)),              # conv1 W
                pl.BlockSpec((9, CP, CP), lambda b: (0, 0, 0)),        # conv2 W (per tap)
                pl.BlockSpec((CP, CP), lambda b: (0, 0)),              # conv3 W
            ],
            out_specs=pl.BlockSpec((1, H, W, CP), lambda b: (b, 0, 0, 0)),
        ),
        compiler_params=pltpu.CompilerParams(
            dimension_semantics=("parallel",)),       # megacore-shard on v7x
    )(x_nhwc_p, gnp_p, w1, w3, w5)


# --------------------------------------------------------------------------
# Glue: weight standardization (the custom Conv2d forward's weight transform)
# --------------------------------------------------------------------------
def standardize(w):  # w: (Cout, Cin, kh, kw), matches PyTorch Conv2d.forward
    mean = w.mean(axis=(1, 2, 3), keepdims=True)
    wc = w - mean
    std = jnp.std(wc.reshape(w.shape[0], -1), axis=1, ddof=1).reshape(-1, 1, 1, 1)
    return wc / (std + 1e-5)


# --------------------------------------------------------------------------
# Pure-JAX NCHW reference for correctness checking
# --------------------------------------------------------------------------
def group_norm_ref(x, gamma, beta):
    b, c, h, w = x.shape
    xg = x.reshape(b, GROUPS, c // GROUPS, h, w)
    mean = xg.mean(axis=(2, 3, 4), keepdims=True)
    var = xg.var(axis=(2, 3, 4), keepdims=True)
    xn = ((xg - mean) / jnp.sqrt(var + EPS)).reshape(b, c, h, w)
    return xn * gamma[None, :, None, None] + beta[None, :, None, None]


def ws_conv_ref(x, w, padding):
    return jax.lax.conv_general_dilated(
        x, standardize(w), window_strides=(1, 1),
        padding=[(padding, padding), (padding, padding)],
        dimension_numbers=("NCHW", "OIHW", "NCHW"))


def expand_block_ref(x, p):
    out = jax.nn.relu(group_norm_ref(x, p["g1"], p["b1"]))
    out = ws_conv_ref(out, p["w_conv1"], 0)
    out = jax.nn.relu(group_norm_ref(out, p["g2"], p["b2"]))
    out = ws_conv_ref(out, p["w_conv2"], 1)
    out = jax.nn.relu(group_norm_ref(out, p["g3"], p["b3"]))
    out = ws_conv_ref(out, p["w_conv3"], 0)
    return out + x


if __name__ == "__main__":
    key = jax.random.PRNGKey(0)
    ks = jax.random.split(key, 10)
    x = jax.random.normal(ks[0], (B, C, H, W), jnp.float32)

    # deterministic parameter init (shapes implied by ExpandBlock.__init__)
    p = dict(
        w_conv1=0.1 * jax.random.normal(ks[1], (C, C, 1, 1), jnp.float32),
        w_conv2=0.1 * jax.random.normal(ks[2], (C, C, 3, 3), jnp.float32),
        w_conv3=0.1 * jax.random.normal(ks[3], (C, C, 1, 1), jnp.float32),
        g1=1.0 + 0.1 * jax.random.normal(ks[4], (C,), jnp.float32),
        b1=0.1 * jax.random.normal(ks[5], (C,), jnp.float32),
        g2=1.0 + 0.1 * jax.random.normal(ks[6], (C,), jnp.float32),
        b2=0.1 * jax.random.normal(ks[7], (C,), jnp.float32),
        g3=1.0 + 0.1 * jax.random.normal(ks[8], (C,), jnp.float32),
        b3=0.1 * jax.random.normal(ks[9], (C,), jnp.float32),
    )
    # TODO(synk): se=True (SELayer) and downsample branches are not exercised
    # (module defaults are se=False, downsample=None).

    # conv1 / conv3 (1x1): standardize, lay out (Cin, Cout), zero-pad, bf16.
    w1t = standardize(p["w_conv1"])[:, :, 0, 0].T                      # (C, C)
    w1_p = jnp.zeros((CP, CP), jnp.float32).at[:C, :C].set(w1t).astype(jnp.bfloat16)
    w5t = standardize(p["w_conv3"])[:, :, 0, 0].T                      # (C, C)
    w5_p = jnp.zeros((CP, CP), jnp.float32).at[:C, :C].set(w5t).astype(jnp.bfloat16)

    # conv2 (3x3): one (Cin, Cout) slab per tap k = ky*3 + kx.
    w2s = standardize(p["w_conv2"])                                    # (C, C, 3, 3)
    w3_p = jnp.zeros((9, CP, CP), jnp.float32)
    for k in range(9):
        ky, kx = k // 3, k % 3
        w3_p = w3_p.at[k, :C, :C].set(w2s[:, :, ky, kx].T)
    w3_p = w3_p.astype(jnp.bfloat16)

    gnp = jnp.stack([p["g1"], p["b1"], p["g2"], p["b2"], p["g3"], p["b3"]])  # (6, C)
    gnp_p = jnp.pad(gnp, ((0, 0), (0, CP - C)))                        # pad gamma/beta = 0

    x_nhwc = jnp.transpose(x, (0, 2, 3, 1))                            # (B,H,W,C)
    x_p = jnp.pad(x_nhwc, ((0, 0), (0, 0), (0, 0), (0, CP - C)))       # (B,H,W,CP)

    out_nhwc = expand_block_pallas(x_p, gnp_p, w1_p, w3_p, w5_p)
    out = jnp.transpose(out_nhwc[:, :, :, :C], (0, 3, 1, 2))
    jax.block_until_ready(out)

    ref = expand_block_ref(x, p)
    err = jnp.max(jnp.abs(out - ref)) / (jnp.max(jnp.abs(ref)) + 1.0)
    # Tolerance reflects bf16 MXU inputs (f32 accumulation) across three
    # chained WS-conv + GroupNorm stages; real bugs produce O(0.1+) errors.
    assert err < 2e-2, f"mismatch: relative max error {err}"
    print("KERNEL_OK")
</pallas_src>

<mosaic_0001>
module attributes {stable_mosaic.version = 11 : i64} {
  func.func @expand_block_kernel(%arg0: i32, %arg1: memref<1x16x16x128xf32, #tpu.memory_space<vmem>>, %arg2: memref<6x128xf32, #tpu.memory_space<vmem>>, %arg3: memref<128x128xbf16, #tpu.memory_space<vmem>>, %arg4: memref<9x128x128xbf16, #tpu.memory_space<vmem>>, %arg5: memref<128x128xbf16, #tpu.memory_space<vmem>>, %arg6: memref<1x16x16x128xf32, #tpu.memory_space<vmem>>) attributes {dimension_semantics = [#tpu.dimension_semantics<parallel>], iteration_bounds = array<i64: 2>, scalar_prefetch = 0 : i64, scratch_operands = 0 : i64, tpu.core_type = #tpu.core_type<tc>, window_params = [{transform_indices = @transform_0, window_bounds = array<i64: 1, 16, 16, 128>}, {pipeline_mode = #tpu.pipeline_mode<synchronous>, transform_indices = @transform_1, window_bounds = array<i64: 6, 128>}, {pipeline_mode = #tpu.pipeline_mode<synchronous>, transform_indices = @transform_2, window_bounds = array<i64: 128, 128>}, {pipeline_mode = #tpu.pipeline_mode<synchronous>, transform_indices = @transform_3, window_bounds = array<i64: 9, 128, 128>}, {pipeline_mode = #tpu.pipeline_mode<synchronous>, transform_indices = @transform_4, window_bounds = array<i64: 128, 128>}, {transform_indices = @transform_5, window_bounds = array<i64: 1, 16, 16, 128>}]} {
    %c0 = arith.constant 0 : index
    %c0_0 = arith.constant 0 : index
    %c0_1 = arith.constant 0 : index
    %c0_2 = arith.constant 0 : index
    %0 = vector.load %arg1[%c0, %c0_0, %c0_1, %c0_2] : memref<1x16x16x128xf32, #tpu.memory_space<vmem>>, vector<1x16x16x128xf32>
    %1 = vector.shape_cast %0 : vector<1x16x16x128xf32> to vector<256x128xf32>
    %2 = tpu.iota {dimensions = array<i32: 1>} : vector<1x128xi32>
    %c1_i32 = arith.constant 1 : i32
    %3 = vector.broadcast %c1_i32 : i32 to vector<1x128xi32>
    %4 = arith.andi %2, %3 : vector<1x128xi32>
    %c0_i32 = arith.constant 0 : i32
    %5 = vector.broadcast %c0_i32 : i32 to vector<1x128xi32>
    %6 = arith.cmpi eq, %4, %5 : vector<1x128xi32>
    %c0_3 = arith.constant 0 : index
    %c0_4 = arith.constant 0 : index
    %7 = vector.load %arg2[%c0_3, %c0_4] : memref<6x128xf32, #tpu.memory_space<vmem>>, vector<1x128xf32>
    %c1 = arith.constant 1 : index
    %c0_5 = arith.constant 0 : index
    %8 = vector.load %arg2[%c1, %c0_5] : memref<6x128xf32, #tpu.memory_space<vmem>>, vector<1x128xf32>
    %c2 = arith.constant 2 : index
    %c0_6 = arith.constant 0 : index
    %9 = vector.load %arg2[%c2, %c0_6] : memref<6x128xf32, #tpu.memory_space<vmem>>, vector<1x128xf32>
    %c3 = arith.constant 3 : index
    %c0_7 = arith.constant 0 : index
    %10 = vector.load %arg2[%c3, %c0_7] : memref<6x128xf32, #tpu.memory_space<vmem>>, vector<1x128xf32>
    %c4 = arith.constant 4 : index
    %c0_8 = arith.constant 0 : index
    %11 = vector.load %arg2[%c4, %c0_8] : memref<6x128xf32, #tpu.memory_space<vmem>>, vector<1x128xf32>
    %c5 = arith.constant 5 : index
    %c0_9 = arith.constant 0 : index
    %12 = vector.load %arg2[%c5, %c0_9] : memref<6x128xf32, #tpu.memory_space<vmem>>, vector<1x128xf32>
    %cst = arith.constant dense<0.000000e+00> : vector<128xf32>
    %13 = vector.multi_reduction <add>, %1, %cst [0] : vector<256x128xf32> to vector<128xf32>
    %14 = vector.shape_cast %13 : vector<128xf32> to vector<1x128xf32>
    %cst_10 = arith.constant 2.560000e+02 : f32
    %15 = vector.broadcast %cst_10 : f32 to vector<1x128xf32>
    %16 = arith.divf %14, %15 : vector<1x128xf32>
    %17 = arith.mulf %1, %1 : vector<256x128xf32>
    %cst_11 = arith.constant dense<0.000000e+00> : vector<128xf32>
    %18 = vector.multi_reduction <add>, %17, %cst_11 [0] : vector<256x128xf32> to vector<128xf32>
    %19 = vector.shape_cast %18 : vector<128xf32> to vector<1x128xf32>
    %cst_12 = arith.constant 2.560000e+02 : f32
    %20 = vector.broadcast %cst_12 : f32 to vector<1x128xf32>
    %21 = arith.divf %19, %20 : vector<1x128xf32>
    %c127_i32 = arith.constant 127 : i32
    %22 = tpu.dynamic_rotate %16 by %c127_i32 dim 1 : vector<1x128xf32>, i32 -> vector<1x128xf32>
    %c1_i32_13 = arith.constant 1 : i32
    %23 = tpu.dynamic_rotate %16 by %c1_i32_13 dim 1 : vector<1x128xf32>, i32 -> vector<1x128xf32>
    %24 = arith.select %6, %22, %23 : vector<1x128xi1>, vector<1x128xf32>
    %25 = arith.addf %16, %24 : vector<1x128xf32>
    %cst_14 = arith.constant 5.000000e-01 : f32
    %26 = vector.broadcast %cst_14 : f32 to vector<1x128xf32>
    %27 = arith.mulf %26, %25 : vector<1x128xf32>
    %c127_i32_15 = arith.constant 127 : i32
    %28 = tpu.dynamic_rotate %21 by %c127_i32_15 dim 1 : vector<1x128xf32>, i32 -> vector<1x128xf32>
    %c1_i32_16 = arith.constant 1 : i32
    %29 = tpu.dynamic_rotate %21 by %c1_i32_16 dim 1 : vector<1x128xf32>, i32 -> vector<1x128xf32>
    %30 = arith.select %6, %28, %29 : vector<1x128xi1>, vector<1x128xf32>
    %31 = arith.addf %21, %30 : vector<1x128xf32>
    %cst_17 = arith.constant 5.000000e-01 : f32
    %32 = vector.broadcast %cst_17 : f32 to vector<1x128xf32>
    %33 = arith.mulf %32, %31 : vector<1x128xf32>
    %34 = arith.mulf %27, %27 : vector<1x128xf32>
    %35 = arith.subf %33, %34 : vector<1x128xf32>
    %cst_18 = arith.constant 0.000000e+00 : f32
    %36 = vector.broadcast %cst_18 : f32 to vector<1x128xf32>
    %37 = arith.maximumf %35, %36 : vector<1x128xf32>
    %cst_19 = arith.constant 9.99999974E-6 : f32
    %38 = vector.broadcast %cst_19 : f32 to vector<1x128xf32>
    %39 = arith.addf %37, %38 : vector<1x128xf32>
    %40 = math.rsqrt %39 : vector<1x128xf32>
    %41 = arith.mulf %40, %7 : vector<1x128xf32>
    %42 = arith.mulf %27, %41 : vector<1x128xf32>
    %43 = arith.subf %8, %42 : vector<1x128xf32>
    %44 = vector.broadcast %41 : vector<1x128xf32> to vector<256x128xf32>
    %45 = arith.mulf %1, %44 : vector<256x128xf32>
    %46 = vector.broadcast %43 : vector<1x128xf32> to vector<256x128xf32>
    %47 = arith.addf %45, %46 : vector<256x128xf32>
    %cst_20 = arith.constant 0.000000e+00 : f32
    %48 = vector.broadcast %cst_20 : f32 to vector<256x128xf32>
    %49 = arith.maximumf %47, %48 : vector<256x128xf32>
    %50 = arith.truncf %49 : vector<256x128xf32> to vector<256x128xbf16>
    %c0_21 = arith.constant 0 : index
    %c0_22 = arith.constant 0 : index
    %51 = vector.load %arg3[%c0_21, %c0_22] : memref<128x128xbf16, #tpu.memory_space<vmem>>, vector<128x128xbf16>
    %cst_23 = arith.constant dense<0.000000e+00> : vector<256x128xf32>
    %52 = tpu.matmul %50, %51, %cst_23 {dimension_numbers = #tpu.dot_dimension_numbers<[1], [0], [0], [1], [0, 0, 1, 1], [], []>} : vector<256x128xbf16>, vector<128x128xbf16>, vector<256x128xf32> -> vector<256x128xf32>
    %cst_24 = arith.constant dense<0.000000e+00> : vector<128xf32>
    %53 = vector.multi_reduction <add>, %52, %cst_24 [0] : vector<256x128xf32> to vector<128xf32>
    %54 = vector.shape_cast %53 : vector<128xf32> to vector<1x128xf32>
    %cst_25 = arith.constant 2.560000e+02 : f32
    %55 = vector.broadcast %cst_25 : f32 to vector<1x128xf32>
    %56 = arith.divf %54, %55 : vector<1x128xf32>
    %57 = arith.mulf %52, %52 : vector<256x128xf32>
    %cst_26 = arith.constant dense<0.000000e+00> : vector<128xf32>
    %58 = vector.multi_reduction <add>, %57, %cst_26 [0] : vector<256x128xf32> to vector<128xf32>
    %59 = vector.shape_cast %58 : vector<128xf32> to vector<1x128xf32>
    %cst_27 = arith.constant 2.560000e+02 : f32
    %60 = vector.broadcast %cst_27 : f32 to vector<1x128xf32>
    %61 = arith.divf %59, %60 : vector<1x128xf32>
    %c127_i32_28 = arith.constant 127 : i32
    %62 = tpu.dynamic_rotate %56 by %c127_i32_28 dim 1 : vector<1x128xf32>, i32 -> vector<1x128xf32>
    %c1_i32_29 = arith.constant 1 : i32
    %63 = tpu.dynamic_rotate %56 by %c1_i32_29 dim 1 : vector<1x128xf32>, i32 -> vector<1x128xf32>
    %64 = arith.select %6, %62, %63 : vector<1x128xi1>, vector<1x128xf32>
    %65 = arith.addf %56, %64 : vector<1x128xf32>
    %cst_30 = arith.constant 5.000000e-01 : f32
    %66 = vector.broadcast %cst_30 : f32 to vector<1x128xf32>
    %67 = arith.mulf %66, %65 : vector<1x128xf32>
    %c127_i32_31 = arith.constant 127 : i32
    %68 = tpu.dynamic_rotate %61 by %c127_i32_31 dim 1 : vector<1x128xf32>, i32 -> vector<1x128xf32>
    %c1_i32_32 = arith.constant 1 : i32
    %69 = tpu.dynamic_rotate %61 by %c1_i32_32 dim 1 : vector<1x128xf32>, i32 -> vector<1x128xf32>
    %70 = arith.select %6, %68, %69 : vector<1x128xi1>, vector<1x128xf32>
    %71 = arith.addf %61, %70 : vector<1x128xf32>
    %cst_33 = arith.constant 5.000000e-01 : f32
    %72 = vector.broadcast %cst_33 : f32 to vector<1x128xf32>
    %73 = arith.mulf %72, %71 : vector<1x128xf32>
    %74 = arith.mulf %67, %67 : vector<1x128xf32>
    %75 = arith.subf %73, %74 : vector<1x128xf32>
    %cst_34 = arith.constant 0.000000e+00 : f32
    %76 = vector.broadcast %cst_34 : f32 to vector<1x128xf32>
    %77 = arith.maximumf %75, %76 : vector<1x128xf32>
    %cst_35 = arith.constant 9.99999974E-6 : f32
    %78 = vector.broadcast %cst_35 : f32 to vector<1x128xf32>
    %79 = arith.addf %77, %78 : vector<1x128xf32>
    %80 = math.rsqrt %79 : vector<1x128xf32>
    %81 = arith.mulf %80, %9 : vector<1x128xf32>
    %82 = arith.mulf %67, %81 : vector<1x128xf32>
    %83 = arith.subf %10, %82 : vector<1x128xf32>
    %84 = vector.broadcast %81 : vector<1x128xf32> to vector<256x128xf32>
    %85 = arith.mulf %52, %84 : vector<256x128xf32>
    %86 = vector.broadcast %83 : vector<1x128xf32> to vector<256x128xf32>
    %87 = arith.addf %85, %86 : vector<256x128xf32>
    %cst_36 = arith.constant 0.000000e+00 : f32
    %88 = vector.broadcast %cst_36 : f32 to vector<256x128xf32>
    %89 = arith.maximumf %87, %88 : vector<256x128xf32>
    %90 = tpu.iota {dimensions = array<i32: 0>} : vector<256x1xi32>
    %c4_i32 = arith.constant 4 : i32
    %91 = vector.broadcast %c4_i32 : i32 to vector<256x1xi32>
    %92 = arith.shrsi %90, %91 : vector<256x1xi32>
    %c15_i32 = arith.constant 15 : i32
    %93 = vector.broadcast %c15_i32 : i32 to vector<256x1xi32>
    %94 = arith.andi %90, %93 : vector<256x1xi32>
    %cst_37 = arith.constant 0.000000e+00 : f32
    %95 = vector.broadcast %cst_37 : f32 to vector<256x128xf32>
    %c17_i32 = arith.constant 17 : i32
    %96 = tpu.dynamic_rotate %89 by %c17_i32 dim 0 : vector<256x128xf32>, i32 -> vector<256x128xf32>
    %c1_i32_38 = arith.constant 1 : i32
    %97 = vector.broadcast %c1_i32_38 : i32 to vector<256x1xi32>
    %98 = arith.cmpi sge, %92, %97 : vector<256x1xi32>
    %c1_i32_39 = arith.constant 1 : i32
    %99 = vector.broadcast %c1_i32_39 : i32 to vector<256x1xi32>
    %100 = arith.cmpi sge, %94, %99 : vector<256x1xi32>
    %101 = arith.andi %98, %100 : vector<256x1xi1>
    %cst_40 = arith.constant 0.000000e+00 : f32
    %102 = vector.shape_cast %101 : vector<256x1xi1> to vector<256x1xi1>
    %103 = vector.broadcast %102 : vector<256x1xi1> to vector<256x128xi1>
    %104 = vector.broadcast %cst_40 : f32 to vector<256x128xf32>
    %105 = arith.select %103, %96, %104 : vector<256x128xi1>, vector<256x128xf32>
    %106 = arith.truncf %105 : vector<256x128xf32> to vector<256x128xbf16>
    %c0_41 = arith.constant 0 : index
    %c0_42 = arith.constant 0 : index
    %c0_43 = arith.constant 0 : index
    %107 = vector.load %arg4[%c0_41, %c0_42, %c0_43] : memref<9x128x128xbf16, #tpu.memory_space<vmem>>, vector<1x128x128xbf16>
    %108 = vector.shape_cast %107 : vector<1x128x128xbf16> to vector<128x128xbf16>
    %cst_44 = arith.constant dense<0.000000e+00> : vector<256x128xf32>
    %109 = tpu.matmul %106, %108, %cst_44 {dimension_numbers = #tpu.dot_dimension_numbers<[1], [0], [0], [1], [0, 0, 1, 1], [], []>} : vector<256x128xbf16>, vector<128x128xbf16>, vector<256x128xf32> -> vector<256x128xf32>
    %110 = arith.addf %95, %109 : vector<256x128xf32>
    %c16_i32 = arith.constant 16 : i32
    %111 = tpu.dynamic_rotate %89 by %c16_i32 dim 0 : vector<256x128xf32>, i32 -> vector<256x128xf32>
    %c1_i32_45 = arith.constant 1 : i32
    %112 = vector.broadcast %c1_i32_45 : i32 to vector<256x1xi32>
    %113 = arith.cmpi sge, %92, %112 : vector<256x1xi32>
    %cst_46 = arith.constant 0.000000e+00 : f32
    %114 = vector.shape_cast %113 : vector<256x1xi1> to vector<256x1xi1>
    %115 = vector.broadcast %114 : vector<256x1xi1> to vector<256x128xi1>
    %116 = vector.broadcast %cst_46 : f32 to vector<256x128xf32>
    %117 = arith.select %115, %111, %116 : vector<256x128xi1>, vector<256x128xf32>
    %118 = arith.truncf %117 : vector<256x128xf32> to vector<256x128xbf16>
    %c1_47 = arith.constant 1 : index
    %c0_48 = arith.constant 0 : index
    %c0_49 = arith.constant 0 : index
    %119 = vector.load %arg4[%c1_47, %c0_48, %c0_49] : memref<9x128x128xbf16, #tpu.memory_space<vmem>>, vector<1x128x128xbf16>
    %120 = vector.shape_cast %119 : vector<1x128x128xbf16> to vector<128x128xbf16>
    %cst_50 = arith.constant dense<0.000000e+00> : vector<256x128xf32>
    %121 = tpu.matmul %118, %120, %cst_50 {dimension_numbers = #tpu.dot_dimension_numbers<[1], [0], [0], [1], [0, 0, 1, 1], [], []>} : vector<256x128xbf16>, vector<128x128xbf16>, vector<256x128xf32> -> vector<256x128xf32>
    %122 = arith.addf %110, %121 : vector<256x128xf32>
    %c15_i32_51 = arith.constant 15 : i32
    %123 = tpu.dynamic_rotate %89 by %c15_i32_51 dim 0 : vector<256x128xf32>, i32 -> vector<256x128xf32>
    %c1_i32_52 = arith.constant 1 : i32
    %124 = vector.broadcast %c1_i32_52 : i32 to vector<256x1xi32>
    %125 = arith.cmpi sge, %92, %124 : vector<256x1xi32>
    %c14_i32 = arith.constant 14 : i32
    %126 = vector.broadcast %c14_i32 : i32 to vector<256x1xi32>
    %127 = arith.cmpi sle, %94, %126 : vector<256x1xi32>
    %128 = arith.andi %125, %127 : vector<256x1xi1>
    %cst_53 = arith.constant 0.000000e+00 : f32
    %129 = vector.shape_cast %128 : vector<256x1xi1> to vector<256x1xi1>
    %130 = vector.broadcast %129 : vector<256x1xi1> to vector<256x128xi1>
    %131 = vector.broadcast %cst_53 : f32 to vector<256x128xf32>
    %132 = arith.select %130, %123, %131 : vector<256x128xi1>, vector<256x128xf32>
    %133 = arith.truncf %132 : vector<256x128xf32> to vector<256x128xbf16>
    %c2_54 = arith.constant 2 : index
    %c0_55 = arith.constant 0 : index
    %c0_56 = arith.constant 0 : index
    %134 = vector.load %arg4[%c2_54, %c0_55, %c0_56] : memref<9x128x128xbf16, #tpu.memory_space<vmem>>, vector<1x128x128xbf16>
    %135 = vector.shape_cast %134 : vector<1x128x128xbf16> to vector<128x128xbf16>
    %cst_57 = arith.constant dense<0.000000e+00> : vector<256x128xf32>
    %136 = tpu.matmul %133, %135, %cst_57 {dimension_numbers = #tpu.dot_dimension_numbers<[1], [0], [0], [1], [0, 0, 1, 1], [], []>} : vector<256x128xbf16>, vector<128x128xbf16>, vector<256x128xf32> -> vector<256x128xf32>
    %137 = arith.addf %122, %136 : vector<256x128xf32>
    %c1_i32_58 = arith.constant 1 : i32
    %138 = tpu.dynamic_rotate %89 by %c1_i32_58 dim 0 : vector<256x128xf32>, i32 -> vector<256x128xf32>
    %c1_i32_59 = arith.constant 1 : i32
    %139 = vector.broadcast %c1_i32_59 : i32 to vector<256x1xi32>
    %140 = arith.cmpi sge, %94, %139 : vector<256x1xi32>
    %cst_60 = arith.constant 0.000000e+00 : f32
    %141 = vector.shape_cast %140 : vector<256x1xi1> to vector<256x1xi1>
    %142 = vector.broadcast %141 : vector<256x1xi1> to vector<256x128xi1>
    %143 = vector.broadcast %cst_60 : f32 to vector<256x128xf32>
    %144 = arith.select %142, %138, %143 : vector<256x128xi1>, vector<256x128xf32>
    %145 = arith.truncf %144 : vector<256x128xf32> to vector<256x128xbf16>
    %c3_61 = arith.constant 3 : index
    %c0_62 = arith.constant 0 : index
    %c0_63 = arith.constant 0 : index
    %146 = vector.load %arg4[%c3_61, %c0_62, %c0_63] : memref<9x128x128xbf16, #tpu.memory_space<vmem>>, vector<1x128x128xbf16>
    %147 = vector.shape_cast %146 : vector<1x128x128xbf16> to vector<128x128xbf16>
    %cst_64 = arith.constant dense<0.000000e+00> : vector<256x128xf32>
    %148 = tpu.matmul %145, %147, %cst_64 {dimension_numbers = #tpu.dot_dimension_numbers<[1], [0], [0], [1], [0, 0, 1, 1], [], []>} : vector<256x128xbf16>, vector<128x128xbf16>, vector<256x128xf32> -> vector<256x128xf32>
    %149 = arith.addf %137, %148 : vector<256x128xf32>
    %150 = arith.truncf %89 : vector<256x128xf32> to vector<256x128xbf16>
    %c4_65 = arith.constant 4 : index
    %c0_66 = arith.constant 0 : index
    %c0_67 = arith.constant 0 : index
    %151 = vector.load %arg4[%c4_65, %c0_66, %c0_67] : memref<9x128x128xbf16, #tpu.memory_space<vmem>>, vector<1x128x128xbf16>
    %152 = vector.shape_cast %151 : vector<1x128x128xbf16> to vector<128x128xbf16>
    %cst_68 = arith.constant dense<0.000000e+00> : vector<256x128xf32>
    %153 = tpu.matmul %150, %152, %cst_68 {dimension_numbers = #tpu.dot_dimension_numbers<[1], [0], [0], [1], [0, 0, 1, 1], [], []>} : vector<256x128xbf16>, vector<128x128xbf16>, vector<256x128xf32> -> vector<256x128xf32>
    %154 = arith.addf %149, %153 : vector<256x128xf32>
    %c255_i32 = arith.constant 255 : i32
    %155 = tpu.dynamic_rotate %89 by %c255_i32 dim 0 : vector<256x128xf32>, i32 -> vector<256x128xf32>
    %c14_i32_69 = arith.constant 14 : i32
    %156 = vector.broadcast %c14_i32_69 : i32 to vector<256x1xi32>
    %157 = arith.cmpi sle, %94, %156 : vector<256x1xi32>
    %cst_70 = arith.constant 0.000000e+00 : f32
    %158 = vector.shape_cast %157 : vector<256x1xi1> to vector<256x1xi1>
    %159 = vector.broadcast %158 : vector<256x1xi1> to vector<256x128xi1>
    %160 = vector.broadcast %cst_70 : f32 to vector<256x128xf32>
    %161 = arith.select %159, %155, %160 : vector<256x128xi1>, vector<256x128xf32>
    %162 = arith.truncf %161 : vector<256x128xf32> to vector<256x128xbf16>
    %c5_71 = arith.constant 5 : index
    %c0_72 = arith.constant 0 : index
    %c0_73 = arith.constant 0 : index
    %163 = vector.load %arg4[%c5_71, %c0_72, %c0_73] : memref<9x128x128xbf16, #tpu.memory_space<vmem>>, vector<1x128x128xbf16>
    %164 = vector.shape_cast %163 : vector<1x128x128xbf16> to vector<128x128xbf16>
    %cst_74 = arith.constant dense<0.000000e+00> : vector<256x128xf32>
    %165 = tpu.matmul %162, %164, %cst_74 {dimension_numbers = #tpu.dot_dimension_numbers<[1], [0], [0], [1], [0, 0, 1, 1], [], []>} : vector<256x128xbf16>, vector<128x128xbf16>, vector<256x128xf32> -> vector<256x128xf32>
    %166 = arith.addf %154, %165 : vector<256x128xf32>
    %c241_i32 = arith.constant 241 : i32
    %167 = tpu.dynamic_rotate %89 by %c241_i32 dim 0 : vector<256x128xf32>, i32 -> vector<256x128xf32>
    %c14_i32_75 = arith.constant 14 : i32
    %168 = vector.broadcast %c14_i32_75 : i32 to vector<256x1xi32>
    %169 = arith.cmpi sle, %92, %168 : vector<256x1xi32>
    %c1_i32_76 = arith.constant 1 : i32
    %170 = vector.broadcast %c1_i32_76 : i32 to vector<256x1xi32>
    %171 = arith.cmpi sge, %94, %170 : vector<256x1xi32>
    %172 = arith.andi %169, %171 : vector<256x1xi1>
    %cst_77 = arith.constant 0.000000e+00 : f32
    %173 = vector.shape_cast %172 : vector<256x1xi1> to vector<256x1xi1>
    %174 = vector.broadcast %173 : vector<256x1xi1> to vector<256x128xi1>
    %175 = vector.broadcast %cst_77 : f32 to vector<256x128xf32>
    %176 = arith.select %174, %167, %175 : vector<256x128xi1>, vector<256x128xf32>
    %177 = arith.truncf %176 : vector<256x128xf32> to vector<256x128xbf16>
    %c6 = arith.constant 6 : index
    %c0_78 = arith.constant 0 : index
    %c0_79 = arith.constant 0 : index
    %178 = vector.load %arg4[%c6, %c0_78, %c0_79] : memref<9x128x128xbf16, #tpu.memory_space<vmem>>, vector<1x128x128xbf16>
    %179 = vector.shape_cast %178 : vector<1x128x128xbf16> to vector<128x128xbf16>
    %cst_80 = arith.constant dense<0.000000e+00> : vector<256x128xf32>
    %180 = tpu.matmul %177, %179, %cst_80 {dimension_numbers = #tpu.dot_dimension_numbers<[1], [0], [0], [1], [0, 0, 1, 1], [], []>} : vector<256x128xbf16>, vector<128x128xbf16>, vector<256x128xf32> -> vector<256x128xf32>
    %181 = arith.addf %166, %180 : vector<256x128xf32>
    %c240_i32 = arith.constant 240 : i32
    %182 = tpu.dynamic_rotate %89 by %c240_i32 dim 0 : vector<256x128xf32>, i32 -> vector<256x128xf32>
    %c14_i32_81 = arith.constant 14 : i32
    %183 = vector.broadcast %c14_i32_81 : i32 to vector<256x1xi32>
    %184 = arith.cmpi sle, %92, %183 : vector<256x1xi32>
    %cst_82 = arith.constant 0.000000e+00 : f32
    %185 = vector.shape_cast %184 : vector<256x1xi1> to vector<256x1xi1>
    %186 = vector.broadcast %185 : vector<256x1xi1> to vector<256x128xi1>
    %187 = vector.broadcast %cst_82 : f32 to vector<256x128xf32>
    %188 = arith.select %186, %182, %187 : vector<256x128xi1>, vector<256x128xf32>
    %189 = arith.truncf %188 : vector<256x128xf32> to vector<256x128xbf16>
    %c7 = arith.constant 7 : index
    %c0_83 = arith.constant 0 : index
    %c0_84 = arith.constant 0 : index
    %190 = vector.load %arg4[%c7, %c0_83, %c0_84] : memref<9x128x128xbf16, #tpu.memory_space<vmem>>, vector<1x128x128xbf16>
    %191 = vector.shape_cast %190 : vector<1x128x128xbf16> to vector<128x128xbf16>
    %cst_85 = arith.constant dense<0.000000e+00> : vector<256x128xf32>
    %192 = tpu.matmul %189, %191, %cst_85 {dimension_numbers = #tpu.dot_dimension_numbers<[1], [0], [0], [1], [0, 0, 1, 1], [], []>} : vector<256x128xbf16>, vector<128x128xbf16>, vector<256x128xf32> -> vector<256x128xf32>
    %193 = arith.addf %181, %192 : vector<256x128xf32>
    %c239_i32 = arith.constant 239 : i32
    %194 = tpu.dynamic_rotate %89 by %c239_i32 dim 0 : vector<256x128xf32>, i32 -> vector<256x128xf32>
    %c14_i32_86 = arith.constant 14 : i32
    %195 = vector.broadcast %c14_i32_86 : i32 to vector<256x1xi32>
    %196 = arith.cmpi sle, %92, %195 : vector<256x1xi32>
    %c14_i32_87 = arith.constant 14 : i32
    %197 = vector.broadcast %c14_i32_87 : i32 to vector<256x1xi32>
    %198 = arith.cmpi sle, %94, %197 : vector<256x1xi32>
    %199 = arith.andi %196, %198 : vector<256x1xi1>
    %cst_88 = arith.constant 0.000000e+00 : f32
    %200 = vector.shape_cast %199 : vector<256x1xi1> to vector<256x1xi1>
    %201 = vector.broadcast %200 : vector<256x1xi1> to vector<256x128xi1>
    %202 = vector.broadcast %cst_88 : f32 to vector<256x128xf32>
    %203 = arith.select %201, %194, %202 : vector<256x128xi1>, vector<256x128xf32>
    %204 = arith.truncf %203 : vector<256x128xf32> to vector<256x128xbf16>
    %c8 = arith.constant 8 : index
    %c0_89 = arith.constant 0 : index
    %c0_90 = arith.constant 0 : index
    %205 = vector.load %arg4[%c8, %c0_89, %c0_90] : memref<9x128x128xbf16, #tpu.memory_space<vmem>>, vector<1x128x128xbf16>
    %206 = vector.shape_cast %205 : vector<1x128x128xbf16> to vector<128x128xbf16>
    %cst_91 = arith.constant dense<0.000000e+00> : vector<256x128xf32>
    %207 = tpu.matmul %204, %206, %cst_91 {dimension_numbers = #tpu.dot_dimension_numbers<[1], [0], [0], [1], [0, 0, 1, 1], [], []>} : vector<256x128xbf16>, vector<128x128xbf16>, vector<256x128xf32> -> vector<256x128xf32>
    %208 = arith.addf %193, %207 : vector<256x128xf32>
    %cst_92 = arith.constant dense<0.000000e+00> : vector<128xf32>
    %209 = vector.multi_reduction <add>, %208, %cst_92 [0] : vector<256x128xf32> to vector<128xf32>
    %210 = vector.shape_cast %209 : vector<128xf32> to vector<1x128xf32>
    %cst_93 = arith.constant 2.560000e+02 : f32
    %211 = vector.broadcast %cst_93 : f32 to vector<1x128xf32>
    %212 = arith.divf %210, %211 : vector<1x128xf32>
    %213 = arith.mulf %208, %208 : vector<256x128xf32>
    %cst_94 = arith.constant dense<0.000000e+00> : vector<128xf32>
    %214 = vector.multi_reduction <add>, %213, %cst_94 [0] : vector<256x128xf32> to vector<128xf32>
    %215 = vector.shape_cast %214 : vector<128xf32> to vector<1x128xf32>
    %cst_95 = arith.constant 2.560000e+02 : f32
    %216 = vector.broadcast %cst_95 : f32 to vector<1x128xf32>
    %217 = arith.divf %215, %216 : vector<1x128xf32>
    %c127_i32_96 = arith.constant 127 : i32
    %218 = tpu.dynamic_rotate %212 by %c127_i32_96 dim 1 : vector<1x128xf32>, i32 -> vector<1x128xf32>
    %c1_i32_97 = arith.constant 1 : i32
    %219 = tpu.dynamic_rotate %212 by %c1_i32_97 dim 1 : vector<1x128xf32>, i32 -> vector<1x128xf32>
    %220 = arith.select %6, %218, %219 : vector<1x128xi1>, vector<1x128xf32>
    %221 = arith.addf %212, %220 : vector<1x128xf32>
    %cst_98 = arith.constant 5.000000e-01 : f32
    %222 = vector.broadcast %cst_98 : f32 to vector<1x128xf32>
    %223 = arith.mulf %222, %221 : vector<1x128xf32>
    %c127_i32_99 = arith.constant 127 : i32
    %224 = tpu.dynamic_rotate %217 by %c127_i32_99 dim 1 : vector<1x128xf32>, i32 -> vector<1x128xf32>
    %c1_i32_100 = arith.constant 1 : i32
    %225 = tpu.dynamic_rotate %217 by %c1_i32_100 dim 1 : vector<1x128xf32>, i32 -> vector<1x128xf32>
    %226 = arith.select %6, %224, %225 : vector<1x128xi1>, vector<1x128xf32>
    %227 = arith.addf %217, %226 : vector<1x128xf32>
    %cst_101 = arith.constant 5.000000e-01 : f32
    %228 = vector.broadcast %cst_101 : f32 to vector<1x128xf32>
    %229 = arith.mulf %228, %227 : vector<1x128xf32>
    %230 = arith.mulf %223, %223 : vector<1x128xf32>
    %231 = arith.subf %229, %230 : vector<1x128xf32>
    %cst_102 = arith.constant 0.000000e+00 : f32
    %232 = vector.broadcast %cst_102 : f32 to vector<1x128xf32>
    %233 = arith.maximumf %231, %232 : vector<1x128xf32>
    %cst_103 = arith.constant 9.99999974E-6 : f32
    %234 = vector.broadcast %cst_103 : f32 to vector<1x128xf32>
    %235 = arith.addf %233, %234 : vector<1x128xf32>
    %236 = math.rsqrt %235 : vector<1x128xf32>
    %237 = arith.mulf %236, %11 : vector<1x128xf32>
    %238 = arith.mulf %223, %237 : vector<1x128xf32>
    %239 = arith.subf %12, %238 : vector<1x128xf32>
    %240 = vector.broadcast %237 : vector<1x128xf32> to vector<256x128xf32>
    %241 = arith.mulf %208, %240 : vector<256x128xf32>
    %242 = vector.broadcast %239 : vector<1x128xf32> to vector<256x128xf32>
    %243 = arith.addf %241, %242 : vector<256x128xf32>
    %cst_104 = arith.constant 0.000000e+00 : f32
    %244 = vector.broadcast %cst_104 : f32 to vector<256x128xf32>
    %245 = arith.maximumf %243, %244 : vector<256x128xf32>
    %246 = arith.truncf %245 : vector<256x128xf32> to vector<256x128xbf16>
    %c0_105 = arith.constant 0 : index
    %c0_106 = arith.constant 0 : index
    %247 = vector.load %arg5[%c0_105, %c0_106] : memref<128x128xbf16, #tpu.memory_space<vmem>>, vector<128x128xbf16>
    %cst_107 = arith.constant dense<0.000000e+00> : vector<256x128xf32>
    %248 = tpu.matmul %246, %247, %cst_107 {dimension_numbers = #tpu.dot_dimension_numbers<[1], [0], [0], [1], [0, 0, 1, 1], [], []>} : vector<256x128xbf16>, vector<128x128xbf16>, vector<256x128xf32> -> vector<256x128xf32>
    %249 = arith.addf %248, %1 : vector<256x128xf32>
    %250 = vector.shape_cast %249 : vector<256x128xf32> to vector<1x16x16x128xf32>
    %c0_108 = arith.constant 0 : index
    %c0_109 = arith.constant 0 : index
    %c0_110 = arith.constant 0 : index
    %c0_111 = arith.constant 0 : index
    %251 = vector.load %arg6[%c0_108, %c0_109, %c0_110, %c0_111] : memref<1x16x16x128xf32, #tpu.memory_space<vmem>>, vector<1x16x16x128xf32>
    tpu.vector_store %arg6[%c0_108, %c0_109, %c0_110, %c0_111], %250 {strides = array<i32>} : memref<1x16x16x128xf32, #tpu.memory_space<vmem>>, vector<1x16x16x128xf32>,
    return
  }
  func.func @transform_0(%arg0: i32) -> (i32, i32, i32, i32) {
    %c0_i32 = arith.constant 0 : i32
    %c0_i32_0 = arith.constant 0 : i32
    %c0_i32_1 = arith.constant 0 : i32
    %c0_i32_2 = arith.constant 0 : i32
    return %arg0, %c0_i32, %c0_i32_0, %c0_i32_1 : i32, i32, i32, i32
  }
  func.func @transform_1(%arg0: i32) -> (i32, i32) {
    %c0_i32 = arith.constant 0 : i32
    %c0_i32_0 = arith.constant 0 : i32
    %c0_i32_1 = arith.constant 0 : i32
    return %c0_i32, %c0_i32_0 : i32, i32
  }
  func.func @transform_2(%arg0: i32) -> (i32, i32) {
    %c0_i32 = arith.constant 0 : i32
    %c0_i32_0 = arith.constant 0 : i32
    %c0_i32_1 = arith.constant 0 : i32
    return %c0_i32, %c0_i32_0 : i32, i32
  }
  func.func @transform_3(%arg0: i32) -> (i32, i32, i32) {
    %c0_i32 = arith.constant 0 : i32
    %c0_i32_0 = arith.constant 0 : i32
    %c0_i32_1 = arith.constant 0 : i32
    %c0_i32_2 = arith.constant 0 : i32
    return %c0_i32, %c0_i32_0, %c0_i32_1 : i32, i32, i32
  }
  func.func @transform_4(%arg0: i32) -> (i32, i32) {
    %c0_i32 = arith.constant 0 : i32
    %c0_i32_0 = arith.constant 0 : i32
    %c0_i32_1 = arith.constant 0 : i32
    return %c0_i32, %c0_i32_0 : i32, i32
  }
  func.func @transform_5(%arg0: i32) -> (i32, i32, i32, i32) {
    %c0_i32 = arith.constant 0 : i32
    %c0_i32_0 = arith.constant 0 : i32
    %c0_i32_1 = arith.constant 0 : i32
    %c0_i32_2 = arith.constant 0 : i32
    return %arg0, %c0_i32, %c0_i32_0, %c0_i32_1 : i32, i32, i32, i32
  }
}

</mosaic_0001>

<llo_original>
// kernel: tpu_custom_call.1
$region0: #{tpu_custom_call.1}
  #allocation0 [shape = 'u32[]', space=smem, size = 0x4, offset = 0x4, fixed_abs, tag = 'smem constant byte address 0x4 - core index']
  #allocation1 [shape = 'u32[72,128]{1,0:T(1,128)}', space=vmem, size = 0x9000, scoped, tag = 'internal scratch']
  %s0 = inlined_call_operand.hbm [shape: f32[2,16,16,128], index: 0, kind: input, shape index: {}]
  %s1 = inlined_call_operand.hbm [shape: f32[6,128], index: 1, kind: input, shape index: {}]
  %s2 = inlined_call_operand.hbm [shape: bf16[128,128], index: 2, kind: input, shape index: {}]
  %s3 = inlined_call_operand.hbm [shape: bf16[9,128,128], index: 3, kind: input, shape index: {}]
  %s4 = inlined_call_operand.hbm [shape: bf16[128,128], index: 4, kind: input, shape index: {}]
  %s5 = inlined_call_operand.hbm [shape: f32[2,16,16,128], index: 5, kind: output, shape index: {}]
  %s6 = sld [smem:[#allocation0]]
  $region73: #{tpu_custom_call.1} parent=0
    _
  %s8 = ssub.s32 1, %s6
  %s9 = scalar_select 0, %s8, %s6
  $region1: #{tpu_custom_call.1} parent=0
    #allocation2 [shape = 'u8[262144]{0}', space=vmem, size = 0x40000, scoped, tag = 'input window, operand 0']
    #allocation3 [shape = 's32[2]{0}', space=sflag, size = 0x8, scoped, tag = 'scoped memory for tpu_custom_call.1']
    #allocation4 [shape = 's32[2]{0}', space=sflag, size = 0x8, scoped, tag = 'scoped memory for tpu_custom_call.1']
    #allocation5 [shape = 'u8[4096]{0}', space=vmem, size = 0x1000, scoped, tag = 'input window, operand 1, single buffered']
    #allocation6 [shape = 's32[1]{0}', space=sflag, size = 0x4, scoped, tag = 'scoped memory for tpu_custom_call.1']
    #allocation7 [shape = 'u8[32768]{0}', space=vmem, size = 0x8000, scoped, tag = 'input window, operand 2, single buffered']
    #allocation8 [shape = 'u8[294912]{0}', space=vmem, size = 0x48000, scoped, tag = 'input window, operand 3, single buffered']
    #allocation9 [shape = 's32[1]{0}', space=sflag, size = 0x4, scoped, tag = 'scoped memory for tpu_custom_call.1']
    #allocation10 [shape = 'u8[32768]{0}', space=vmem, size = 0x8000, scoped, tag = 'input window, operand 4, single buffered']
    #allocation11 [shape = 'u8[262144]{0}', space=vmem, size = 0x40000, scoped, tag = 'output window, operand 0']
    %10 = vsyncpa [#allocation3], 0
    %s11 = scalar_lea.sflag [#allocation3], 1
    %12 = vsyncpa %s11, 0
    %13 = vsyncpa [#allocation6], 0
    %14 = vsyncpa [#allocation9], 0
    %15 = vsyncpa [#allocation4], 0
    %s16 = scalar_lea.sflag [#allocation4], 1
    %17 = vsyncpa %s16, 0
    loop: start=0, step=1, limit=4
    $region2: #{tpu_custom_call.1} parent=1 // loop_pre_header
      _
    $region3: #{tpu_custom_call.1} parent=1 // loop_header
      %s19 = sphi 0, %s23
      %p20 = scmp.ge.s32.totalorder %s19, 4
      %s29 = sphi 0, %s31
      %s32 = sphi 0, %s29
      %s33 = sphi 0, %s32
      %s49 = sphi 0, %s33
      %s53 = sphi 0, %s53
      %s55 = sphi 0, %s53
      %s56 = sphi 0, %s55
      %s70 = sphi 0, %s56
      %s74 = sphi 0, %s74
      %s76 = sphi 0, %s74
      %s77 = sphi 0, %s76
      %s91 = sphi 0, %s77
      %s95 = sphi 0, %s95
      %s97 = sphi 0, %s95
      %s98 = sphi 0, %s97
      %s112 = sphi 0, %s98
      %s116 = sphi 0, %s116
      %s118 = sphi 0, %s116
      %s119 = sphi 0, %s118
      %s133 = sphi 0, %s119
      %s139 = sphi 0, %s141
      %s142 = sphi 0, %s139
      %s143 = sphi 0, %s142
      %s159 = sphi 0, %s143
    $region4: #{tpu_custom_call.1} parent=1 // loop_header_branch
      %22 = sbr.rel (%p20) target = $region8
    $region5: #{tpu_custom_call.1} parent=1 // loop_body
      %s24 = ssub.s32 %s19, 1
      %s25 = ssub.s32 %s19, 2
      %s26 = sadd.s32 %s19, 1
      %s27 = ssub.s32 %s19, %s26
      %p28 = scmp.eq.s32.totalorder %s27, 0
      %s30 = sadd.s32 %s29, 1
      %s31 = scalar_select %p28, %s29, %s30
      %p34 = pneg %p28
      %p35 = scmp.eq.s32.totalorder %s19, 1
      %p36 = por %p34, %p35
      %p37 = scmp.ne.s32.totalorder %s29, %s32
      %p38 = scmp.eq.s32.totalorder %s19, 0
      %p39 = por %p37, %p38
      %p40 = scmp.ne.s32.totalorder %s29, %s32
      %p41 = scmp.eq.s32.totalorder %s24, 1
      %p42 = por %p40, %p41
      %p43 = scmp.ne.s32.totalorder %s32, %s33
      %p44 = scmp.eq.s32.totalorder %s24, 0
      %p45 = por %p43, %p44
      %p46 = scmp.ne.s32.totalorder %s32, %s33
      %p47 = scmp.eq.s32.totalorder %s25, 1
      %p48 = por %p46, %p47
      %p50 = scmp.ne.s32.totalorder %s33, %s49
      %p51 = scmp.eq.s32.totalorder %s25, 0
      %p52 = por %p50, %p51
      %s54 = sadd.s32 %s53, 1
      %p57 = scmp.eq.s32.totalorder %s19, 1
      %p58 = scmp.ne.s32.totalorder %s53, %s55
      %p59 = scmp.eq.s32.totalorder %s19, 0
      %p60 = por %p58, %p59
      %p61 = scmp.ne.s32.totalorder %s53, %s55
      %p62 = scmp.eq.s32.totalorder %s24, 1
      %p63 = por %p61, %p62
      %p64 = scmp.ne.s32.totalorder %s55, %s56
      %p65 = scmp.eq.s32.totalorder %s24, 0
      %p66 = por %p64, %p65
      %p67 = scmp.ne.s32.totalorder %s55, %s56
      %p68 = scmp.eq.s32.totalorder %s25, 1
      %p69 = por %p67, %p68
      %p71 = scmp.ne.s32.totalorder %s56, %s70
      %p72 = scmp.eq.s32.totalorder %s25, 0
      %p73 = por %p71, %p72
      %s75 = sadd.s32 %s74, 1
      %p78 = scmp.eq.s32.totalorder %s19, 1
      %p79 = scmp.ne.s32.totalorder %s74, %s76
      %p80 = scmp.eq.s32.totalorder %s19, 0
      %p81 = por %p79, %p80
      %p82 = scmp.ne.s32.totalorder %s74, %s76
      %p83 = scmp.eq.s32.totalorder %s24, 1
      %p84 = por %p82, %p83
      %p85 = scmp.ne.s32.totalorder %s76, %s77
      %p86 = scmp.eq.s32.totalorder %s24, 0
      %p87 = por %p85, %p86
      %p88 = scmp.ne.s32.totalorder %s76, %s77
      %p89 = scmp.eq.s32.totalorder %s25, 1
      %p90 = por %p88, %p89
      %p92 = scmp.ne.s32.totalorder %s77, %s91
      %p93 = scmp.eq.s32.totalorder %s25, 0
      %p94 = por %p92, %p93
      %s96 = sadd.s32 %s95, 1
      %p99 = scmp.eq.s32.totalorder %s19, 1
      %p100 = scmp.ne.s32.totalorder %s95, %s97
      %p101 = scmp.eq.s32.totalorder %s19, 0
      %p102 = por %p100, %p101
      %p103 = scmp.ne.s32.totalorder %s95, %s97
      %p104 = scmp.eq.s32.totalorder %s24, 1
      %p105 = por %p103, %p104
      %p106 = scmp.ne.s32.totalorder %s97, %s98
      %p107 = scmp.eq.s32.totalorder %s24, 0
      %p108 = por %p106, %p107
      %p109 = scmp.ne.s32.totalorder %s97, %s98
      %p110 = scmp.eq.s32.totalorder %s25, 1
      %p111 = por %p109, %p110
      %p113 = scmp.ne.s32.totalorder %s98, %s112
      %p114 = scmp.eq.s32.totalorder %s25, 0
      %p115 = por %p113, %p114
      %s117 = sadd.s32 %s116, 1
      %p120 = scmp.eq.s32.totalorder %s19, 1
      %p121 = scmp.ne.s32.totalorder %s116, %s118
      %p122 = scmp.eq.s32.totalorder %s19, 0
      %p123 = por %p121, %p122
      %p124 = scmp.ne.s32.totalorder %s116, %s118
      %p125 = scmp.eq.s32.totalorder %s24, 1
      %p126 = por %p124, %p125
      %p127 = scmp.ne.s32.totalorder %s118, %s119
      %p128 = scmp.eq.s32.totalorder %s24, 0
      %p129 = por %p127, %p128
      %p130 = scmp.ne.s32.totalorder %s118, %s119
      %p131 = scmp.eq.s32.totalorder %s25, 1
      %p132 = por %p130, %p131
      %p134 = scmp.ne.s32.totalorder %s119, %s133
      %p135 = scmp.eq.s32.totalorder %s25, 0
      %p136 = por %p134, %p135
      %s137 = ssub.s32 %s19, %s26
      %p138 = scmp.eq.s32.totalorder %s137, 0
      %s140 = sadd.s32 %s139, 1
      %s141 = scalar_select %p138, %s139, %s140
      %p144 = pneg %p138
      %p145 = scmp.eq.s32.totalorder %s19, 1
      %p146 = por %p144, %p145
      %p147 = scmp.ne.s32.totalorder %s139, %s142
      %p148 = scmp.eq.s32.totalorder %s19, 0
      %p149 = por %p147, %p148
      %p150 = scmp.ne.s32.totalorder %s139, %s142
      %p151 = scmp.eq.s32.totalorder %s24, 1
      %p152 = por %p150, %p151
      %p153 = scmp.ne.s32.totalorder %s142, %s143
      %p154 = scmp.eq.s32.totalorder %s24, 0
      %p155 = por %p153, %p154
      %p156 = scmp.ne.s32.totalorder %s142, %s143
      %p157 = scmp.eq.s32.totalorder %s25, 1
      %p158 = por %p156, %p157
      %p160 = scmp.ne.s32.totalorder %s143, %s159
      %p161 = scmp.eq.s32.totalorder %s25, 0
      %p162 = por %p160, %p161
      %p163 = scmp.le.s32.totalorder 1, %s19
      %p164 = scmp.lt.s32.totalorder %s19, 3
      %p165 = pnand %p163, %p164
      %p166 = pneg %p165
      // Predicated region
      $region9: #{tpu_custom_call.1} parent=5 // pred_check
        _
      $region10: #{tpu_custom_call.1} parent=5 // pred_check_branch
        %168 = sbr.rel (%p165) target = $region12
      $region11: #{tpu_custom_call.1} parent=5 // pred_region
        %s169 = ssub.s32 %s19, 1
        // Predicated region
        $region13: #{tpu_custom_call.1} parent=11 // pred_check
          %p170 = pneg %p66
        $region14: #{tpu_custom_call.1} parent=11 // pred_check_branch
          %172 = sbr.rel (%p170) target = $region16
        $region15: #{tpu_custom_call.1} parent=11 // pred_region
          %174 = vsyncadd [#allocation6], 0
          %s176 = sshll.u32 %s1, 4
          %s177 = int_to_ptr.hbm [resolvable:$true] %s176
          %s178 = sshll.u32 [#allocation5], 4
          %s179 = int_to_ptr.vmem [resolvable:$true] %s178
          %181 = dma.hbm_to_vmem [thread:$0]  %s177, 128, %s179, [#allocation6]
        $region16: #{tpu_custom_call.1} parent=11 // pred_fallthru
          _
        // Predicated region
        $region17: #{tpu_custom_call.1} parent=11 // pred_check
          %p182 = pneg %p87
        $region18: #{tpu_custom_call.1} parent=11 // pred_check_branch
          %184 = sbr.rel (%p182) target = $region20
        $region19: #{tpu_custom_call.1} parent=11 // pred_region
          %186 = vsyncadd [#allocation6], 0
          %s187 = sshll.u32 %s2, 4
          %s188 = int_to_ptr.hbm [resolvable:$true] %s187
          %s189 = sshll.u32 [#allocation7], 4
          %s190 = int_to_ptr.vmem [resolvable:$true] %s189
          %195 = dma.hbm_to_vmem [thread:$0]  %s188, 1024, %s190, [#allocation6], 64, 64, 4
        $region20: #{tpu_custom_call.1} parent=11 // pred_fallthru
          _
        // Predicated region
        $region21: #{tpu_custom_call.1} parent=11 // pred_check
          %p196 = pneg %p108
        $region22: #{tpu_custom_call.1} parent=11 // pred_check_branch
          %198 = sbr.rel (%p196) target = $region24
        $region23: #{tpu_custom_call.1} parent=11 // pred_region
          %200 = vsyncadd [#allocation9], 0
          %s201 = sshll.u32 %s3, 4
          %s202 = int_to_ptr.hbm [resolvable:$true] %s201
          %s203 = sshll.u32 [#allocation8], 4
          %s204 = int_to_ptr.vmem [resolvable:$true] %s203
          %209 = dma.hbm_to_vmem [thread:$0]  %s202, 9216, %s204, [#allocation9], 64, 64, 4
        $region24: #{tpu_custom_call.1} parent=11 // pred_fallthru
          _
        // Predicated region
        $region25: #{tpu_custom_call.1} parent=11 // pred_check
          %p210 = pneg %p129
        $region26: #{tpu_custom_call.1} parent=11 // pred_check_branch
          %212 = sbr.rel (%p210) target = $region28
        $region27: #{tpu_custom_call.1} parent=11 // pred_region
          %214 = vsyncadd [#allocation9], 0
          %s215 = sshll.u32 %s4, 4
          %s216 = int_to_ptr.hbm [resolvable:$true] %s215
          %s217 = sshll.u32 [#allocation10], 4
          %s218 = int_to_ptr.vmem [resolvable:$true] %s217
          %223 = dma.hbm_to_vmem [thread:$0]  %s216, 1024, %s218, [#allocation9], 64, 64, 4
        $region28: #{tpu_custom_call.1} parent=11 // pred_fallthru
          _
      $region12: #{tpu_custom_call.1} parent=5 // pred_fallthru
        _
      %p224 = scmp.lt.s32.totalorder %s19, 2
      // Predicated region
      $region29: #{tpu_custom_call.1} parent=5 // pred_check
        %p225 = pneg %p224
      $region30: #{tpu_custom_call.1} parent=5 // pred_check_branch
        %227 = sbr.rel (%p225) target = $region32
      $region31: #{tpu_custom_call.1} parent=5 // pred_region
        // Predicated region
        $region33: #{tpu_custom_call.1} parent=31 // pred_check
          %p228 = pneg %p39
        $region34: #{tpu_custom_call.1} parent=31 // pred_check_branch
          %230 = sbr.rel (%p228) target = $region36
        $region35: #{tpu_custom_call.1} parent=31 // pred_region
          %s231 = sand.u32 %s29, 1
          %s232 = scalar_lea.sflag [#allocation3], %s231
          %s233 = sand.u32 %s29, 1
          %s234 = smul.addr %s233, 256
          %s235 = scalar_lea.vmem [#allocation2], %s234
          %237 = vsyncadd %s232, 0
          %s238 = smul.addr %s19, 32
          %s239 = smul.addr %s238, 8
          %s240 = scalar_lea.hbm %s0, %s239
          %s241 = sshll.u32 %s240, 4
          %s242 = int_to_ptr.hbm [resolvable:$true] %s241
          %s243 = sshll.u32 %s235, 4
          %s244 = int_to_ptr.vmem [resolvable:$true] %s243
          %249 = dma.hbm_to_vmem [thread:$0]  %s242, 4096, %s244, %s232, 128, 128, 8
        $region36: #{tpu_custom_call.1} parent=31 // pred_fallthru
          _
      $region32: #{tpu_custom_call.1} parent=5 // pred_fallthru
        _
      %p250 = scmp.le.s32.totalorder 1, %s19
      %p251 = scmp.lt.s32.totalorder %s19, 3
      %p252 = pnand %p250, %p251
      %p253 = pneg %p252
      // Predicated region
      $region37: #{tpu_custom_call.1} parent=5 // pred_check
        _
      $region38: #{tpu_custom_call.1} parent=5 // pred_check_branch
        %255 = sbr.rel (%p252) target = $region40
      $region39: #{tpu_custom_call.1} parent=5 // pred_region
        %s256 = ssub.s32 %s19, 1
        %s257 = sand.u32 %s32, 1
        %s258 = scalar_lea.sflag [#allocation3], %s257
        %s259 = sand.u32 %s32, 1
        %s260 = smul.addr %s259, 256
        %s261 = scalar_lea.vmem [#allocation2], %s260
        // Predicated region
        $region41: #{tpu_custom_call.1} parent=39 // pred_check
          %p262 = pneg %p45
        $region42: #{tpu_custom_call.1} parent=39 // pred_check_branch
          %264 = sbr.rel (%p262) target = $region44
        $region43: #{tpu_custom_call.1} parent=39 // pred_region
          %266 = dma.done %s258, 4096
        $region44: #{tpu_custom_call.1} parent=39 // pred_fallthru
          _
        // Predicated region
        $region45: #{tpu_custom_call.1} parent=39 // pred_check
          %p267 = pneg %p66
        $region46: #{tpu_custom_call.1} parent=39 // pred_check_branch
          %269 = sbr.rel (%p267) target = $region48
        $region47: #{tpu_custom_call.1} parent=39 // pred_region
          %271 = dma.done [#allocation6], 128
        $region48: #{tpu_custom_call.1} parent=39 // pred_fallthru
          _
        // Predicated region
        $region49: #{tpu_custom_call.1} parent=39 // pred_check
          %p272 = pneg %p87
        $region50: #{tpu_custom_call.1} parent=39 // pred_check_branch
          %274 = sbr.rel (%p272) target = $region52
        $region51: #{tpu_custom_call.1} parent=39 // pred_region
          %276 = dma.done [#allocation6], 1024
        $region52: #{tpu_custom_call.1} parent=39 // pred_fallthru
          _
        // Predicated region
        $region53: #{tpu_custom_call.1} parent=39 // pred_check
          %p277 = pneg %p108
        $region54: #{tpu_custom_call.1} parent=39 // pred_check_branch
          %279 = sbr.rel (%p277) target = $region56
        $region55: #{tpu_custom_call.1} parent=39 // pred_region
          %281 = dma.done [#allocation9], 9216
        $region56: #{tpu_custom_call.1} parent=39 // pred_fallthru
          _
        // Predicated region
        $region57: #{tpu_custom_call.1} parent=39 // pred_check
          %p282 = pneg %p129
        $region58: #{tpu_custom_call.1} parent=39 // pred_check_branch
          %284 = sbr.rel (%p282) target = $region60
        $region59: #{tpu_custom_call.1} parent=39 // pred_region
          %286 = dma.done [#allocation9], 1024
        $region60: #{tpu_custom_call.1} parent=39 // pred_fallthru
          _
        %s287 = sand.u32 %s32, 1
        %s288 = scalar_lea.sflag [#allocation3], %s287
        %s289 = sand.u32 %s32, 1
        %s290 = smul.addr %s289, 256
        %s291 = scalar_lea.vmem [#allocation2], %s290
        %p292 = pneg %p45
        %p293 = pneg %p42
        %p294 = pneg %p66
        %p295 = pneg %p63
        %p296 = pneg %p87
        %p297 = pneg %p84
        %p298 = pneg %p108
        %p299 = pneg %p105
        %p300 = pneg %p129
        %p301 = pneg %p126
        %p302 = pneg %p155
        %p303 = pneg %p152
        %s304 = sand.u32 %s142, 1
        %s305 = scalar_lea.sflag [#allocation4], %s304
        %s306 = sand.u32 %s142, 1
        %s307 = smul.addr %s306, 256
        %s308 = scalar_lea.vmem [#allocation11], %s307
        %v309 = vld [vmem:[%s261] sm:$0xff]
        %v310 = vld [vmem:[%s261 + $0x8] sm:$0xff]
        %v311 = vld [vmem:[%s261 + $0x10] sm:$0xff]
        %v312 = vld [vmem:[%s261 + $0x18] sm:$0xff]
        %v313 = vld [vmem:[%s261 + $0x20] sm:$0xff]
        %v314 = vld [vmem:[%s261 + $0x28] sm:$0xff]
        %v315 = vld [vmem:[%s261 + $0x30] sm:$0xff]
        %v316 = vld [vmem:[%s261 + $0x38] sm:$0xff]
        %v317 = vld [vmem:[%s261 + $0x40] sm:$0xff]
        %v318 = vld [vmem:[%s261 + $0x48] sm:$0xff]
        %v319 = vld [vmem:[%s261 + $0x50] sm:$0xff]
        %v320 = vld [vmem:[%s261 + $0x58] sm:$0xff]
        %v321 = vld [vmem:[%s261 + $0x60] sm:$0xff]
        %v322 = vld [vmem:[%s261 + $0x68] sm:$0xff]
        %v323 = vld [vmem:[%s261 + $0x70] sm:$0xff]
        %v324 = vld [vmem:[%s261 + $0x78] sm:$0xff]
        %v325 = vld [vmem:[%s261 + $0x80] sm:$0xff]
        %v326 = vld [vmem:[%s261 + $0x88] sm:$0xff]
        %v327 = vld [vmem:[%s261 + $0x90] sm:$0xff]
        %v328 = vld [vmem:[%s261 + $0x98] sm:$0xff]
        %v329 = vld [vmem:[%s261 + $0xa0] sm:$0xff]
        %v330 = vld [vmem:[%s261 + $0xa8] sm:$0xff]
        %v331 = vld [vmem:[%s261 + $0xb0] sm:$0xff]
        %v332 = vld [vmem:[%s261 + $0xb8] sm:$0xff]
        %v333 = vld [vmem:[%s261 + $0xc0] sm:$0xff]
        %v334 = vld [vmem:[%s261 + $0xc8] sm:$0xff]
        %v335 = vld [vmem:[%s261 + $0xd0] sm:$0xff]
        %v336 = vld [vmem:[%s261 + $0xd8] sm:$0xff]
        %v337 = vld [vmem:[%s261 + $0xe0] sm:$0xff]
        %v338 = vld [vmem:[%s261 + $0xe8] sm:$0xff]
        %v339 = vld [vmem:[%s261 + $0xf0] sm:$0xff]
        %v340 = vld [vmem:[%s261 + $0xf8] sm:$0xff]
        %v341 = vlaneseq
        %v342 = vand.u32 %v341, 127
        %v343 = vand.u32 %v342, 1
        %vm344 = vcmp.eq.s32.totalorder %v343, 0
        %v345 = vld [vmem:[#allocation5] sm:$0x1]
        %v346 = vld [vmem:[#allocation5 + $0x1] sm:$0x1]
        %v347 = vld [vmem:[#allocation5 + $0x2] sm:$0x1]
        %v348 = vld [vmem:[#allocation5 + $0x3] sm:$0x1]
        %v349 = vld [vmem:[#allocation5 + $0x4] sm:$0x1]
        %v350 = vld [vmem:[#allocation5 + $0x5] sm:$0x1]
        %v351 = vadd.f32 %v309, %v310
        %v352 = vadd.f32 %v351, %v311
        %v353 = vadd.f32 %v352, %v312
        %v354 = vadd.f32 %v353, %v313
        %v355 = vadd.f32 %v354, %v314
        %v356 = vadd.f32 %v355, %v315
        %v357 = vadd.f32 %v356, %v316
        %v358 = vadd.f32 %v357, %v317
        %v359 = vadd.f32 %v358, %v318
        %v360 = vadd.f32 %v359, %v319
        %v361 = vadd.f32 %v360, %v320
        %v362 = vadd.f32 %v361, %v321
        %v363 = vadd.f32 %v362, %v322
        %v364 = vadd.f32 %v363, %v323
        %v365 = vadd.f32 %v364, %v324
        %v366 = vadd.f32 %v365, %v325
        %v367 = vadd.f32 %v366, %v326
        %v368 = vadd.f32 %v367, %v327
        %v369 = vadd.f32 %v368, %v328
        %v370 = vadd.f32 %v369, %v329
        %v371 = vadd.f32 %v370, %v330
        %v372 = vadd.f32 %v371, %v331
        %v373 = vadd.f32 %v372, %v332
        %v374 = vadd.f32 %v373, %v333
        %v375 = vadd.f32 %v374, %v334
        %v376 = vadd.f32 %v375, %v335
        %v377 = vadd.f32 %v376, %v336
        %v378 = vadd.f32 %v377, %v337
        %v379 = vadd.f32 %v378, %v338
        %v380 = vadd.f32 %v379, %v339
        %v381 = vadd.f32 %v380, %v340
        %v382 = vrot.slane %v381, 4
        %v383 = vadd.f32 %v381, %v382
        %v384 = vrot.slane %v383, 2
        %v385 = vadd.f32 %v383, %v384
        %v386 = vrot.slane %v385, 1
        %v387 = vadd.f32 %v385, %v386
        %v388 = vrcp.pop 256.0
        %v389 = vmul.f32 256.0, %v388
        %v390 = vsub.f32 1.0, %v389
        %v391 = vmul.f32 %v388, %v390
        %v392 = vadd.f32 %v388, %v391
        %vm393 = vweird.f32 %v388
        %v394 = vsel %vm393, %v388, %v392
        %v395 = vmul.f32 %v387, %v394
        %v396 = vmul.f32 %v309, %v309
        %v397 = vmul.f32 %v310, %v310
        %v398 = vmul.f32 %v311, %v311
        %v399 = vmul.f32 %v312, %v312
        %v400 = vmul.f32 %v313, %v313
        %v401 = vmul.f32 %v314, %v314
        %v402 = vmul.f32 %v315, %v315
        %v403 = vmul.f32 %v316, %v316
        %v404 = vmul.f32 %v317, %v317
        %v405 = vmul.f32 %v318, %v318
        %v406 = vmul.f32 %v319, %v319
        %v407 = vmul.f32 %v320, %v320
        %v408 = vmul.f32 %v321, %v321
        %v409 = vmul.f32 %v322, %v322
        %v410 = vmul.f32 %v323, %v323
        %v411 = vmul.f32 %v324, %v324
        %v412 = vmul.f32 %v325, %v325
        %v413 = vmul.f32 %v326, %v326
        %v414 = vmul.f32 %v327, %v327
        %v415 = vmul.f32 %v328, %v328
        %v416 = vmul.f32 %v329, %v329
        %v417 = vmul.f32 %v330, %v330
        %v418 = vmul.f32 %v331, %v331
        %v419 = vmul.f32 %v332, %v332
        %v420 = vmul.f32 %v333, %v333
        %v421 = vmul.f32 %v334, %v334
        %v422 = vmul.f32 %v335, %v335
        %v423 = vmul.f32 %v336, %v336
        %v424 = vmul.f32 %v337, %v337
        %v425 = vmul.f32 %v338, %v338
        %v426 = vmul.f32 %v339, %v339
        %v427 = vmul.f32 %v340, %v340
        %v428 = vadd.f32 %v396, %v397
        %v429 = vadd.f32 %v428, %v398
        %v430 = vadd.f32 %v429, %v399
        %v431 = vadd.f32 %v430, %v400
        %v432 = vadd.f32 %v431, %v401
        %v433 = vadd.f32 %v432, %v402
        %v434 = vadd.f32 %v433, %v403
        %v435 = vadd.f32 %v434, %v404
        %v436 = vadd.f32 %v435, %v405
        %v437 = vadd.f32 %v436, %v406
        %v438 = vadd.f32 %v437, %v407
        %v439 = vadd.f32 %v438, %v408
        %v440 = vadd.f32 %v439, %v409
        %v441 = vadd.f32 %v440, %v410
        %v442 = vadd.f32 %v441, %v411
        %v443 = vadd.f32 %v442, %v412
        %v444 = vadd.f32 %v443, %v413
        %v445 = vadd.f32 %v444, %v414
        %v446 = vadd.f32 %v445, %v415
        %v447 = vadd.f32 %v446, %v416
        %v448 = vadd.f32 %v447, %v417
        %v449 = vadd.f32 %v448, %v418
        %v450 = vadd.f32 %v449, %v419
        %v451 = vadd.f32 %v450, %v420
        %v452 = vadd.f32 %v451, %v421
        %v453 = vadd.f32 %v452, %v422
        %v454 = vadd.f32 %v453, %v423
        %v455 = vadd.f32 %v454, %v424
        %v456 = vadd.f32 %v455, %v425
        %v457 = vadd.f32 %v456, %v426
        %v458 = vadd.f32 %v457, %v427
        %v459 = vrot.slane %v458, 4
        %v460 = vadd.f32 %v458, %v459
        %v461 = vrot.slane %v460, 2
        %v462 = vadd.f32 %v460, %v461
        %v463 = vrot.slane %v462, 1
        %v464 = vadd.f32 %v462, %v463
        %v465 = vmul.f32 %v464, %v394
        %466 = vrot.lane.b32.xlu0 %v395, 127
        %v467 = vpop.permute.xlu0 %466
        %468 = vrot.lane.b32.xlu0 %v395, 1
        %v469 = vpop.permute.xlu0 %468
        %v470 = vsel %vm344, %v467, %v469
        %v471 = vadd.f32 %v395, %v470
        %v472 = vmul.f32 %v471, 0.5
        %473 = vrot.lane.b32.xlu0 %v465, 127
        %v474 = vpop.permute.xlu0 %473
        %475 = vrot.lane.b32.xlu0 %v465, 1
        %v476 = vpop.permute.xlu0 %475
        %v477 = vsel %vm344, %v474, %v476
        %v478 = vadd.f32 %v465, %v477
        %v479 = vmul.f32 %v478, 0.5
        %v480 = vmul.f32 %v472, %v472
        %v481 = vsub.f32 %v479, %v480
        %v482 = vmax.f32 %v481, 0.0
        %v483 = vadd.f32 %v482, 1e-05
        %v484 = vrsqrt.pop %v483
        %v485 = vmul.f32 %v484, %v483
        %v486 = vmul.f32 %v485, %v484
        %v487 = vmul.f32 0.5, %v486
        %v488 = vsub.f32 1.5, %v487
        %v489 = vmul.f32 %v484, %v488
        %vm490 = vweird.f32 %v483
        %vm491 = vweird.f32 %v484
        %vm492 = vmor %vm490, %vm491
        %v493 = vsel %vm492, %v484, %v489
        %v494 = vmul.f32 %v493, %v345
        %v495 = vmul.f32 %v472, %v494
        %v496 = vsub.f32 %v346, %v495
        %v497 = vperm.slane %v494, 0
        %v498 = vmul.f32 %v309, %v497
        %v499 = vmul.f32 %v310, %v497
        %v500 = vmul.f32 %v311, %v497
        %v501 = vmul.f32 %v312, %v497
        %v502 = vmul.f32 %v313, %v497
        %v503 = vmul.f32 %v314, %v497
        %v504 = vmul.f32 %v315, %v497
        %v505 = vmul.f32 %v316, %v497
        %v506 = vmul.f32 %v317, %v497
        %v507 = vmul.f32 %v318, %v497
        %v508 = vmul.f32 %v319, %v497
        %v509 = vmul.f32 %v320, %v497
        %v510 = vmul.f32 %v321, %v497
        %v511 = vmul.f32 %v322, %v497
        %v512 = vmul.f32 %v323, %v497
        %v513 = vmul.f32 %v324, %v497
        %v514 = vmul.f32 %v325, %v497
        %v515 = vmul.f32 %v326, %v497
        %v516 = vmul.f32 %v327, %v497
        %v517 = vmul.f32 %v328, %v497
        %v518 = vmul.f32 %v329, %v497
        %v519 = vmul.f32 %v330, %v497
        %v520 = vmul.f32 %v331, %v497
        %v521 = vmul.f32 %v332, %v497
        %v522 = vmul.f32 %v333, %v497
        %v523 = vmul.f32 %v334, %v497
        %v524 = vmul.f32 %v335, %v497
        %v525 = vmul.f32 %v336, %v497
        %v526 = vmul.f32 %v337, %v497
        %v527 = vmul.f32 %v338, %v497
        %v528 = vmul.f32 %v339, %v497
        %v529 = vmul.f32 %v340, %v497
        %v530 = vperm.slane %v496, 0
        %v531 = vadd.f32 %v498, %v530
        %v532 = vadd.f32 %v499, %v530
        %v533 = vadd.f32 %v500, %v530
        %v534 = vadd.f32 %v501, %v530
        %v535 = vadd.f32 %v502, %v530
        %v536 = vadd.f32 %v503, %v530
        %v537 = vadd.f32 %v504, %v530
        %v538 = vadd.f32 %v505, %v530
        %v539 = vadd.f32 %v506, %v530
        %v540 = vadd.f32 %v507, %v530
        %v541 = vadd.f32 %v508, %v530
        %v542 = vadd.f32 %v509, %v530
        %v543 = vadd.f32 %v510, %v530
        %v544 = vadd.f32 %v511, %v530
        %v545 = vadd.f32 %v512, %v530
        %v546 = vadd.f32 %v513, %v530
        %v547 = vadd.f32 %v514, %v530
        %v548 = vadd.f32 %v515, %v530
        %v549 = vadd.f32 %v516, %v530
        %v550 = vadd.f32 %v517, %v530
        %v551 = vadd.f32 %v518, %v530
        %v552 = vadd.f32 %v519, %v530
        %v553 = vadd.f32 %v520, %v530
        %v554 = vadd.f32 %v521, %v530
        %v555 = vadd.f32 %v522, %v530
        %v556 = vadd.f32 %v523, %v530
        %v557 = vadd.f32 %v524, %v530
        %v558 = vadd.f32 %v525, %v530
        %v559 = vadd.f32 %v526, %v530
        %v560 = vadd.f32 %v527, %v530
        %v561 = vadd.f32 %v528, %v530
        %v562 = vadd.f32 %v529, %v530
        %v563 = vmax.f32 %v531, 0.0
        %v564 = vmax.f32 %v532, 0.0
        %v565 = vmax.f32 %v533, 0.0
        %v566 = vmax.f32 %v534, 0.0
        %v567 = vmax.f32 %v535, 0.0
        %v568 = vmax.f32 %v536, 0.0
        %v569 = vmax.f32 %v537, 0.0
        %v570 = vmax.f32 %v538, 0.0
        %v571 = vmax.f32 %v539, 0.0
        %v572 = vmax.f32 %v540, 0.0
        %v573 = vmax.f32 %v541, 0.0
        %v574 = vmax.f32 %v542, 0.0
        %v575 = vmax.f32 %v543, 0.0
        %v576 = vmax.f32 %v544, 0.0
        %v577 = vmax.f32 %v545, 0.0
        %v578 = vmax.f32 %v546, 0.0
        %v579 = vmax.f32 %v547, 0.0
        %v580 = vmax.f32 %v548, 0.0
        %v581 = vmax.f32 %v549, 0.0
        %v582 = vmax.f32 %v550, 0.0
        %v583 = vmax.f32 %v551, 0.0
        %v584 = vmax.f32 %v552, 0.0
        %v585 = vmax.f32 %v553, 0.0
        %v586 = vmax.f32 %v554, 0.0
        %v587 = vmax.f32 %v555, 0.0
        %v588 = vmax.f32 %v556, 0.0
        %v589 = vmax.f32 %v557, 0.0
        %v590 = vmax.f32 %v558, 0.0
        %v591 = vmax.f32 %v559, 0.0
        %v592 = vmax.f32 %v560, 0.0
        %v593 = vmax.f32 %v561, 0.0
        %v594 = vmax.f32 %v562, 0.0
        %v595 = vpack.c.bf16 %v564, %v563
        %v596 = vpack.c.bf16 %v566, %v565
        %v597 = vpack.c.bf16 %v568, %v567
        %v598 = vpack.c.bf16 %v570, %v569
        %v599 = vpack.c.bf16 %v572, %v571
        %v600 = vpack.c.bf16 %v574, %v573
        %v601 = vpack.c.bf16 %v576, %v575
        %v602 = vpack.c.bf16 %v578, %v577
        %v603 = vpack.c.bf16 %v580, %v579
        %v604 = vpack.c.bf16 %v582, %v581
        %v605 = vpack.c.bf16 %v584, %v583
        %v606 = vpack.c.bf16 %v586, %v585
        %v607 = vpack.c.bf16 %v588, %v587
        %v608 = vpack.c.bf16 %v590, %v589
        %v609 = vpack.c.bf16 %v592, %v591
        %v610 = vpack.c.bf16 %v594, %v593
        %v611 = vld [vmem:[#allocation7] sm:$0xf]
        %v612 = vld [vmem:[#allocation7 + $0x4] sm:$0xf]
        %v613 = vld [vmem:[#allocation7 + $0x8] sm:$0xf]
        %v614 = vld [vmem:[#allocation7 + $0xc] sm:$0xf]
        %v615 = vld [vmem:[#allocation7 + $0x10] sm:$0xf]
        %v616 = vld [vmem:[#allocation7 + $0x14] sm:$0xf]
        %v617 = vld [vmem:[#allocation7 + $0x18] sm:$0xf]
        %v618 = vld [vmem:[#allocation7 + $0x1c] sm:$0xf]
        %v619 = vld [vmem:[#allocation7 + $0x20] sm:$0xf]
        %v620 = vld [vmem:[#allocation7 + $0x24] sm:$0xf]
        %v621 = vld [vmem:[#allocation7 + $0x28] sm:$0xf]
        %v622 = vld [vmem:[#allocation7 + $0x2c] sm:$0xf]
        %v623 = vld [vmem:[#allocation7 + $0x30] sm:$0xf]
        %v624 = vld [vmem:[#allocation7 + $0x34] sm:$0xf]
        %v625 = vld [vmem:[#allocation7 + $0x38] sm:$0xf]
        %v626 = vld [vmem:[#allocation7 + $0x3c] sm:$0xf]
        %v643 = vunpack.c.l.b16 %v611
        %v644 = vunpack.c.l.b16 %v612
        %v645 = vunpack.c.l.b16 %v613
        %v646 = vunpack.c.l.b16 %v614
        %v647 = vunpack.c.l.b16 %v615
        %v648 = vunpack.c.l.b16 %v616
        %v649 = vunpack.c.l.b16 %v617
        %v650 = vunpack.c.l.b16 %v618
        %v651 = vunpack.c.l.b16 %v619
        %v652 = vunpack.c.l.b16 %v620
        %v653 = vunpack.c.l.b16 %v621
        %v654 = vunpack.c.l.b16 %v622
        %v655 = vunpack.c.l.b16 %v623
        %v656 = vunpack.c.l.b16 %v624
        %v657 = vunpack.c.l.b16 %v625
        %v658 = vunpack.c.l.b16 %v626
        %v659 = vpack.c.b16 %v644, %v643
        %v660 = vpack.c.b16 %v646, %v645
        %v661 = vpack.c.b16 %v648, %v647
        %v662 = vpack.c.b16 %v650, %v649
        %v663 = vpack.c.b16 %v652, %v651
        %v664 = vpack.c.b16 %v654, %v653
        %v665 = vpack.c.b16 %v656, %v655
        %v666 = vpack.c.b16 %v658, %v657
        %675 = vmatpush.bf16.msra.mxu0 %v666
        %676 = vmatpush.bf16.msra.mxu0 %v665
        %677 = vmatpush.bf16.msra.mxu0 %v664
        %678 = vmatpush.bf16.msra.mxu0 %v663
        %679 = vmatpush.bf16.msra.mxu0 %v662
        %680 = vmatpush.bf16.msra.mxu0 %v661
        %681 = vmatpush.bf16.msra.mxu0 %v660
        %682 = vmatpush.bf16.msra.mxu0 %v659
        %683 = vmatmul.bf16.gmra.mxu0 %v595
        %v684 = vpop.f32.mrf.mxu0
        %v685 = vadd.f32 0.0, %v684
        %v686 = vpop.f32.mrf.mxu0
        %v687 = vadd.f32 0.0, %v686
        %688 = vmatmul.bf16.gmra.mxu0 %v596
        %v689 = vpop.f32.mrf.mxu0
        %v690 = vadd.f32 0.0, %v689
        %v691 = vpop.f32.mrf.mxu0
        %v692 = vadd.f32 0.0, %v691
        %693 = vmatmul.bf16.gmra.mxu0 %v597
        %v694 = vpop.f32.mrf.mxu0
        %v695 = vadd.f32 0.0, %v694
        %v696 = vpop.f32.mrf.mxu0
        %v697 = vadd.f32 0.0, %v696
        %698 = vmatmul.bf16.gmra.mxu0 %v598
        %v699 = vpop.f32.mrf.mxu0
        %v700 = vadd.f32 0.0, %v699
        %v701 = vpop.f32.mrf.mxu0
        %v702 = vadd.f32 0.0, %v701
        %703 = vmatmul.bf16.gmra.mxu0 %v599
        %v704 = vpop.f32.mrf.mxu0
        %v705 = vadd.f32 0.0, %v704
        %v706 = vpop.f32.mrf.mxu0
        %v707 = vadd.f32 0.0, %v706
        %708 = vmatmul.bf16.gmra.mxu0 %v600
        %v709 = vpop.f32.mrf.mxu0
        %v710 = vadd.f32 0.0, %v709
        %v711 = vpop.f32.mrf.mxu0
        %v712 = vadd.f32 0.0, %v711
        %713 = vmatmul.bf16.gmra.mxu0 %v601
        %v714 = vpop.f32.mrf.mxu0
        %v715 = vadd.f32 0.0, %v714
        %v716 = vpop.f32.mrf.mxu0
        %v717 = vadd.f32 0.0, %v716
        %718 = vmatmul.bf16.gmra.mxu0 %v602
        %v719 = vpop.f32.mrf.mxu0
        %v720 = vadd.f32 0.0, %v719
        %v721 = vpop.f32.mrf.mxu0
        %v722 = vadd.f32 0.0, %v721
        %723 = vmatmul.bf16.gmra.mxu0 %v603
        %v724 = vpop.f32.mrf.mxu0
        %v725 = vadd.f32 0.0, %v724
        %v726 = vpop.f32.mrf.mxu0
        %v727 = vadd.f32 0.0, %v726
        %728 = vmatmul.bf16.gmra.mxu0 %v604
        %v729 = vpop.f32.mrf.mxu0
        %v730 = vadd.f32 0.0, %v729
        %v731 = vpop.f32.mrf.mxu0
        %v732 = vadd.f32 0.0, %v731
        %733 = vmatmul.bf16.gmra.mxu0 %v605
        %v734 = vpop.f32.mrf.mxu0
        %v735 = vadd.f32 0.0, %v734
        %v736 = vpop.f32.mrf.mxu0
        %v737 = vadd.f32 0.0, %v736
        %738 = vmatmul.bf16.gmra.mxu0 %v606
        %v739 = vpop.f32.mrf.mxu0
        %v740 = vadd.f32 0.0, %v739
        %v741 = vpop.f32.mrf.mxu0
        %v742 = vadd.f32 0.0, %v741
        %743 = vmatmul.bf16.gmra.mxu0 %v607
        %v744 = vpop.f32.mrf.mxu0
        %v745 = vadd.f32 0.0, %v744
        %v746 = vpop.f32.mrf.mxu0
        %v747 = vadd.f32 0.0, %v746
        %748 = vmatmul.bf16.gmra.mxu0 %v608
        %v749 = vpop.f32.mrf.mxu0
        %v750 = vadd.f32 0.0, %v749
        %v751 = vpop.f32.mrf.mxu0
        %v752 = vadd.f32 0.0, %v751
        %753 = vmatmul.bf16.gmra.mxu0 %v609
        %v754 = vpop.f32.mrf.mxu0
        %v755 = vadd.f32 0.0, %v754
        %v756 = vpop.f32.mrf.mxu0
        %v757 = vadd.f32 0.0, %v756
        %758 = vmatmul.bf16.gmra.mxu0 %v610
        %v759 = vpop.f32.mrf.mxu0
        %v760 = vadd.f32 0.0, %v759
        %v761 = vpop.f32.mrf.mxu0
        %v762 = vadd.f32 0.0, %v761
        %763 = vdwg.mxu0
        %v764 = vadd.f32 %v685, %v687
        %v765 = vadd.f32 %v764, %v690
        %v766 = vadd.f32 %v765, %v692
        %v767 = vadd.f32 %v766, %v695
        %v768 = vadd.f32 %v767, %v697
        %v769 = vadd.f32 %v768, %v700
        %v770 = vadd.f32 %v769, %v702
        %v771 = vadd.f32 %v770, %v705
        %v772 = vadd.f32 %v771, %v707
        %v773 = vadd.f32 %v772, %v710
        %v774 = vadd.f32 %v773, %v712
        %v775 = vadd.f32 %v774, %v715
        %v776 = vadd.f32 %v775, %v717
        %v777 = vadd.f32 %v776, %v720
        %v778 = vadd.f32 %v777, %v722
        %v779 = vadd.f32 %v778, %v725
        %v780 = vadd.f32 %v779, %v727
        %v781 = vadd.f32 %v780, %v730
        %v782 = vadd.f32 %v781, %v732
        %v783 = vadd.f32 %v782, %v735
        %v784 = vadd.f32 %v783, %v737
        %v785 = vadd.f32 %v784, %v740
        %v786 = vadd.f32 %v785, %v742
        %v787 = vadd.f32 %v786, %v745
        %v788 = vadd.f32 %v787, %v747
        %v789 = vadd.f32 %v788, %v750
        %v790 = vadd.f32 %v789, %v752
        %v791 = vadd.f32 %v790, %v755
        %v792 = vadd.f32 %v791, %v757
        %v793 = vadd.f32 %v792, %v760
        %v794 = vadd.f32 %v793, %v762
        %v795 = vrot.slane %v794, 4
        %v796 = vadd.f32 %v794, %v795
        %v797 = vrot.slane %v796, 2
        %v798 = vadd.f32 %v796, %v797
        %v799 = vrot.slane %v798, 1
        %v800 = vadd.f32 %v798, %v799
        %v801 = vmul.f32 %v800, %v394
        %v802 = vmul.f32 %v685, %v685
        %v803 = vmul.f32 %v687, %v687
        %v804 = vmul.f32 %v690, %v690
        %v805 = vmul.f32 %v692, %v692
        %v806 = vmul.f32 %v695, %v695
        %v807 = vmul.f32 %v697, %v697
        %v808 = vmul.f32 %v700, %v700
        %v809 = vmul.f32 %v702, %v702
        %v810 = vmul.f32 %v705, %v705
        %v811 = vmul.f32 %v707, %v707
        %v812 = vmul.f32 %v710, %v710
        %v813 = vmul.f32 %v712, %v712
        %v814 = vmul.f32 %v715, %v715
        %v815 = vmul.f32 %v717, %v717
        %v816 = vmul.f32 %v720, %v720
        %v817 = vmul.f32 %v722, %v722
        %v818 = vmul.f32 %v725, %v725
        %v819 = vmul.f32 %v727, %v727
        %v820 = vmul.f32 %v730, %v730
        %v821 = vmul.f32 %v732, %v732
        %v822 = vmul.f32 %v735, %v735
        %v823 = vmul.f32 %v737, %v737
        %v824 = vmul.f32 %v740, %v740
        %v825 = vmul.f32 %v742, %v742
        %v826 = vmul.f32 %v745, %v745
        %v827 = vmul.f32 %v747, %v747
        %v828 = vmul.f32 %v750, %v750
        %v829 = vmul.f32 %v752, %v752
        %v830 = vmul.f32 %v755, %v755
        %v831 = vmul.f32 %v757, %v757
        %v832 = vmul.f32 %v760, %v760
        %v833 = vmul.f32 %v762, %v762
        %v834 = vadd.f32 %v802, %v803
        %v835 = vadd.f32 %v834, %v804
        %v836 = vadd.f32 %v835, %v805
        %v837 = vadd.f32 %v836, %v806
        %v838 = vadd.f32 %v837, %v807
        %v839 = vadd.f32 %v838, %v808
        %v840 = vadd.f32 %v839, %v809
        %v841 = vadd.f32 %v840, %v810
        %v842 = vadd.f32 %v841, %v811
        %v843 = vadd.f32 %v842, %v812
        %v844 = vadd.f32 %v843, %v813
        %v845 = vadd.f32 %v844, %v814
        %v846 = vadd.f32 %v845, %v815
        %v847 = vadd.f32 %v846, %v816
        %v848 = vadd.f32 %v847, %v817
        %v849 = vadd.f32 %v848, %v818
        %v850 = vadd.f32 %v849, %v819
        %v851 = vadd.f32 %v850, %v820
        %v852 = vadd.f32 %v851, %v821
        %v853 = vadd.f32 %v852, %v822
        %v854 = vadd.f32 %v853, %v823
        %v855 = vadd.f32 %v854, %v824
        %v856 = vadd.f32 %v855, %v825
        %v857 = vadd.f32 %v856, %v826
        %v858 = vadd.f32 %v857, %v827
        %v859 = vadd.f32 %v858, %v828
        %v860 = vadd.f32 %v859, %v829
        %v861 = vadd.f32 %v860, %v830
        %v862 = vadd.f32 %v861, %v831
        %v863 = vadd.f32 %v862, %v832
        %v864 = vadd.f32 %v863, %v833
        %v865 = vrot.slane %v864, 4
        %v866 = vadd.f32 %v864, %v865
        %v867 = vrot.slane %v866, 2
        %v868 = vadd.f32 %v866, %v867
        %v869 = vrot.slane %v868, 1
        %v870 = vadd.f32 %v868, %v869
        %v871 = vmul.f32 %v870, %v394
        %872 = vrot.lane.b32.xlu0 %v801, 127
        %v873 = vpop.permute.xlu0 %872
        %874 = vrot.lane.b32.xlu0 %v801, 1
        %v875 = vpop.permute.xlu0 %874
        %v876 = vsel %vm344, %v873, %v875
        %v877 = vadd.f32 %v801, %v876
        %v878 = vmul.f32 %v877, 0.5
        %879 = vrot.lane.b32.xlu0 %v871, 127
        %v880 = vpop.permute.xlu0 %879
        %881 = vrot.lane.b32.xlu0 %v871, 1
        %v882 = vpop.permute.xlu0 %881
        %v883 = vsel %vm344, %v880, %v882
        %v884 = vadd.f32 %v871, %v883
        %v885 = vmul.f32 %v884, 0.5
        %v886 = vmul.f32 %v878, %v878
        %v887 = vsub.f32 %v885, %v886
        %v888 = vmax.f32 %v887, 0.0
        %v889 = vadd.f32 %v888, 1e-05
        %v890 = vrsqrt.pop %v889
        %v891 = vmul.f32 %v890, %v889
        %v892 = vmul.f32 %v891, %v890
        %v893 = vmul.f32 0.5, %v892
        %v894 = vsub.f32 1.5, %v893
        %v895 = vmul.f32 %v890, %v894
        %vm896 = vweird.f32 %v889
        %vm897 = vweird.f32 %v890
        %vm898 = vmor %vm896, %vm897
        %v899 = vsel %vm898, %v890, %v895
        %v900 = vmul.f32 %v899, %v347
        %v901 = vmul.f32 %v878, %v900
        %v902 = vsub.f32 %v348, %v901
        %v903 = vperm.slane %v900, 0
        %v904 = vmul.f32 %v685, %v903
        %v905 = vmul.f32 %v687, %v903
        %v906 = vmul.f32 %v690, %v903
        %v907 = vmul.f32 %v692, %v903
        %v908 = vmul.f32 %v695, %v903
        %v909 = vmul.f32 %v697, %v903
        %v910 = vmul.f32 %v700, %v903
        %v911 = vmul.f32 %v702, %v903
        %v912 = vmul.f32 %v705, %v903
        %v913 = vmul.f32 %v707, %v903
        %v914 = vmul.f32 %v710, %v903
        %v915 = vmul.f32 %v712, %v903
        %v916 = vmul.f32 %v715, %v903
        %v917 = vmul.f32 %v717, %v903
        %v918 = vmul.f32 %v720, %v903
        %v919 = vmul.f32 %v722, %v903
        %v920 = vmul.f32 %v725, %v903
        %v921 = vmul.f32 %v727, %v903
        %v922 = vmul.f32 %v730, %v903
        %v923 = vmul.f32 %v732, %v903
        %v924 = vmul.f32 %v735, %v903
        %v925 = vmul.f32 %v737, %v903
        %v926 = vmul.f32 %v740, %v903
        %v927 = vmul.f32 %v742, %v903
        %v928 = vmul.f32 %v745, %v903
        %v929 = vmul.f32 %v747, %v903
        %v930 = vmul.f32 %v750, %v903
        %v931 = vmul.f32 %v752, %v903
        %v932 = vmul.f32 %v755, %v903
        %v933 = vmul.f32 %v757, %v903
        %v934 = vmul.f32 %v760, %v903
        %v935 = vmul.f32 %v762, %v903
        %v936 = vperm.slane %v902, 0
        %v937 = vadd.f32 %v904, %v936
        %v938 = vadd.f32 %v905, %v936
        %v939 = vadd.f32 %v906, %v936
        %v940 = vadd.f32 %v907, %v936
        %v941 = vadd.f32 %v908, %v936
        %v942 = vadd.f32 %v909, %v936
        %v943 = vadd.f32 %v910, %v936
        %v944 = vadd.f32 %v911, %v936
        %v945 = vadd.f32 %v912, %v936
        %v946 = vadd.f32 %v913, %v936
        %v947 = vadd.f32 %v914, %v936
        %v948 = vadd.f32 %v915, %v936
        %v949 = vadd.f32 %v916, %v936
        %v950 = vadd.f32 %v917, %v936
        %v951 = vadd.f32 %v918, %v936
        %v952 = vadd.f32 %v919, %v936
        %v953 = vadd.f32 %v920, %v936
        %v954 = vadd.f32 %v921, %v936
        %v955 = vadd.f32 %v922, %v936
        %v956 = vadd.f32 %v923, %v936
        %v957 = vadd.f32 %v924, %v936
        %v958 = vadd.f32 %v925, %v936
        %v959 = vadd.f32 %v926, %v936
        %v960 = vadd.f32 %v927, %v936
        %v961 = vadd.f32 %v928, %v936
        %v962 = vadd.f32 %v929, %v936
        %v963 = vadd.f32 %v930, %v936
        %v964 = vadd.f32 %v931, %v936
        %v965 = vadd.f32 %v932, %v936
        %v966 = vadd.f32 %v933, %v936
        %v967 = vadd.f32 %v934, %v936
        %v968 = vadd.f32 %v935, %v936
        %v969 = vmax.f32 %v937, 0.0
        %v970 = vmax.f32 %v938, 0.0
        %v971 = vmax.f32 %v939, 0.0
        %v972 = vmax.f32 %v940, 0.0
        %v973 = vmax.f32 %v941, 0.0
        %v974 = vmax.f32 %v942, 0.0
        %v975 = vmax.f32 %v943, 0.0
        %v976 = vmax.f32 %v944, 0.0
        %v977 = vmax.f32 %v945, 0.0
        %v978 = vmax.f32 %v946, 0.0
        %v979 = vmax.f32 %v947, 0.0
        %v980 = vmax.f32 %v948, 0.0
        %v981 = vmax.f32 %v949, 0.0
        %v982 = vmax.f32 %v950, 0.0
        %v983 = vmax.f32 %v951, 0.0
        %v984 = vmax.f32 %v952, 0.0
        %v985 = vmax.f32 %v953, 0.0
        %v986 = vmax.f32 %v954, 0.0
        %v987 = vmax.f32 %v955, 0.0
        %v988 = vmax.f32 %v956, 0.0
        %v989 = vmax.f32 %v957, 0.0
        %v990 = vmax.f32 %v958, 0.0
        %v991 = vmax.f32 %v959, 0.0
        %v992 = vmax.f32 %v960, 0.0
        %v993 = vmax.f32 %v961, 0.0
        %v994 = vmax.f32 %v962, 0.0
        %v995 = vmax.f32 %v963, 0.0
        %v996 = vmax.f32 %v964, 0.0
        %v997 = vmax.f32 %v965, 0.0
        %v998 = vmax.f32 %v966, 0.0
        %v999 = vmax.f32 %v967, 0.0
        %v1000 = vmax.f32 %v968, 0.0
        %v1001 = vlaneseq
        %v1002 = vshrl.u32 %v1001, 7
        %v1003 = vadd.s32 %v1002, 8
        %v1004 = vadd.s32 %v1002, 16
        %v1005 = vadd.s32 %v1002, 24
        %v1006 = vadd.s32 %v1002, 32
        %v1007 = vadd.s32 %v1002, 40
        %v1008 = vadd.s32 %v1002, 48
        %v1009 = vadd.s32 %v1002, 56
        %v1010 = vadd.s32 %v1002, 64
        %v1011 = vadd.s32 %v1002, 72
        %v1012 = vadd.s32 %v1002, 80
        %v1013 = vadd.s32 %v1002, 88
        %v1014 = vadd.s32 %v1002, 96
        %v1015 = vadd.s32 %v1002, 104
        %v1016 = vadd.s32 %v1002, 112
        %v1017 = vadd.s32 %v1002, 120
        %v1018 = vadd.s32 %v1002, 128
        %v1019 = vadd.s32 %v1002, 136
        %v1020 = vadd.s32 %v1002, 144
        %v1021 = vadd.s32 %v1002, 152
        %v1022 = vadd.s32 %v1002, 160
        %v1023 = vadd.s32 %v1002, 168
        %v1024 = vadd.s32 %v1002, 176
        %v1025 = vadd.s32 %v1002, 184
        %v1026 = vadd.s32 %v1002, 192
        %v1027 = vadd.s32 %v1002, 200
        %v1028 = vadd.s32 %v1002, 208
        %v1029 = vadd.s32 %v1002, 216
        %v1030 = vadd.s32 %v1002, 224
        %v1031 = vadd.s32 %v1002, 232
        %v1032 = vadd.s32 %v1002, 240
        %v1033 = vadd.s32 %v1002, 248
        %v1034 = vshra.s32 %v1002, 4
        %v1035 = vshra.s32 %v1003, 4
        %v1036 = vshra.s32 %v1004, 4
        %v1037 = vshra.s32 %v1005, 4
        %v1038 = vshra.s32 %v1006, 4
        %v1039 = vshra.s32 %v1007, 4
        %v1040 = vshra.s32 %v1008, 4
        %v1041 = vshra.s32 %v1009, 4
        %v1042 = vshra.s32 %v1010, 4
        %v1043 = vshra.s32 %v1011, 4
        %v1044 = vshra.s32 %v1012, 4
        %v1045 = vshra.s32 %v1013, 4
        %v1046 = vshra.s32 %v1014, 4
        %v1047 = vshra.s32 %v1015, 4
        %v1048 = vshra.s32 %v1016, 4
        %v1049 = vshra.s32 %v1017, 4
        %v1050 = vshra.s32 %v1018, 4
        %v1051 = vshra.s32 %v1019, 4
        %v1052 = vshra.s32 %v1020, 4
        %v1053 = vshra.s32 %v1021, 4
        %v1054 = vshra.s32 %v1022, 4
        %v1055 = vshra.s32 %v1023, 4
        %v1056 = vshra.s32 %v1024, 4
        %v1057 = vshra.s32 %v1025, 4
        %v1058 = vshra.s32 %v1026, 4
        %v1059 = vshra.s32 %v1027, 4
        %v1060 = vshra.s32 %v1028, 4
        %v1061 = vshra.s32 %v1029, 4
        %v1062 = vshra.s32 %v1030, 4
        %v1063 = vshra.s32 %v1031, 4
        %v1064 = vshra.s32 %v1032, 4
        %v1065 = vshra.s32 %v1033, 4
        %v1066 = vand.u32 %v1002, 15
        %v1067 = vand.u32 %v1003, 15
        %v1068 = vand.u32 %v1004, 15
        %v1069 = vand.u32 %v1005, 15
        %v1070 = vand.u32 %v1006, 15
        %v1071 = vand.u32 %v1007, 15
        %v1072 = vand.u32 %v1008, 15
        %v1073 = vand.u32 %v1009, 15
        %v1074 = vand.u32 %v1010, 15
        %v1075 = vand.u32 %v1011, 15
        %v1076 = vand.u32 %v1012, 15
        %v1077 = vand.u32 %v1013, 15
        %v1078 = vand.u32 %v1014, 15
        %v1079 = vand.u32 %v1015, 15
        %v1080 = vand.u32 %v1016, 15
        %v1081 = vand.u32 %v1017, 15
        %v1082 = vand.u32 %v1018, 15
        %v1083 = vand.u32 %v1019, 15
        %v1084 = vand.u32 %v1020, 15
        %v1085 = vand.u32 %v1021, 15
        %v1086 = vand.u32 %v1022, 15
        %v1087 = vand.u32 %v1023, 15
        %v1088 = vand.u32 %v1024, 15
        %v1089 = vand.u32 %v1025, 15
        %v1090 = vand.u32 %v1026, 15
        %v1091 = vand.u32 %v1027, 15
        %v1092 = vand.u32 %v1028, 15
        %v1093 = vand.u32 %v1029, 15
        %v1094 = vand.u32 %v1030, 15
        %v1095 = vand.u32 %v1031, 15
        %v1096 = vand.u32 %v1032, 15
        %v1097 = vand.u32 %v1033, 15
        %v1098 = vrot.slane %v969, 7
        %v1099 = vrot.slane %v970, 7
        %v1100 = vrot.slane %v971, 7
        %v1101 = vrot.slane %v972, 7
        %v1102 = vrot.slane %v973, 7
        %v1103 = vrot.slane %v974, 7
        %v1104 = vrot.slane %v975, 7
        %v1105 = vrot.slane %v976, 7
        %v1106 = vrot.slane %v977, 7
        %v1107 = vrot.slane %v978, 7
        %v1108 = vrot.slane %v979, 7
        %v1109 = vrot.slane %v980, 7
        %v1110 = vrot.slane %v981, 7
        %v1111 = vrot.slane %v982, 7
        %v1112 = vrot.slane %v983, 7
        %v1113 = vrot.slane %v984, 7
        %v1114 = vrot.slane %v985, 7
        %v1115 = vrot.slane %v986, 7
        %v1116 = vrot.slane %v987, 7
        %v1117 = vrot.slane %v988, 7
        %v1118 = vrot.slane %v989, 7
        %v1119 = vrot.slane %v990, 7
        %v1120 = vrot.slane %v991, 7
        %v1121 = vrot.slane %v992, 7
        %v1122 = vrot.slane %v993, 7
        %v1123 = vrot.slane %v994, 7
        %v1124 = vrot.slane %v995, 7
        %v1125 = vrot.slane %v996, 7
        %v1126 = vrot.slane %v997, 7
        %v1127 = vrot.slane %v998, 7
        %v1128 = vrot.slane %v999, 7
        %v1129 = vrot.slane %v1000, 7
        %vm1130 = vcmp.lt.s32.totalorder %v1002, 1
        %v1131 = vsel %vm1130, %v1128, %v1129
        %v1132 = vsel %vm1130, %v1127, %v1128
        %v1133 = vsel %vm1130, %v1126, %v1127
        %v1134 = vsel %vm1130, %v1125, %v1126
        %v1135 = vsel %vm1130, %v1124, %v1125
        %v1136 = vsel %vm1130, %v1123, %v1124
        %v1137 = vsel %vm1130, %v1122, %v1123
        %v1138 = vsel %vm1130, %v1121, %v1122
        %v1139 = vsel %vm1130, %v1120, %v1121
        %v1140 = vsel %vm1130, %v1119, %v1120
        %v1141 = vsel %vm1130, %v1118, %v1119
        %v1142 = vsel %vm1130, %v1117, %v1118
        %v1143 = vsel %vm1130, %v1116, %v1117
        %v1144 = vsel %vm1130, %v1115, %v1116
        %v1145 = vsel %vm1130, %v1114, %v1115
        %v1146 = vsel %vm1130, %v1113, %v1114
        %v1147 = vsel %vm1130, %v1112, %v1113
        %v1148 = vsel %vm1130, %v1111, %v1112
        %v1149 = vsel %vm1130, %v1110, %v1111
        %v1150 = vsel %vm1130, %v1109, %v1110
        %v1151 = vsel %vm1130, %v1108, %v1109
        %v1152 = vsel %vm1130, %v1107, %v1108
        %v1153 = vsel %vm1130, %v1106, %v1107
        %v1154 = vsel %vm1130, %v1105, %v1106
        %v1155 = vsel %vm1130, %v1104, %v1105
        %v1156 = vsel %vm1130, %v1103, %v1104
        %v1157 = vsel %vm1130, %v1102, %v1103
        %v1158 = vsel %vm1130, %v1101, %v1102
        %v1159 = vsel %vm1130, %v1100, %v1101
        %v1160 = vsel %vm1130, %v1099, %v1100
        %v1161 = vsel %vm1130, %v1098, %v1099
        %v1162 = vsel %vm1130, %v1129, %v1098
        %vm1163 = vcmp.ge.s32.totalorder %v1034, 1
        %vm1164 = vcmp.ge.s32.totalorder %v1035, 1
        %vm1165 = vcmp.ge.s32.totalorder %v1036, 1
        %vm1166 = vcmp.ge.s32.totalorder %v1037, 1
        %vm1167 = vcmp.ge.s32.totalorder %v1038, 1
        %vm1168 = vcmp.ge.s32.totalorder %v1039, 1
        %vm1169 = vcmp.ge.s32.totalorder %v1040, 1
        %vm1170 = vcmp.ge.s32.totalorder %v1041, 1
        %vm1171 = vcmp.ge.s32.totalorder %v1042, 1
        %vm1172 = vcmp.ge.s32.totalorder %v1043, 1
        %vm1173 = vcmp.ge.s32.totalorder %v1044, 1
        %vm1174 = vcmp.ge.s32.totalorder %v1045, 1
        %vm1175 = vcmp.ge.s32.totalorder %v1046, 1
        %vm1176 = vcmp.ge.s32.totalorder %v1047, 1
        %vm1177 = vcmp.ge.s32.totalorder %v1048, 1
        %vm1178 = vcmp.ge.s32.totalorder %v1049, 1
        %vm1179 = vcmp.ge.s32.totalorder %v1050, 1
        %vm1180 = vcmp.ge.s32.totalorder %v1051, 1
        %vm1181 = vcmp.ge.s32.totalorder %v1052, 1
        %vm1182 = vcmp.ge.s32.totalorder %v1053, 1
        %vm1183 = vcmp.ge.s32.totalorder %v1054, 1
        %vm1184 = vcmp.ge.s32.totalorder %v1055, 1
        %vm1185 = vcmp.ge.s32.totalorder %v1056, 1
        %vm1186 = vcmp.ge.s32.totalorder %v1057, 1
        %vm1187 = vcmp.ge.s32.totalorder %v1058, 1
        %vm1188 = vcmp.ge.s32.totalorder %v1059, 1
        %vm1189 = vcmp.ge.s32.totalorder %v1060, 1
        %vm1190 = vcmp.ge.s32.totalorder %v1061, 1
        %vm1191 = vcmp.ge.s32.totalorder %v1062, 1
        %vm1192 = vcmp.ge.s32.totalorder %v1063, 1
        %vm1193 = vcmp.ge.s32.totalorder %v1064, 1
        %vm1194 = vcmp.ge.s32.totalorder %v1065, 1
        %vm1195 = vcmp.ge.s32.totalorder %v1066, 1
        %vm1196 = vcmp.ge.s32.totalorder %v1067, 1
        %vm1197 = vcmp.ge.s32.totalorder %v1068, 1
        %vm1198 = vcmp.ge.s32.totalorder %v1069, 1
        %vm1199 = vcmp.ge.s32.totalorder %v1070, 1
        %vm1200 = vcmp.ge.s32.totalorder %v1071, 1
        %vm1201 = vcmp.ge.s32.totalorder %v1072, 1
        %vm1202 = vcmp.ge.s32.totalorder %v1073, 1
        %vm1203 = vcmp.ge.s32.totalorder %v1074, 1
        %vm1204 = vcmp.ge.s32.totalorder %v1075, 1
        %vm1205 = vcmp.ge.s32.totalorder %v1076, 1
        %vm1206 = vcmp.ge.s32.totalorder %v1077, 1
        %vm1207 = vcmp.ge.s32.totalorder %v1078, 1
        %vm1208 = vcmp.ge.s32.totalorder %v1079, 1
        %vm1209 = vcmp.ge.s32.totalorder %v1080, 1
        %vm1210 = vcmp.ge.s32.totalorder %v1081, 1
        %vm1211 = vcmp.ge.s32.totalorder %v1082, 1
        %vm1212 = vcmp.ge.s32.totalorder %v1083, 1
        %vm1213 = vcmp.ge.s32.totalorder %v1084, 1
        %vm1214 = vcmp.ge.s32.totalorder %v1085, 1
        %vm1215 = vcmp.ge.s32.totalorder %v1086, 1
        %vm1216 = vcmp.ge.s32.totalorder %v1087, 1
        %vm1217 = vcmp.ge.s32.totalorder %v1088, 1
        %vm1218 = vcmp.ge.s32.totalorder %v1089, 1
        %vm1219 = vcmp.ge.s32.totalorder %v1090, 1
        %vm1220 = vcmp.ge.s32.totalorder %v1091, 1
        %vm1221 = vcmp.ge.s32.totalorder %v1092, 1
        %vm1222 = vcmp.ge.s32.totalorder %v1093, 1
        %vm1223 = vcmp.ge.s32.totalorder %v1094, 1
        %vm1224 = vcmp.ge.s32.totalorder %v1095, 1
        %vm1225 = vcmp.ge.s32.totalorder %v1096, 1
        %vm1226 = vcmp.ge.s32.totalorder %v1097, 1
        %vm1227 = vmand %vm1163, %vm1195
        %vm1228 = vmand %vm1164, %vm1196
        %vm1229 = vmand %vm1165, %vm1197
        %vm1230 = vmand %vm1166, %vm1198
        %vm1231 = vmand %vm1167, %vm1199
        %vm1232 = vmand %vm1168, %vm1200
        %vm1233 = vmand %vm1169, %vm1201
        %vm1234 = vmand %vm1170, %vm1202
        %vm1235 = vmand %vm1171, %vm1203
        %vm1236 = vmand %vm1172, %vm1204
        %vm1237 = vmand %vm1173, %vm1205
        %vm1238 = vmand %vm1174, %vm1206
        %vm1239 = vmand %vm1175, %vm1207
        %vm1240 = vmand %vm1176, %vm1208
        %vm1241 = vmand %vm1177, %vm1209
        %vm1242 = vmand %vm1178, %vm1210
        %vm1243 = vmand %vm1179, %vm1211
        %vm1244 = vmand %vm1180, %vm1212
        %vm1245 = vmand %vm1181, %vm1213
        %vm1246 = vmand %vm1182, %vm1214
        %vm1247 = vmand %vm1183, %vm1215
        %vm1248 = vmand %vm1184, %vm1216
        %vm1249 = vmand %vm1185, %vm1217
        %vm1250 = vmand %vm1186, %vm1218
        %vm1251 = vmand %vm1187, %vm1219
        %vm1252 = vmand %vm1188, %vm1220
        %vm1253 = vmand %vm1189, %vm1221
        %vm1254 = vmand %vm1190, %vm1222
        %vm1255 = vmand %vm1191, %vm1223
        %vm1256 = vmand %vm1192, %vm1224
        %vm1257 = vmand %vm1193, %vm1225
        %vm1258 = vmand %vm1194, %vm1226
        %v1259 = vsel %vm1227, 1, 0
        %v1260 = vsel %vm1228, 1, 0
        %v1261 = vsel %vm1229, 1, 0
        %v1262 = vsel %vm1230, 1, 0
        %v1263 = vsel %vm1231, 1, 0
        %v1264 = vsel %vm1232, 1, 0
        %v1265 = vsel %vm1233, 1, 0
        %v1266 = vsel %vm1234, 1, 0
        %v1267 = vsel %vm1235, 1, 0
        %v1268 = vsel %vm1236, 1, 0
        %v1269 = vsel %vm1237, 1, 0
        %v1270 = vsel %vm1238, 1, 0
        %v1271 = vsel %vm1239, 1, 0
        %v1272 = vsel %vm1240, 1, 0
        %v1273 = vsel %vm1241, 1, 0
        %v1274 = vsel %vm1242, 1, 0
        %v1275 = vsel %vm1243, 1, 0
        %v1276 = vsel %vm1244, 1, 0
        %v1277 = vsel %vm1245, 1, 0
        %v1278 = vsel %vm1246, 1, 0
        %v1279 = vsel %vm1247, 1, 0
        %v1280 = vsel %vm1248, 1, 0
        %v1281 = vsel %vm1249, 1, 0
        %v1282 = vsel %vm1250, 1, 0
        %v1283 = vsel %vm1251, 1, 0
        %v1284 = vsel %vm1252, 1, 0
        %v1285 = vsel %vm1253, 1, 0
        %v1286 = vsel %vm1254, 1, 0
        %v1287 = vsel %vm1255, 1, 0
        %v1288 = vsel %vm1256, 1, 0
        %v1289 = vsel %vm1257, 1, 0
        %v1290 = vsel %vm1258, 1, 0
        %vm1291 = vcmp.eq.s32.totalorder %v1259, 1
        %vm1292 = vcmp.eq.s32.totalorder %v1260, 1
        %vm1293 = vcmp.eq.s32.totalorder %v1261, 1
        %vm1294 = vcmp.eq.s32.totalorder %v1262, 1
        %vm1295 = vcmp.eq.s32.totalorder %v1263, 1
        %vm1296 = vcmp.eq.s32.totalorder %v1264, 1
        %vm1297 = vcmp.eq.s32.totalorder %v1265, 1
        %vm1298 = vcmp.eq.s32.totalorder %v1266, 1
        %vm1299 = vcmp.eq.s32.totalorder %v1267, 1
        %vm1300 = vcmp.eq.s32.totalorder %v1268, 1
        %vm1301 = vcmp.eq.s32.totalorder %v1269, 1
        %vm1302 = vcmp.eq.s32.totalorder %v1270, 1
        %vm1303 = vcmp.eq.s32.totalorder %v1271, 1
        %vm1304 = vcmp.eq.s32.totalorder %v1272, 1
        %vm1305 = vcmp.eq.s32.totalorder %v1273, 1
        %vm1306 = vcmp.eq.s32.totalorder %v1274, 1
        %vm1307 = vcmp.eq.s32.totalorder %v1275, 1
        %vm1308 = vcmp.eq.s32.totalorder %v1276, 1
        %vm1309 = vcmp.eq.s32.totalorder %v1277, 1
        %vm1310 = vcmp.eq.s32.totalorder %v1278, 1
        %vm1311 = vcmp.eq.s32.totalorder %v1279, 1
        %vm1312 = vcmp.eq.s32.totalorder %v1280, 1
        %vm1313 = vcmp.eq.s32.totalorder %v1281, 1
        %vm1314 = vcmp.eq.s32.totalorder %v1282, 1
        %vm1315 = vcmp.eq.s32.totalorder %v1283, 1
        %vm1316 = vcmp.eq.s32.totalorder %v1284, 1
        %vm1317 = vcmp.eq.s32.totalorder %v1285, 1
        %vm1318 = vcmp.eq.s32.totalorder %v1286, 1
        %vm1319 = vcmp.eq.s32.totalorder %v1287, 1
        %vm1320 = vcmp.eq.s32.totalorder %v1288, 1
        %vm1321 = vcmp.eq.s32.totalorder %v1289, 1
        %vm1322 = vcmp.eq.s32.totalorder %v1290, 1
        %v1323 = vsel %vm1291, %v1132, 0.0
        %v1324 = vsel %vm1292, %v1131, 0.0
        %v1325 = vsel %vm1293, %v1162, 0.0
        %v1326 = vsel %vm1294, %v1161, 0.0
        %v1327 = vsel %vm1295, %v1160, 0.0
        %v1328 = vsel %vm1296, %v1159, 0.0
        %v1329 = vsel %vm1297, %v1158, 0.0
        %v1330 = vsel %vm1298, %v1157, 0.0
        %v1331 = vsel %vm1299, %v1156, 0.0
        %v1332 = vsel %vm1300, %v1155, 0.0
        %v1333 = vsel %vm1301, %v1154, 0.0
        %v1334 = vsel %vm1302, %v1153, 0.0
        %v1335 = vsel %vm1303, %v1152, 0.0
        %v1336 = vsel %vm1304, %v1151, 0.0
        %v1337 = vsel %vm1305, %v1150, 0.0
        %v1338 = vsel %vm1306, %v1149, 0.0
        %v1339 = vsel %vm1307, %v1148, 0.0
        %v1340 = vsel %vm1308, %v1147, 0.0
        %v1341 = vsel %vm1309, %v1146, 0.0
        %v1342 = vsel %vm1310, %v1145, 0.0
        %v1343 = vsel %vm1311, %v1144, 0.0
        %v1344 = vsel %vm1312, %v1143, 0.0
        %v1345 = vsel %vm1313, %v1142, 0.0
        %v1346 = vsel %vm1314, %v1141, 0.0
        %v1347 = vsel %vm1315, %v1140, 0.0
        %v1348 = vsel %vm1316, %v1139, 0.0
        %v1349 = vsel %vm1317, %v1138, 0.0
        %v1350 = vsel %vm1318, %v1137, 0.0
        %v1351 = vsel %vm1319, %v1136, 0.0
        %v1352 = vsel %vm1320, %v1135, 0.0
        %v1353 = vsel %vm1321, %v1134, 0.0
        %v1354 = vsel %vm1322, %v1133, 0.0
        %v1355 = vpack.c.bf16 %v1324, %v1323
        %v1356 = vpack.c.bf16 %v1326, %v1325
        %v1357 = vpack.c.bf16 %v1328, %v1327
        %v1358 = vpack.c.bf16 %v1330, %v1329
        %v1359 = vpack.c.bf16 %v1332, %v1331
        %v1360 = vpack.c.bf16 %v1334, %v1333
        %v1361 = vpack.c.bf16 %v1336, %v1335
        %v1362 = vpack.c.bf16 %v1338, %v1337
        %v1363 = vpack.c.bf16 %v1340, %v1339
        %v1364 = vpack.c.bf16 %v1342, %v1341
        %v1365 = vpack.c.bf16 %v1344, %v1343
        %v1366 = vpack.c.bf16 %v1346, %v1345
        %v1367 = vpack.c.bf16 %v1348, %v1347
        %v1368 = vpack.c.bf16 %v1350, %v1349
        %v1369 = vpack.c.bf16 %v1352, %v1351
        %v1370 = vpack.c.bf16 %v1354, %v1353
        %v1371 = vld [vmem:[#allocation8] sm:$0xf]
        %v1372 = vld [vmem:[#allocation8 + $0x4] sm:$0xf]
        %v1373 = vld [vmem:[#allocation8 + $0x8] sm:$0xf]
        %v1374 = vld [vmem:[#allocation8 + $0xc] sm:$0xf]
        %v1375 = vld [vmem:[#allocation8 + $0x10] sm:$0xf]
        %v1376 = vld [vmem:[#allocation8 + $0x14] sm:$0xf]
        %v1377 = vld [vmem:[#allocation8 + $0x18] sm:$0xf]
        %v1378 = vld [vmem:[#allocation8 + $0x1c] sm:$0xf]
        %v1379 = vld [vmem:[#allocation8 + $0x20] sm:$0xf]
        %v1380 = vld [vmem:[#allocation8 + $0x24] sm:$0xf]
        %v1381 = vld [vmem:[#allocation8 + $0x28] sm:$0xf]
        %v1382 = vld [vmem:[#allocation8 + $0x2c] sm:$0xf]
        %v1383 = vld [vmem:[#allocation8 + $0x30] sm:$0xf]
        %v1384 = vld [vmem:[#allocation8 + $0x34] sm:$0xf]
        %v1385 = vld [vmem:[#allocation8 + $0x38] sm:$0xf]
        %v1386 = vld [vmem:[#allocation8 + $0x3c] sm:$0xf]
        %v1387 = vsel %vm1163, 1, 0
        %v1388 = vsel %vm1164, 1, 0
        %v1389 = vsel %vm1165, 1, 0
        %v1390 = vsel %vm1166, 1, 0
        %v1391 = vsel %vm1167, 1, 0
        %v1392 = vsel %vm1168, 1, 0
        %v1393 = vsel %vm1169, 1, 0
        %v1394 = vsel %vm1170, 1, 0
        %v1395 = vsel %vm1171, 1, 0
        %v1396 = vsel %vm1172, 1, 0
        %v1397 = vsel %vm1173, 1, 0
        %v1398 = vsel %vm1174, 1, 0
        %v1399 = vsel %vm1175, 1, 0
        %v1400 = vsel %vm1176, 1, 0
        %v1401 = vsel %vm1177, 1, 0
        %v1402 = vsel %vm1178, 1, 0
        %v1403 = vsel %vm1179, 1, 0
        %v1404 = vsel %vm1180, 1, 0
        %v1405 = vsel %vm1181, 1, 0
        %v1406 = vsel %vm1182, 1, 0
        %v1407 = vsel %vm1183, 1, 0
        %v1408 = vsel %vm1184, 1, 0
        %v1409 = vsel %vm1185, 1, 0
        %v1410 = vsel %vm1186, 1, 0
        %v1411 = vsel %vm1187, 1, 0
        %v1412 = vsel %vm1188, 1, 0
        %v1413 = vsel %vm1189, 1, 0
        %v1414 = vsel %vm1190, 1, 0
        %v1415 = vsel %vm1191, 1, 0
        %v1416 = vsel %vm1192, 1, 0
        %v1417 = vsel %vm1193, 1, 0
        %v1418 = vsel %vm1194, 1, 0
        %vm1419 = vcmp.eq.s32.totalorder %v1387, 1
        %vm1420 = vcmp.eq.s32.totalorder %v1388, 1
        %vm1421 = vcmp.eq.s32.totalorder %v1389, 1
        %vm1422 = vcmp.eq.s32.totalorder %v1390, 1
        %vm1423 = vcmp.eq.s32.totalorder %v1391, 1
        %vm1424 = vcmp.eq.s32.totalorder %v1392, 1
        %vm1425 = vcmp.eq.s32.totalorder %v1393, 1
        %vm1426 = vcmp.eq.s32.totalorder %v1394, 1
        %vm1427 = vcmp.eq.s32.totalorder %v1395, 1
        %vm1428 = vcmp.eq.s32.totalorder %v1396, 1
        %vm1429 = vcmp.eq.s32.totalorder %v1397, 1
        %vm1430 = vcmp.eq.s32.totalorder %v1398, 1
        %vm1431 = vcmp.eq.s32.totalorder %v1399, 1
        %vm1432 = vcmp.eq.s32.totalorder %v1400, 1
        %vm1433 = vcmp.eq.s32.totalorder %v1401, 1
        %vm1434 = vcmp.eq.s32.totalorder %v1402, 1
        %vm1435 = vcmp.eq.s32.totalorder %v1403, 1
        %vm1436 = vcmp.eq.s32.totalorder %v1404, 1
        %vm1437 = vcmp.eq.s32.totalorder %v1405, 1
        %vm1438 = vcmp.eq.s32.totalorder %v1406, 1
        %vm1439 = vcmp.eq.s32.totalorder %v1407, 1
        %vm1440 = vcmp.eq.s32.totalorder %v1408, 1
        %vm1441 = vcmp.eq.s32.totalorder %v1409, 1
        %vm1442 = vcmp.eq.s32.totalorder %v1410, 1
        %vm1443 = vcmp.eq.s32.totalorder %v1411, 1
        %vm1444 = vcmp.eq.s32.totalorder %v1412, 1
        %vm1445 = vcmp.eq.s32.totalorder %v1413, 1
        %vm1446 = vcmp.eq.s32.totalorder %v1414, 1
        %vm1447 = vcmp.eq.s32.totalorder %v1415, 1
        %vm1448 = vcmp.eq.s32.totalorder %v1416, 1
        %vm1449 = vcmp.eq.s32.totalorder %v1417, 1
        %vm1450 = vcmp.eq.s32.totalorder %v1418, 1
        %v1451 = vsel %vm1419, %v999, 0.0
        %v1452 = vsel %vm1420, %v1000, 0.0
        %v1453 = vsel %vm1421, %v969, 0.0
        %v1454 = vsel %vm1422, %v970, 0.0
        %v1455 = vsel %vm1423, %v971, 0.0
        %v1456 = vsel %vm1424, %v972, 0.0
        %v1457 = vsel %vm1425, %v973, 0.0
        %v1458 = vsel %vm1426, %v974, 0.0
        %v1459 = vsel %vm1427, %v975, 0.0
        %v1460 = vsel %vm1428, %v976, 0.0
        %v1461 = vsel %vm1429, %v977, 0.0
        %v1462 = vsel %vm1430, %v978, 0.0
        %v1463 = vsel %vm1431, %v979, 0.0
        %v1464 = vsel %vm1432, %v980, 0.0
        %v1465 = vsel %vm1433, %v981, 0.0
        %v1466 = vsel %vm1434, %v982, 0.0
        %v1467 = vsel %vm1435, %v983, 0.0
        %v1468 = vsel %vm1436, %v984, 0.0
        %v1469 = vsel %vm1437, %v985, 0.0
        %v1470 = vsel %vm1438, %v986, 0.0
        %v1471 = vsel %vm1439, %v987, 0.0
        %v1472 = vsel %vm1440, %v988, 0.0
        %v1473 = vsel %vm1441, %v989, 0.0
        %v1474 = vsel %vm1442, %v990, 0.0
        %v1475 = vsel %vm1443, %v991, 0.0
        %v1476 = vsel %vm1444, %v992, 0.0
        %v1477 = vsel %vm1445, %v993, 0.0
        %v1478 = vsel %vm1446, %v994, 0.0
        %v1479 = vsel %vm1447, %v995, 0.0
        %v1480 = vsel %vm1448, %v996, 0.0
        %v1481 = vsel %vm1449, %v997, 0.0
        %v1482 = vsel %vm1450, %v998, 0.0
        %v1483 = vpack.c.bf16 %v1452, %v1451
        %v1484 = vpack.c.bf16 %v1454, %v1453
        %v1485 = vpack.c.bf16 %v1456, %v1455
        %v1486 = vpack.c.bf16 %v1458, %v1457
        %v1487 = vpack.c.bf16 %v1460, %v1459
        %v1488 = vpack.c.bf16 %v1462, %v1461
        %v1489 = vpack.c.bf16 %v1464, %v1463
        %v1490 = vpack.c.bf16 %v1466, %v1465
        %v1491 = vpack.c.bf16 %v1468, %v1467
        %v1492 = vpack.c.bf16 %v1470, %v1469
        %v1493 = vpack.c.bf16 %v1472, %v1471
        %v1494 = vpack.c.bf16 %v1474, %v1473
        %v1495 = vpack.c.bf16 %v1476, %v1475
        %v1496 = vpack.c.bf16 %v1478, %v1477
        %v1497 = vpack.c.bf16 %v1480, %v1479
        %v1498 = vpack.c.bf16 %v1482, %v1481
        %s1499 = scalar_lea.vmem [#allocation8], 64
        %v1500 = vld [vmem:[%s1499] sm:$0xf]
        %v1501 = vld [vmem:[%s1499 + $0x4] sm:$0xf]
        %v1502 = vld [vmem:[%s1499 + $0x8] sm:$0xf]
        %v1503 = vld [vmem:[%s1499 + $0xc] sm:$0xf]
        %v1504 = vld [vmem:[%s1499 + $0x10] sm:$0xf]
        %v1505 = vld [vmem:[%s1499 + $0x14] sm:$0xf]
        %v1506 = vld [vmem:[%s1499 + $0x18] sm:$0xf]
        %v1507 = vld [vmem:[%s1499 + $0x1c] sm:$0xf]
        %v1508 = vld [vmem:[%s1499 + $0x20] sm:$0xf]
        %v1509 = vld [vmem:[%s1499 + $0x24] sm:$0xf]
        %v1510 = vld [vmem:[%s1499 + $0x28] sm:$0xf]
        %v1511 = vld [vmem:[%s1499 + $0x2c] sm:$0xf]
        %v1512 = vld [vmem:[%s1499 + $0x30] sm:$0xf]
        %v1513 = vld [vmem:[%s1499 + $0x34] sm:$0xf]
        %v1514 = vld [vmem:[%s1499 + $0x38] sm:$0xf]
        %v1515 = vld [vmem:[%s1499 + $0x3c] sm:$0xf]
        %v1532 = vunpack.c.l.b16 %v1500
        %v1533 = vunpack.c.l.b16 %v1501
        %v1534 = vunpack.c.l.b16 %v1502
        %v1535 = vunpack.c.l.b16 %v1503
        %v1536 = vunpack.c.l.b16 %v1504
        %v1537 = vunpack.c.l.b16 %v1505
        %v1538 = vunpack.c.l.b16 %v1506
        %v1539 = vunpack.c.l.b16 %v1507
        %v1540 = vunpack.c.l.b16 %v1508
        %v1541 = vunpack.c.l.b16 %v1509
        %v1542 = vunpack.c.l.b16 %v1510
        %v1543 = vunpack.c.l.b16 %v1511
        %v1544 = vunpack.c.l.b16 %v1512
        %v1545 = vunpack.c.l.b16 %v1513
        %v1546 = vunpack.c.l.b16 %v1514
        %v1547 = vunpack.c.l.b16 %v1515
        %v1548 = vpack.c.b16 %v1533, %v1532
        %v1549 = vpack.c.b16 %v1535, %v1534
        %v1550 = vpack.c.b16 %v1537, %v1536
        %v1551 = vpack.c.b16 %v1539, %v1538
        %v1552 = vpack.c.b16 %v1541, %v1540
        %v1553 = vpack.c.b16 %v1543, %v1542
        %v1554 = vpack.c.b16 %v1545, %v1544
        %v1555 = vpack.c.b16 %v1547, %v1546
        %1564 = vmatpush.bf16.msra.mxu0 %v1555
        %1565 = vmatpush.bf16.msra.mxu0 %v1554
        %1566 = vmatpush.bf16.msra.mxu0 %v1553
        %1567 = vmatpush.bf16.msra.mxu0 %v1552
        %1568 = vmatpush.bf16.msra.mxu0 %v1551
        %1569 = vmatpush.bf16.msra.mxu0 %v1550
        %1570 = vmatpush.bf16.msra.mxu0 %v1549
        %1571 = vmatpush.bf16.msra.mxu0 %v1548
        %1572 = vmatmul.bf16.gmra.mxu0 %v1483
        %v1573 = vpop.f32.mrf.mxu0
        %v1574 = vadd.f32 0.0, %v1573
        %v1575 = vpop.f32.mrf.mxu0
        %v1576 = vadd.f32 0.0, %v1575
        %1577 = vmatmul.bf16.gmra.mxu0 %v1484
        %v1578 = vpop.f32.mrf.mxu0
        %v1579 = vadd.f32 0.0, %v1578
        %v1580 = vpop.f32.mrf.mxu0
        %v1581 = vadd.f32 0.0, %v1580
        %1582 = vmatmul.bf16.gmra.mxu0 %v1485
        %v1583 = vpop.f32.mrf.mxu0
        %v1584 = vadd.f32 0.0, %v1583
        %v1585 = vpop.f32.mrf.mxu0
        %v1586 = vadd.f32 0.0, %v1585
        %1587 = vmatmul.bf16.gmra.mxu0 %v1486
        %v1588 = vpop.f32.mrf.mxu0
        %v1589 = vadd.f32 0.0, %v1588
        %v1590 = vpop.f32.mrf.mxu0
        %v1591 = vadd.f32 0.0, %v1590
        %1592 = vmatmul.bf16.gmra.mxu0 %v1487
        %v1593 = vpop.f32.mrf.mxu0
        %v1594 = vadd.f32 0.0, %v1593
        %v1595 = vpop.f32.mrf.mxu0
        %v1596 = vadd.f32 0.0, %v1595
        %1597 = vmatmul.bf16.gmra.mxu0 %v1488
        %v1598 = vpop.f32.mrf.mxu0
        %v1599 = vadd.f32 0.0, %v1598
        %v1600 = vpop.f32.mrf.mxu0
        %v1601 = vadd.f32 0.0, %v1600
        %1602 = vmatmul.bf16.gmra.mxu0 %v1489
        %v1603 = vpop.f32.mrf.mxu0
        %v1604 = vadd.f32 0.0, %v1603
        %v1605 = vpop.f32.mrf.mxu0
        %v1606 = vadd.f32 0.0, %v1605
        %1607 = vmatmul.bf16.gmra.mxu0 %v1490
        %v1608 = vpop.f32.mrf.mxu0
        %v1609 = vadd.f32 0.0, %v1608
        %v1610 = vpop.f32.mrf.mxu0
        %v1611 = vadd.f32 0.0, %v1610
        %1612 = vmatmul.bf16.gmra.mxu0 %v1491
        %v1613 = vpop.f32.mrf.mxu0
        %v1614 = vadd.f32 0.0, %v1613
        %v1615 = vpop.f32.mrf.mxu0
        %v1616 = vadd.f32 0.0, %v1615
        %1617 = vmatmul.bf16.gmra.mxu0 %v1492
        %v1618 = vpop.f32.mrf.mxu0
        %v1619 = vadd.f32 0.0, %v1618
        %v1620 = vpop.f32.mrf.mxu0
        %v1621 = vadd.f32 0.0, %v1620
        %1622 = vmatmul.bf16.gmra.mxu0 %v1493
        %v1623 = vpop.f32.mrf.mxu0
        %v1624 = vadd.f32 0.0, %v1623
        %v1625 = vpop.f32.mrf.mxu0
        %v1626 = vadd.f32 0.0, %v1625
        %1627 = vmatmul.bf16.gmra.mxu0 %v1494
        %v1628 = vpop.f32.mrf.mxu0
        %v1629 = vadd.f32 0.0, %v1628
        %v1630 = vpop.f32.mrf.mxu0
        %v1631 = vadd.f32 0.0, %v1630
        %1632 = vmatmul.bf16.gmra.mxu0 %v1495
        %v1633 = vpop.f32.mrf.mxu0
        %v1634 = vadd.f32 0.0, %v1633
        %v1635 = vpop.f32.mrf.mxu0
        %v1636 = vadd.f32 0.0, %v1635
        %1637 = vmatmul.bf16.gmra.mxu0 %v1496
        %v1638 = vpop.f32.mrf.mxu0
        %v1639 = vadd.f32 0.0, %v1638
        %v1640 = vpop.f32.mrf.mxu0
        %v1641 = vadd.f32 0.0, %v1640
        %1642 = vmatmul.bf16.gmra.mxu0 %v1497
        %v1643 = vpop.f32.mrf.mxu0
        %v1644 = vadd.f32 0.0, %v1643
        %v1645 = vpop.f32.mrf.mxu0
        %v1646 = vadd.f32 0.0, %v1645
        %1647 = vmatmul.bf16.gmra.mxu0 %v1498
        %v1648 = vpop.f32.mrf.mxu0
        %v1649 = vadd.f32 0.0, %v1648
        %v1650 = vpop.f32.mrf.mxu0
        %v1651 = vadd.f32 0.0, %v1650
        %1652 = vdwg.mxu0
        %v1669 = vunpack.c.l.b16 %v1371
        %v1670 = vunpack.c.l.b16 %v1372
        %v1671 = vunpack.c.l.b16 %v1373
        %v1672 = vunpack.c.l.b16 %v1374
        %v1673 = vunpack.c.l.b16 %v1375
        %v1674 = vunpack.c.l.b16 %v1376
        %v1675 = vunpack.c.l.b16 %v1377
        %v1676 = vunpack.c.l.b16 %v1378
        %v1677 = vunpack.c.l.b16 %v1379
        %v1678 = vunpack.c.l.b16 %v1380
        %v1679 = vunpack.c.l.b16 %v1381
        %v1680 = vunpack.c.l.b16 %v1382
        %v1681 = vunpack.c.l.b16 %v1383
        %v1682 = vunpack.c.l.b16 %v1384
        %v1683 = vunpack.c.l.b16 %v1385
        %v1684 = vunpack.c.l.b16 %v1386
        %v1685 = vpack.c.b16 %v1670, %v1669
        %v1686 = vpack.c.b16 %v1672, %v1671
        %v1687 = vpack.c.b16 %v1674, %v1673
        %v1688 = vpack.c.b16 %v1676, %v1675
        %v1689 = vpack.c.b16 %v1678, %v1677
        %v1690 = vpack.c.b16 %v1680, %v1679
        %v1691 = vpack.c.b16 %v1682, %v1681
        %v1692 = vpack.c.b16 %v1684, %v1683
        %1701 = vmatpush.bf16.msra.mxu0 %v1692
        %1702 = vmatpush.bf16.msra.mxu0 %v1691
        %1703 = vmatpush.bf16.msra.mxu0 %v1690
        %1704 = vmatpush.bf16.msra.mxu0 %v1689
        %1705 = vmatpush.bf16.msra.mxu0 %v1688
        %1706 = vmatpush.bf16.msra.mxu0 %v1687
        %1707 = vmatpush.bf16.msra.mxu0 %v1686
        %1708 = vmatpush.bf16.msra.mxu0 %v1685
        %1709 = vmatmul.bf16.gmra.mxu0 %v1355
        %v1710 = vpop.f32.mrf.mxu0
        %v1711 = vadd.f32 %v1574, %v1710
        %v1712 = vpop.f32.mrf.mxu0
        %v1713 = vadd.f32 %v1576, %v1712
        %1714 = vmatmul.bf16.gmra.mxu0 %v1356
        %v1715 = vpop.f32.mrf.mxu0
        %v1716 = vadd.f32 %v1579, %v1715
        %v1717 = vpop.f32.mrf.mxu0
        %v1718 = vadd.f32 %v1581, %v1717
        %1719 = vmatmul.bf16.gmra.mxu0 %v1357
        %v1720 = vpop.f32.mrf.mxu0
        %v1721 = vadd.f32 %v1584, %v1720
        %v1722 = vpop.f32.mrf.mxu0
        %v1723 = vadd.f32 %v1586, %v1722
        %1724 = vmatmul.bf16.gmra.mxu0 %v1358
        %v1725 = vpop.f32.mrf.mxu0
        %v1726 = vadd.f32 %v1589, %v1725
        %v1727 = vpop.f32.mrf.mxu0
        %v1728 = vadd.f32 %v1591, %v1727
        %1729 = vmatmul.bf16.gmra.mxu0 %v1359
        %v1730 = vpop.f32.mrf.mxu0
        %v1731 = vadd.f32 %v1594, %v1730
        %v1732 = vpop.f32.mrf.mxu0
        %v1733 = vadd.f32 %v1596, %v1732
        %1734 = vmatmul.bf16.gmra.mxu0 %v1360
        %v1735 = vpop.f32.mrf.mxu0
        %v1736 = vadd.f32 %v1599, %v1735
        %v1737 = vpop.f32.mrf.mxu0
        %v1738 = vadd.f32 %v1601, %v1737
        %1739 = vmatmul.bf16.gmra.mxu0 %v1361
        %v1740 = vpop.f32.mrf.mxu0
        %v1741 = vadd.f32 %v1604, %v1740
        %v1742 = vpop.f32.mrf.mxu0
        %v1743 = vadd.f32 %v1606, %v1742
        %1744 = vmatmul.bf16.gmra.mxu0 %v1362
        %v1745 = vpop.f32.mrf.mxu0
        %v1746 = vadd.f32 %v1609, %v1745
        %v1747 = vpop.f32.mrf.mxu0
        %v1748 = vadd.f32 %v1611, %v1747
        %1749 = vmatmul.bf16.gmra.mxu0 %v1363
        %v1750 = vpop.f32.mrf.mxu0
        %v1751 = vadd.f32 %v1614, %v1750
        %v1752 = vpop.f32.mrf.mxu0
        %v1753 = vadd.f32 %v1616, %v1752
        %1754 = vmatmul.bf16.gmra.mxu0 %v1364
        %v1755 = vpop.f32.mrf.mxu0
        %v1756 = vadd.f32 %v1619, %v1755
        %v1757 = vpop.f32.mrf.mxu0
        %v1758 = vadd.f32 %v1621, %v1757
        %1759 = vmatmul.bf16.gmra.mxu0 %v1365
        %v1760 = vpop.f32.mrf.mxu0
        %v1761 = vadd.f32 %v1624, %v1760
        %v1762 = vpop.f32.mrf.mxu0
        %v1763 = vadd.f32 %v1626, %v1762
        %1764 = vmatmul.bf16.gmra.mxu0 %v1366
        %v1765 = vpop.f32.mrf.mxu0
        %v1766 = vadd.f32 %v1629, %v1765
        %v1767 = vpop.f32.mrf.mxu0
        %v1768 = vadd.f32 %v1631, %v1767
        %1769 = vmatmul.bf16.gmra.mxu0 %v1367
        %v1770 = vpop.f32.mrf.mxu0
        %v1771 = vadd.f32 %v1634, %v1770
        %v1772 = vpop.f32.mrf.mxu0
        %v1773 = vadd.f32 %v1636, %v1772
        %1774 = vmatmul.bf16.gmra.mxu0 %v1368
        %v1775 = vpop.f32.mrf.mxu0
        %v1776 = vadd.f32 %v1639, %v1775
        %v1777 = vpop.f32.mrf.mxu0
        %v1778 = vadd.f32 %v1641, %v1777
        %1779 = vmatmul.bf16.gmra.mxu0 %v1369
        %v1780 = vpop.f32.mrf.mxu0
        %v1781 = vadd.f32 %v1644, %v1780
        %v1782 = vpop.f32.mrf.mxu0
        %v1783 = vadd.f32 %v1646, %v1782
        %1784 = vmatmul.bf16.gmra.mxu0 %v1370
        %v1785 = vpop.f32.mrf.mxu0
        %v1786 = vadd.f32 %v1649, %v1785
        %v1787 = vpop.f32.mrf.mxu0
        %v1788 = vadd.f32 %v1651, %v1787
        %1789 = vdwg.mxu0
        %v1790 = vrot.slane %v969, 1
        %v1791 = vrot.slane %v970, 1
        %v1792 = vrot.slane %v971, 1
        %v1793 = vrot.slane %v972, 1
        %v1794 = vrot.slane %v973, 1
        %v1795 = vrot.slane %v974, 1
        %v1796 = vrot.slane %v975, 1
        %v1797 = vrot.slane %v976, 1
        %v1798 = vrot.slane %v977, 1
        %v1799 = vrot.slane %v978, 1
        %v1800 = vrot.slane %v979, 1
        %v1801 = vrot.slane %v980, 1
        %v1802 = vrot.slane %v981, 1
        %v1803 = vrot.slane %v982, 1
        %v1804 = vrot.slane %v983, 1
        %v1805 = vrot.slane %v984, 1
        %v1806 = vrot.slane %v985, 1
        %v1807 = vrot.slane %v986, 1
        %v1808 = vrot.slane %v987, 1
        %v1809 = vrot.slane %v988, 1
        %v1810 = vrot.slane %v989, 1
        %v1811 = vrot.slane %v990, 1
        %v1812 = vrot.slane %v991, 1
        %v1813 = vrot.slane %v992, 1
        %v1814 = vrot.slane %v993, 1
        %v1815 = vrot.slane %v994, 1
        %v1816 = vrot.slane %v995, 1
        %v1817 = vrot.slane %v996, 1
        %v1818 = vrot.slane %v997, 1
        %v1819 = vrot.slane %v998, 1
        %v1820 = vrot.slane %v999, 1
        %v1821 = vrot.slane %v1000, 1
        %vm1822 = vcmp.lt.s32.totalorder %v1002, 7
        %v1823 = vsel %vm1822, %v1820, %v1821
        %v1824 = vsel %vm1822, %v1819, %v1820
        %v1825 = vsel %vm1822, %v1818, %v1819
        %v1826 = vsel %vm1822, %v1817, %v1818
        %v1827 = vsel %vm1822, %v1816, %v1817
        %v1828 = vsel %vm1822, %v1815, %v1816
        %v1829 = vsel %vm1822, %v1814, %v1815
        %v1830 = vsel %vm1822, %v1813, %v1814
        %v1831 = vsel %vm1822, %v1812, %v1813
        %v1832 = vsel %vm1822, %v1811, %v1812
        %v1833 = vsel %vm1822, %v1810, %v1811
        %v1834 = vsel %vm1822, %v1809, %v1810
        %v1835 = vsel %vm1822, %v1808, %v1809
        %v1836 = vsel %vm1822, %v1807, %v1808
        %v1837 = vsel %vm1822, %v1806, %v1807
        %v1838 = vsel %vm1822, %v1805, %v1806
        %v1839 = vsel %vm1822, %v1804, %v1805
        %v1840 = vsel %vm1822, %v1803, %v1804
        %v1841 = vsel %vm1822, %v1802, %v1803
        %v1842 = vsel %vm1822, %v1801, %v1802
        %v1843 = vsel %vm1822, %v1800, %v1801
        %v1844 = vsel %vm1822, %v1799, %v1800
        %v1845 = vsel %vm1822, %v1798, %v1799
        %v1846 = vsel %vm1822, %v1797, %v1798
        %v1847 = vsel %vm1822, %v1796, %v1797
        %v1848 = vsel %vm1822, %v1795, %v1796
        %v1849 = vsel %vm1822, %v1794, %v1795
        %v1850 = vsel %vm1822, %v1793, %v1794
        %v1851 = vsel %vm1822, %v1792, %v1793
        %v1852 = vsel %vm1822, %v1791, %v1792
        %v1853 = vsel %vm1822, %v1790, %v1791
        %v1854 = vsel %vm1822, %v1821, %v1790
        %vm1855 = vcmp.le.s32.totalorder %v1066, 14
        %vm1856 = vcmp.le.s32.totalorder %v1067, 14
        %vm1857 = vcmp.le.s32.totalorder %v1068, 14
        %vm1858 = vcmp.le.s32.totalorder %v1069, 14
        %vm1859 = vcmp.le.s32.totalorder %v1070, 14
        %vm1860 = vcmp.le.s32.totalorder %v1071, 14
        %vm1861 = vcmp.le.s32.totalorder %v1072, 14
        %vm1862 = vcmp.le.s32.totalorder %v1073, 14
        %vm1863 = vcmp.le.s32.totalorder %v1074, 14
        %vm1864 = vcmp.le.s32.totalorder %v1075, 14
        %vm1865 = vcmp.le.s32.totalorder %v1076, 14
        %vm1866 = vcmp.le.s32.totalorder %v1077, 14
        %vm1867 = vcmp.le.s32.totalorder %v1078, 14
        %vm1868 = vcmp.le.s32.totalorder %v1079, 14
        %vm1869 = vcmp.le.s32.totalorder %v1080, 14
        %vm1870 = vcmp.le.s32.totalorder %v1081, 14
        %vm1871 = vcmp.le.s32.totalorder %v1082, 14
        %vm1872 = vcmp.le.s32.totalorder %v1083, 14
        %vm1873 = vcmp.le.s32.totalorder %v1084, 14
        %vm1874 = vcmp.le.s32.totalorder %v1085, 14
        %vm1875 = vcmp.le.s32.totalorder %v1086, 14
        %vm1876 = vcmp.le.s32.totalorder %v1087, 14
        %vm1877 = vcmp.le.s32.totalorder %v1088, 14
        %vm1878 = vcmp.le.s32.totalorder %v1089, 14
        %vm1879 = vcmp.le.s32.totalorder %v1090, 14
        %vm1880 = vcmp.le.s32.totalorder %v1091, 14
        %vm1881 = vcmp.le.s32.totalorder %v1092, 14
        %vm1882 = vcmp.le.s32.totalorder %v1093, 14
        %vm1883 = vcmp.le.s32.totalorder %v1094, 14
        %vm1884 = vcmp.le.s32.totalorder %v1095, 14
        %vm1885 = vcmp.le.s32.totalorder %v1096, 14
        %vm1886 = vcmp.le.s32.totalorder %v1097, 14
        %vm1887 = vmand %vm1163, %vm1855
        %vm1888 = vmand %vm1164, %vm1856
        %vm1889 = vmand %vm1165, %vm1857
        %vm1890 = vmand %vm1166, %vm1858
        %vm1891 = vmand %vm1167, %vm1859
        %vm1892 = vmand %vm1168, %vm1860
        %vm1893 = vmand %vm1169, %vm1861
        %vm1894 = vmand %vm1170, %vm1862
        %vm1895 = vmand %vm1171, %vm1863
        %vm1896 = vmand %vm1172, %vm1864
        %vm1897 = vmand %vm1173, %vm1865
        %vm1898 = vmand %vm1174, %vm1866
        %vm1899 = vmand %vm1175, %vm1867
        %vm1900 = vmand %vm1176, %vm1868
        %vm1901 = vmand %vm1177, %vm1869
        %vm1902 = vmand %vm1178, %vm1870
        %vm1903 = vmand %vm1179, %vm1871
        %vm1904 = vmand %vm1180, %vm1872
        %vm1905 = vmand %vm1181, %vm1873
        %vm1906 = vmand %vm1182, %vm1874
        %vm1907 = vmand %vm1183, %vm1875
        %vm1908 = vmand %vm1184, %vm1876
        %vm1909 = vmand %vm1185, %vm1877
        %vm1910 = vmand %vm1186, %vm1878
        %vm1911 = vmand %vm1187, %vm1879
        %vm1912 = vmand %vm1188, %vm1880
        %vm1913 = vmand %vm1189, %vm1881
        %vm1914 = vmand %vm1190, %vm1882
        %vm1915 = vmand %vm1191, %vm1883
        %vm1916 = vmand %vm1192, %vm1884
        %vm1917 = vmand %vm1193, %vm1885
        %vm1918 = vmand %vm1194, %vm1886
        %v1919 = vsel %vm1887, 1, 0
        %v1920 = vsel %vm1888, 1, 0
        %v1921 = vsel %vm1889, 1, 0
        %v1922 = vsel %vm1890, 1, 0
        %v1923 = vsel %vm1891, 1, 0
        %v1924 = vsel %vm1892, 1, 0
        %v1925 = vsel %vm1893, 1, 0
        %v1926 = vsel %vm1894, 1, 0
        %v1927 = vsel %vm1895, 1, 0
        %v1928 = vsel %vm1896, 1, 0
        %v1929 = vsel %vm1897, 1, 0
        %v1930 = vsel %vm1898, 1, 0
        %v1931 = vsel %vm1899, 1, 0
        %v1932 = vsel %vm1900, 1, 0
        %v1933 = vsel %vm1901, 1, 0
        %v1934 = vsel %vm1902, 1, 0
        %v1935 = vsel %vm1903, 1, 0
        %v1936 = vsel %vm1904, 1, 0
        %v1937 = vsel %vm1905, 1, 0
        %v1938 = vsel %vm1906, 1, 0
        %v1939 = vsel %vm1907, 1, 0
        %v1940 = vsel %vm1908, 1, 0
        %v1941 = vsel %vm1909, 1, 0
        %v1942 = vsel %vm1910, 1, 0
        %v1943 = vsel %vm1911, 1, 0
        %v1944 = vsel %vm1912, 1, 0
        %v1945 = vsel %vm1913, 1, 0
        %v1946 = vsel %vm1914, 1, 0
        %v1947 = vsel %vm1915, 1, 0
        %v1948 = vsel %vm1916, 1, 0
        %v1949 = vsel %vm1917, 1, 0
        %v1950 = vsel %vm1918, 1, 0
        %vm1951 = vcmp.eq.s32.totalorder %v1919, 1
        %vm1952 = vcmp.eq.s32.totalorder %v1920, 1
        %vm1953 = vcmp.eq.s32.totalorder %v1921, 1
        %vm1954 = vcmp.eq.s32.totalorder %v1922, 1
        %vm1955 = vcmp.eq.s32.totalorder %v1923, 1
        %vm1956 = vcmp.eq.s32.totalorder %v1924, 1
        %vm1957 = vcmp.eq.s32.totalorder %v1925, 1
        %vm1958 = vcmp.eq.s32.totalorder %v1926, 1
        %vm1959 = vcmp.eq.s32.totalorder %v1927, 1
        %vm1960 = vcmp.eq.s32.totalorder %v1928, 1
        %vm1961 = vcmp.eq.s32.totalorder %v1929, 1
        %vm1962 = vcmp.eq.s32.totalorder %v1930, 1
        %vm1963 = vcmp.eq.s32.totalorder %v1931, 1
        %vm1964 = vcmp.eq.s32.totalorder %v1932, 1
        %vm1965 = vcmp.eq.s32.totalorder %v1933, 1
        %vm1966 = vcmp.eq.s32.totalorder %v1934, 1
        %vm1967 = vcmp.eq.s32.totalorder %v1935, 1
        %vm1968 = vcmp.eq.s32.totalorder %v1936, 1
        %vm1969 = vcmp.eq.s32.totalorder %v1937, 1
        %vm1970 = vcmp.eq.s32.totalorder %v1938, 1
        %vm1971 = vcmp.eq.s32.totalorder %v1939, 1
        %vm1972 = vcmp.eq.s32.totalorder %v1940, 1
        %vm1973 = vcmp.eq.s32.totalorder %v1941, 1
        %vm1974 = vcmp.eq.s32.totalorder %v1942, 1
        %vm1975 = vcmp.eq.s32.totalorder %v1943, 1
        %vm1976 = vcmp.eq.s32.totalorder %v1944, 1
        %vm1977 = vcmp.eq.s32.totalorder %v1945, 1
        %vm1978 = vcmp.eq.s32.totalorder %v1946, 1
        %vm1979 = vcmp.eq.s32.totalorder %v1947, 1
        %vm1980 = vcmp.eq.s32.totalorder %v1948, 1
        %vm1981 = vcmp.eq.s32.totalorder %v1949, 1
        %vm1982 = vcmp.eq.s32.totalorder %v1950, 1
        %v1983 = vsel %vm1951, %v1823, 0.0
        %v1984 = vsel %vm1952, %v1854, 0.0
        %v1985 = vsel %vm1953, %v1853, 0.0
        %v1986 = vsel %vm1954, %v1852, 0.0
        %v1987 = vsel %vm1955, %v1851, 0.0
        %v1988 = vsel %vm1956, %v1850, 0.0
        %v1989 = vsel %vm1957, %v1849, 0.0
        %v1990 = vsel %vm1958, %v1848, 0.0
        %v1991 = vsel %vm1959, %v1847, 0.0
        %v1992 = vsel %vm1960, %v1846, 0.0
        %v1993 = vsel %vm1961, %v1845, 0.0
        %v1994 = vsel %vm1962, %v1844, 0.0
        %v1995 = vsel %vm1963, %v1843, 0.0
        %v1996 = vsel %vm1964, %v1842, 0.0
        %v1997 = vsel %vm1965, %v1841, 0.0
        %v1998 = vsel %vm1966, %v1840, 0.0
        %v1999 = vsel %vm1967, %v1839, 0.0
        %v2000 = vsel %vm1968, %v1838, 0.0
        %v2001 = vsel %vm1969, %v1837, 0.0
        %v2002 = vsel %vm1970, %v1836, 0.0
        %v2003 = vsel %vm1971, %v1835, 0.0
        %v2004 = vsel %vm1972, %v1834, 0.0
        %v2005 = vsel %vm1973, %v1833, 0.0
        %v2006 = vsel %vm1974, %v1832, 0.0
        %v2007 = vsel %vm1975, %v1831, 0.0
        %v2008 = vsel %vm1976, %v1830, 0.0
        %v2009 = vsel %vm1977, %v1829, 0.0
        %v2010 = vsel %vm1978, %v1828, 0.0
        %v2011 = vsel %vm1979, %v1827, 0.0
        %v2012 = vsel %vm1980, %v1826, 0.0
        %v2013 = vsel %vm1981, %v1825, 0.0
        %v2014 = vsel %vm1982, %v1824, 0.0
        %v2015 = vpack.c.bf16 %v1984, %v1983
        %v2016 = vpack.c.bf16 %v1986, %v1985
        %v2017 = vpack.c.bf16 %v1988, %v1987
        %v2018 = vpack.c.bf16 %v1990, %v1989
        %v2019 = vpack.c.bf16 %v1992, %v1991
        %v2020 = vpack.c.bf16 %v1994, %v1993
        %v2021 = vpack.c.bf16 %v1996, %v1995
        %v2022 = vpack.c.bf16 %v1998, %v1997
        %v2023 = vpack.c.bf16 %v2000, %v1999
        %v2024 = vpack.c.bf16 %v2002, %v2001
        %v2025 = vpack.c.bf16 %v2004, %v2003
        %v2026 = vpack.c.bf16 %v2006, %v2005
        %v2027 = vpack.c.bf16 %v2008, %v2007
        %v2028 = vpack.c.bf16 %v2010, %v2009
        %v2029 = vpack.c.bf16 %v2012, %v2011
        %v2030 = vpack.c.bf16 %v2014, %v2013
        %s2031 = scalar_lea.vmem [#allocation8], 128
        %v2032 = vld [vmem:[%s2031] sm:$0xf]
        %v2033 = vld [vmem:[%s2031 + $0x4] sm:$0xf]
        %v2034 = vld [vmem:[%s2031 + $0x8] sm:$0xf]
        %v2035 = vld [vmem:[%s2031 + $0xc] sm:$0xf]
        %v2036 = vld [vmem:[%s2031 + $0x10] sm:$0xf]
        %v2037 = vld [vmem:[%s2031 + $0x14] sm:$0xf]
        %v2038 = vld [vmem:[%s2031 + $0x18] sm:$0xf]
        %v2039 = vld [vmem:[%s2031 + $0x1c] sm:$0xf]
        %v2040 = vld [vmem:[%s2031 + $0x20] sm:$0xf]
        %v2041 = vld [vmem:[%s2031 + $0x24] sm:$0xf]
        %v2042 = vld [vmem:[%s2031 + $0x28] sm:$0xf]
        %v2043 = vld [vmem:[%s2031 + $0x2c] sm:$0xf]
        %v2044 = vld [vmem:[%s2031 + $0x30] sm:$0xf]
        %v2045 = vld [vmem:[%s2031 + $0x34] sm:$0xf]
        %v2046 = vld [vmem:[%s2031 + $0x38] sm:$0xf]
        %v2047 = vld [vmem:[%s2031 + $0x3c] sm:$0xf]
        %v2064 = vunpack.c.l.b16 %v2032
        %v2065 = vunpack.c.l.b16 %v2033
        %v2066 = vunpack.c.l.b16 %v2034
        %v2067 = vunpack.c.l.b16 %v2035
        %v2068 = vunpack.c.l.b16 %v2036
        %v2069 = vunpack.c.l.b16 %v2037
        %v2070 = vunpack.c.l.b16 %v2038
        %v2071 = vunpack.c.l.b16 %v2039
        %v2072 = vunpack.c.l.b16 %v2040
        %v2073 = vunpack.c.l.b16 %v2041
        %v2074 = vunpack.c.l.b16 %v2042
        %v2075 = vunpack.c.l.b16 %v2043
        %v2076 = vunpack.c.l.b16 %v2044
        %v2077 = vunpack.c.l.b16 %v2045
        %v2078 = vunpack.c.l.b16 %v2046
        %v2079 = vunpack.c.l.b16 %v2047
        %v2080 = vpack.c.b16 %v2065, %v2064
        %v2081 = vpack.c.b16 %v2067, %v2066
        %v2082 = vpack.c.b16 %v2069, %v2068
        %v2083 = vpack.c.b16 %v2071, %v2070
        %v2084 = vpack.c.b16 %v2073, %v2072
        %v2085 = vpack.c.b16 %v2075, %v2074
        %v2086 = vpack.c.b16 %v2077, %v2076
        %v2087 = vpack.c.b16 %v2079, %v2078
        %2096 = vmatpush.bf16.msra.mxu0 %v2087
        %2097 = vmatpush.bf16.msra.mxu0 %v2086
        %2098 = vmatpush.bf16.msra.mxu0 %v2085
        %2099 = vmatpush.bf16.msra.mxu0 %v2084
        %2100 = vmatpush.bf16.msra.mxu0 %v2083
        %2101 = vmatpush.bf16.msra.mxu0 %v2082
        %2102 = vmatpush.bf16.msra.mxu0 %v2081
        %2103 = vmatpush.bf16.msra.mxu0 %v2080
        %2104 = vmatmul.bf16.gmra.mxu0 %v2015
        %v2105 = vpop.f32.mrf.mxu0
        %v2106 = vadd.f32 0.0, %v2105
        %v2107 = vpop.f32.mrf.mxu0
        %v2108 = vadd.f32 0.0, %v2107
        %2109 = vmatmul.bf16.gmra.mxu0 %v2016
        %v2110 = vpop.f32.mrf.mxu0
        %v2111 = vadd.f32 0.0, %v2110
        %v2112 = vpop.f32.mrf.mxu0
        %v2113 = vadd.f32 0.0, %v2112
        %2114 = vmatmul.bf16.gmra.mxu0 %v2017
        %v2115 = vpop.f32.mrf.mxu0
        %v2116 = vadd.f32 0.0, %v2115
        %v2117 = vpop.f32.mrf.mxu0
        %v2118 = vadd.f32 0.0, %v2117
        %2119 = vmatmul.bf16.gmra.mxu0 %v2018
        %v2120 = vpop.f32.mrf.mxu0
        %v2121 = vadd.f32 0.0, %v2120
        %v2122 = vpop.f32.mrf.mxu0
        %v2123 = vadd.f32 0.0, %v2122
        %2124 = vmatmul.bf16.gmra.mxu0 %v2019
        %v2125 = vpop.f32.mrf.mxu0
        %v2126 = vadd.f32 0.0, %v2125
        %v2127 = vpop.f32.mrf.mxu0
        %v2128 = vadd.f32 0.0, %v2127
        %2129 = vmatmul.bf16.gmra.mxu0 %v2020
        %v2130 = vpop.f32.mrf.mxu0
        %v2131 = vadd.f32 0.0, %v2130
        %v2132 = vpop.f32.mrf.mxu0
        %v2133 = vadd.f32 0.0, %v2132
        %2134 = vmatmul.bf16.gmra.mxu0 %v2021
        %v2135 = vpop.f32.mrf.mxu0
        %v2136 = vadd.f32 0.0, %v2135
        %v2137 = vpop.f32.mrf.mxu0
        %v2138 = vadd.f32 0.0, %v2137
        %2139 = vmatmul.bf16.gmra.mxu0 %v2022
        %v2140 = vpop.f32.mrf.mxu0
        %v2141 = vadd.f32 0.0, %v2140
        %v2142 = vpop.f32.mrf.mxu0
        %v2143 = vadd.f32 0.0, %v2142
        %2144 = vmatmul.bf16.gmra.mxu0 %v2023
        %v2145 = vpop.f32.mrf.mxu0
        %v2146 = vadd.f32 0.0, %v2145
        %v2147 = vpop.f32.mrf.mxu0
        %v2148 = vadd.f32 0.0, %v2147
        %2149 = vmatmul.bf16.gmra.mxu0 %v2024
        %v2150 = vpop.f32.mrf.mxu0
        %v2151 = vadd.f32 0.0, %v2150
        %v2152 = vpop.f32.mrf.mxu0
        %v2153 = vadd.f32 0.0, %v2152
        %2154 = vmatmul.bf16.gmra.mxu0 %v2025
        %v2155 = vpop.f32.mrf.mxu0
        %v2156 = vadd.f32 0.0, %v2155
        %v2157 = vpop.f32.mrf.mxu0
        %v2158 = vadd.f32 0.0, %v2157
        %2159 = vmatmul.bf16.gmra.mxu0 %v2026
        %v2160 = vpop.f32.mrf.mxu0
        %v2161 = vadd.f32 0.0, %v2160
        %v2162 = vpop.f32.mrf.mxu0
        %v2163 = vadd.f32 0.0, %v2162
        %2164 = vmatmul.bf16.gmra.mxu0 %v2027
        %v2165 = vpop.f32.mrf.mxu0
        %v2166 = vadd.f32 0.0, %v2165
        %v2167 = vpop.f32.mrf.mxu0
        %v2168 = vadd.f32 0.0, %v2167
        %2169 = vmatmul.bf16.gmra.mxu0 %v2028
        %v2170 = vpop.f32.mrf.mxu0
        %v2171 = vadd.f32 0.0, %v2170
        %v2172 = vpop.f32.mrf.mxu0
        %v2173 = vadd.f32 0.0, %v2172
        %2174 = vmatmul.bf16.gmra.mxu0 %v2029
        %v2175 = vpop.f32.mrf.mxu0
        %v2176 = vadd.f32 0.0, %v2175
        %v2177 = vpop.f32.mrf.mxu0
        %v2178 = vadd.f32 0.0, %v2177
        %2179 = vmatmul.bf16.gmra.mxu0 %v2030
        %v2180 = vpop.f32.mrf.mxu0
        %v2181 = vadd.f32 0.0, %v2180
        %v2182 = vpop.f32.mrf.mxu0
        %v2183 = vadd.f32 0.0, %v2182
        %2184 = vdwg.mxu0
        %v2185 = vadd.f32 %v1711, %v2106
        %v2186 = vadd.f32 %v1713, %v2108
        %v2187 = vadd.f32 %v1716, %v2111
        %v2188 = vadd.f32 %v1718, %v2113
        %v2189 = vadd.f32 %v1721, %v2116
        %v2190 = vadd.f32 %v1723, %v2118
        %v2191 = vadd.f32 %v1726, %v2121
        %v2192 = vadd.f32 %v1728, %v2123
        %v2193 = vadd.f32 %v1731, %v2126
        %v2194 = vadd.f32 %v1733, %v2128
        %v2195 = vadd.f32 %v1736, %v2131
        %v2196 = vadd.f32 %v1738, %v2133
        %v2197 = vadd.f32 %v1741, %v2136
        %v2198 = vadd.f32 %v1743, %v2138
        %v2199 = vadd.f32 %v1746, %v2141
        %v2200 = vadd.f32 %v1748, %v2143
        %v2201 = vadd.f32 %v1751, %v2146
        %v2202 = vadd.f32 %v1753, %v2148
        %v2203 = vadd.f32 %v1756, %v2151
        %v2204 = vadd.f32 %v1758, %v2153
        %v2205 = vadd.f32 %v1761, %v2156
        %v2206 = vadd.f32 %v1763, %v2158
        %v2207 = vadd.f32 %v1766, %v2161
        %v2208 = vadd.f32 %v1768, %v2163
        %v2209 = vadd.f32 %v1771, %v2166
        %v2210 = vadd.f32 %v1773, %v2168
        %v2211 = vadd.f32 %v1776, %v2171
        %v2212 = vadd.f32 %v1778, %v2173
        %v2213 = vadd.f32 %v1781, %v2176
        %v2214 = vadd.f32 %v1783, %v2178
        %v2215 = vadd.f32 %v1786, %v2181
        %v2216 = vadd.f32 %v1788, %v2183
        %v2217 = vsel %vm1195, 1, 0
        %v2218 = vsel %vm1196, 1, 0
        %v2219 = vsel %vm1197, 1, 0
        %v2220 = vsel %vm1198, 1, 0
        %v2221 = vsel %vm1199, 1, 0
        %v2222 = vsel %vm1200, 1, 0
        %v2223 = vsel %vm1201, 1, 0
        %v2224 = vsel %vm1202, 1, 0
        %v2225 = vsel %vm1203, 1, 0
        %v2226 = vsel %vm1204, 1, 0
        %v2227 = vsel %vm1205, 1, 0
        %v2228 = vsel %vm1206, 1, 0
        %v2229 = vsel %vm1207, 1, 0
        %v2230 = vsel %vm1208, 1, 0
        %v2231 = vsel %vm1209, 1, 0
        %v2232 = vsel %vm1210, 1, 0
        %v2233 = vsel %vm1211, 1, 0
        %v2234 = vsel %vm1212, 1, 0
        %v2235 = vsel %vm1213, 1, 0
        %v2236 = vsel %vm1214, 1, 0
        %v2237 = vsel %vm1215, 1, 0
        %v2238 = vsel %vm1216, 1, 0
        %v2239 = vsel %vm1217, 1, 0
        %v2240 = vsel %vm1218, 1, 0
        %v2241 = vsel %vm1219, 1, 0
        %v2242 = vsel %vm1220, 1, 0
        %v2243 = vsel %vm1221, 1, 0
        %v2244 = vsel %vm1222, 1, 0
        %v2245 = vsel %vm1223, 1, 0
        %v2246 = vsel %vm1224, 1, 0
        %v2247 = vsel %vm1225, 1, 0
        %v2248 = vsel %vm1226, 1, 0
        %vm2249 = vcmp.eq.s32.totalorder %v2217, 1
        %vm2250 = vcmp.eq.s32.totalorder %v2218, 1
        %vm2251 = vcmp.eq.s32.totalorder %v2219, 1
        %vm2252 = vcmp.eq.s32.totalorder %v2220, 1
        %vm2253 = vcmp.eq.s32.totalorder %v2221, 1
        %vm2254 = vcmp.eq.s32.totalorder %v2222, 1
        %vm2255 = vcmp.eq.s32.totalorder %v2223, 1
        %vm2256 = vcmp.eq.s32.totalorder %v2224, 1
        %vm2257 = vcmp.eq.s32.totalorder %v2225, 1
        %vm2258 = vcmp.eq.s32.totalorder %v2226, 1
        %vm2259 = vcmp.eq.s32.totalorder %v2227, 1
        %vm2260 = vcmp.eq.s32.totalorder %v2228, 1
        %vm2261 = vcmp.eq.s32.totalorder %v2229, 1
        %vm2262 = vcmp.eq.s32.totalorder %v2230, 1
        %vm2263 = vcmp.eq.s32.totalorder %v2231, 1
        %vm2264 = vcmp.eq.s32.totalorder %v2232, 1
        %vm2265 = vcmp.eq.s32.totalorder %v2233, 1
        %vm2266 = vcmp.eq.s32.totalorder %v2234, 1
        %vm2267 = vcmp.eq.s32.totalorder %v2235, 1
        %vm2268 = vcmp.eq.s32.totalorder %v2236, 1
        %vm2269 = vcmp.eq.s32.totalorder %v2237, 1
        %vm2270 = vcmp.eq.s32.totalorder %v2238, 1
        %vm2271 = vcmp.eq.s32.totalorder %v2239, 1
        %vm2272 = vcmp.eq.s32.totalorder %v2240, 1
        %vm2273 = vcmp.eq.s32.totalorder %v2241, 1
        %vm2274 = vcmp.eq.s32.totalorder %v2242, 1
        %vm2275 = vcmp.eq.s32.totalorder %v2243, 1
        %vm2276 = vcmp.eq.s32.totalorder %v2244, 1
        %vm2277 = vcmp.eq.s32.totalorder %v2245, 1
        %vm2278 = vcmp.eq.s32.totalorder %v2246, 1
        %vm2279 = vcmp.eq.s32.totalorder %v2247, 1
        %vm2280 = vcmp.eq.s32.totalorder %v2248, 1
        %v2281 = vsel %vm2249, %v1162, 0.0
        %v2282 = vsel %vm2250, %v1161, 0.0
        %v2283 = vsel %vm2251, %v1160, 0.0
        %v2284 = vsel %vm2252, %v1159, 0.0
        %v2285 = vsel %vm2253, %v1158, 0.0
        %v2286 = vsel %vm2254, %v1157, 0.0
        %v2287 = vsel %vm2255, %v1156, 0.0
        %v2288 = vsel %vm2256, %v1155, 0.0
        %v2289 = vsel %vm2257, %v1154, 0.0
        %v2290 = vsel %vm2258, %v1153, 0.0
        %v2291 = vsel %vm2259, %v1152, 0.0
        %v2292 = vsel %vm2260, %v1151, 0.0
        %v2293 = vsel %vm2261, %v1150, 0.0
        %v2294 = vsel %vm2262, %v1149, 0.0
        %v2295 = vsel %vm2263, %v1148, 0.0
        %v2296 = vsel %vm2264, %v1147, 0.0
        %v2297 = vsel %vm2265, %v1146, 0.0
        %v2298 = vsel %vm2266, %v1145, 0.0
        %v2299 = vsel %vm2267, %v1144, 0.0
        %v2300 = vsel %vm2268, %v1143, 0.0
        %v2301 = vsel %vm2269, %v1142, 0.0
        %v2302 = vsel %vm2270, %v1141, 0.0
        %v2303 = vsel %vm2271, %v1140, 0.0
        %v2304 = vsel %vm2272, %v1139, 0.0
        %v2305 = vsel %vm2273, %v1138, 0.0
        %v2306 = vsel %vm2274, %v1137, 0.0
        %v2307 = vsel %vm2275, %v1136, 0.0
        %v2308 = vsel %vm2276, %v1135, 0.0
        %v2309 = vsel %vm2277, %v1134, 0.0
        %v2310 = vsel %vm2278, %v1133, 0.0
        %v2311 = vsel %vm2279, %v1132, 0.0
        %v2312 = vsel %vm2280, %v1131, 0.0
        %v2313 = vpack.c.bf16 %v2282, %v2281
        %v2314 = vpack.c.bf16 %v2284, %v2283
        %v2315 = vpack.c.bf16 %v2286, %v2285
        %v2316 = vpack.c.bf16 %v2288, %v2287
        %v2317 = vpack.c.bf16 %v2290, %v2289
        %v2318 = vpack.c.bf16 %v2292, %v2291
        %v2319 = vpack.c.bf16 %v2294, %v2293
        %v2320 = vpack.c.bf16 %v2296, %v2295
        %v2321 = vpack.c.bf16 %v2298, %v2297
        %v2322 = vpack.c.bf16 %v2300, %v2299
        %v2323 = vpack.c.bf16 %v2302, %v2301
        %v2324 = vpack.c.bf16 %v2304, %v2303
        %v2325 = vpack.c.bf16 %v2306, %v2305
        %v2326 = vpack.c.bf16 %v2308, %v2307
        %v2327 = vpack.c.bf16 %v2310, %v2309
        %v2328 = vpack.c.bf16 %v2312, %v2311
        %s2329 = scalar_lea.vmem [#allocation8], 192
        %v2330 = vld [vmem:[%s2329] sm:$0xf]
        %v2331 = vld [vmem:[%s2329 + $0x4] sm:$0xf]
        %v2332 = vld [vmem:[%s2329 + $0x8] sm:$0xf]
        %v2333 = vld [vmem:[%s2329 + $0xc] sm:$0xf]
        %v2334 = vld [vmem:[%s2329 + $0x10] sm:$0xf]
        %v2335 = vld [vmem:[%s2329 + $0x14] sm:$0xf]
        %v2336 = vld [vmem:[%s2329 + $0x18] sm:$0xf]
        %v2337 = vld [vmem:[%s2329 + $0x1c] sm:$0xf]
        %v2338 = vld [vmem:[%s2329 + $0x20] sm:$0xf]
        %v2339 = vld [vmem:[%s2329 + $0x24] sm:$0xf]
        %v2340 = vld [vmem:[%s2329 + $0x28] sm:$0xf]
        %v2341 = vld [vmem:[%s2329 + $0x2c] sm:$0xf]
        %v2342 = vld [vmem:[%s2329 + $0x30] sm:$0xf]
        %v2343 = vld [vmem:[%s2329 + $0x34] sm:$0xf]
        %v2344 = vld [vmem:[%s2329 + $0x38] sm:$0xf]
        %v2345 = vld [vmem:[%s2329 + $0x3c] sm:$0xf]
        %v2362 = vunpack.c.l.b16 %v2330
        %v2363 = vunpack.c.l.b16 %v2331
        %v2364 = vunpack.c.l.b16 %v2332
        %v2365 = vunpack.c.l.b16 %v2333
        %v2366 = vunpack.c.l.b16 %v2334
        %v2367 = vunpack.c.l.b16 %v2335
        %v2368 = vunpack.c.l.b16 %v2336
        %v2369 = vunpack.c.l.b16 %v2337
        %v2370 = vunpack.c.l.b16 %v2338
        %v2371 = vunpack.c.l.b16 %v2339
        %v2372 = vunpack.c.l.b16 %v2340
        %v2373 = vunpack.c.l.b16 %v2341
        %v2374 = vunpack.c.l.b16 %v2342
        %v2375 = vunpack.c.l.b16 %v2343
        %v2376 = vunpack.c.l.b16 %v2344
        %v2377 = vunpack.c.l.b16 %v2345
        %v2378 = vpack.c.b16 %v2363, %v2362
        %v2379 = vpack.c.b16 %v2365, %v2364
        %v2380 = vpack.c.b16 %v2367, %v2366
        %v2381 = vpack.c.b16 %v2369, %v2368
        %v2382 = vpack.c.b16 %v2371, %v2370
        %v2383 = vpack.c.b16 %v2373, %v2372
        %v2384 = vpack.c.b16 %v2375, %v2374
        %v2385 = vpack.c.b16 %v2377, %v2376
        %2394 = vmatpush.bf16.msra.mxu0 %v2385
        %2395 = vmatpush.bf16.msra.mxu0 %v2384
        %2396 = vmatpush.bf16.msra.mxu0 %v2383
        %2397 = vmatpush.bf16.msra.mxu0 %v2382
        %2398 = vmatpush.bf16.msra.mxu0 %v2381
        %2399 = vmatpush.bf16.msra.mxu0 %v2380
        %2400 = vmatpush.bf16.msra.mxu0 %v2379
        %2401 = vmatpush.bf16.msra.mxu0 %v2378
        %2402 = vmatmul.bf16.gmra.mxu0 %v2313
        %v2403 = vpop.f32.mrf.mxu0
        %v2404 = vadd.f32 0.0, %v2403
        %v2405 = vpop.f32.mrf.mxu0
        %v2406 = vadd.f32 0.0, %v2405
        %2407 = vmatmul.bf16.gmra.mxu0 %v2314
        %v2408 = vpop.f32.mrf.mxu0
        %v2409 = vadd.f32 0.0, %v2408
        %v2410 = vpop.f32.mrf.mxu0
        %v2411 = vadd.f32 0.0, %v2410
        %2412 = vmatmul.bf16.gmra.mxu0 %v2315
        %v2413 = vpop.f32.mrf.mxu0
        %v2414 = vadd.f32 0.0, %v2413
        %v2415 = vpop.f32.mrf.mxu0
        %v2416 = vadd.f32 0.0, %v2415
        %2417 = vmatmul.bf16.gmra.mxu0 %v2316
        %v2418 = vpop.f32.mrf.mxu0
        %v2419 = vadd.f32 0.0, %v2418
        %v2420 = vpop.f32.mrf.mxu0
        %v2421 = vadd.f32 0.0, %v2420
        %2422 = vmatmul.bf16.gmra.mxu0 %v2317
        %v2423 = vpop.f32.mrf.mxu0
        %v2424 = vadd.f32 0.0, %v2423
        %v2425 = vpop.f32.mrf.mxu0
        %v2426 = vadd.f32 0.0, %v2425
        %2427 = vmatmul.bf16.gmra.mxu0 %v2318
        %v2428 = vpop.f32.mrf.mxu0
        %v2429 = vadd.f32 0.0, %v2428
        %v2430 = vpop.f32.mrf.mxu0
        %v2431 = vadd.f32 0.0, %v2430
        %2432 = vmatmul.bf16.gmra.mxu0 %v2319
        %v2433 = vpop.f32.mrf.mxu0
        %v2434 = vadd.f32 0.0, %v2433
        %v2435 = vpop.f32.mrf.mxu0
        %v2436 = vadd.f32 0.0, %v2435
        %2437 = vmatmul.bf16.gmra.mxu0 %v2320
        %v2438 = vpop.f32.mrf.mxu0
        %v2439 = vadd.f32 0.0, %v2438
        %v2440 = vpop.f32.mrf.mxu0
        %v2441 = vadd.f32 0.0, %v2440
        %2442 = vmatmul.bf16.gmra.mxu0 %v2321
        %v2443 = vpop.f32.mrf.mxu0
        %v2444 = vadd.f32 0.0, %v2443
        %v2445 = vpop.f32.mrf.mxu0
        %v2446 = vadd.f32 0.0, %v2445
        %2447 = vmatmul.bf16.gmra.mxu0 %v2322
        %v2448 = vpop.f32.mrf.mxu0
        %v2449 = vadd.f32 0.0, %v2448
        %v2450 = vpop.f32.mrf.mxu0
        %v2451 = vadd.f32 0.0, %v2450
        %2452 = vmatmul.bf16.gmra.mxu0 %v2323
        %v2453 = vpop.f32.mrf.mxu0
        %v2454 = vadd.f32 0.0, %v2453
        %v2455 = vpop.f32.mrf.mxu0
        %v2456 = vadd.f32 0.0, %v2455
        %2457 = vmatmul.bf16.gmra.mxu0 %v2324
        %v2458 = vpop.f32.mrf.mxu0
        %v2459 = vadd.f32 0.0, %v2458
        %v2460 = vpop.f32.mrf.mxu0
        %v2461 = vadd.f32 0.0, %v2460
        %2462 = vmatmul.bf16.gmra.mxu0 %v2325
        %v2463 = vpop.f32.mrf.mxu0
        %v2464 = vadd.f32 0.0, %v2463
        %v2465 = vpop.f32.mrf.mxu0
        %v2466 = vadd.f32 0.0, %v2465
        %2467 = vmatmul.bf16.gmra.mxu0 %v2326
        %v2468 = vpop.f32.mrf.mxu0
        %v2469 = vadd.f32 0.0, %v2468
        %v2470 = vpop.f32.mrf.mxu0
        %v2471 = vadd.f32 0.0, %v2470
        %2472 = vmatmul.bf16.gmra.mxu0 %v2327
        %v2473 = vpop.f32.mrf.mxu0
        %v2474 = vadd.f32 0.0, %v2473
        %v2475 = vpop.f32.mrf.mxu0
        %v2476 = vadd.f32 0.0, %v2475
        %2477 = vmatmul.bf16.gmra.mxu0 %v2328
        %v2478 = vpop.f32.mrf.mxu0
        %v2479 = vadd.f32 0.0, %v2478
        %v2480 = vpop.f32.mrf.mxu0
        %v2481 = vadd.f32 0.0, %v2480
        %2482 = vdwg.mxu0
        %v2483 = vadd.f32 %v2185, %v2404
        %v2484 = vadd.f32 %v2186, %v2406
        %v2485 = vadd.f32 %v2187, %v2409
        %v2486 = vadd.f32 %v2188, %v2411
        %v2487 = vadd.f32 %v2189, %v2414
        %v2488 = vadd.f32 %v2190, %v2416
        %v2489 = vadd.f32 %v2191, %v2419
        %v2490 = vadd.f32 %v2192, %v2421
        %v2491 = vadd.f32 %v2193, %v2424
        %v2492 = vadd.f32 %v2194, %v2426
        %v2493 = vadd.f32 %v2195, %v2429
        %v2494 = vadd.f32 %v2196, %v2431
        %v2495 = vadd.f32 %v2197, %v2434
        %v2496 = vadd.f32 %v2198, %v2436
        %v2497 = vadd.f32 %v2199, %v2439
        %v2498 = vadd.f32 %v2200, %v2441
        %v2499 = vadd.f32 %v2201, %v2444
        %v2500 = vadd.f32 %v2202, %v2446
        %v2501 = vadd.f32 %v2203, %v2449
        %v2502 = vadd.f32 %v2204, %v2451
        %v2503 = vadd.f32 %v2205, %v2454
        %v2504 = vadd.f32 %v2206, %v2456
        %v2505 = vadd.f32 %v2207, %v2459
        %v2506 = vadd.f32 %v2208, %v2461
        %v2507 = vadd.f32 %v2209, %v2464
        %v2508 = vadd.f32 %v2210, %v2466
        %v2509 = vadd.f32 %v2211, %v2469
        %v2510 = vadd.f32 %v2212, %v2471
        %v2511 = vadd.f32 %v2213, %v2474
        %v2512 = vadd.f32 %v2214, %v2476
        %v2513 = vadd.f32 %v2215, %v2479
        %v2514 = vadd.f32 %v2216, %v2481
        %v2515 = vpack.c.bf16 %v970, %v969
        %v2516 = vpack.c.bf16 %v972, %v971
        %v2517 = vpack.c.bf16 %v974, %v973
        %v2518 = vpack.c.bf16 %v976, %v975
        %v2519 = vpack.c.bf16 %v978, %v977
        %v2520 = vpack.c.bf16 %v980, %v979
        %v2521 = vpack.c.bf16 %v982, %v981
        %v2522 = vpack.c.bf16 %v984, %v983
        %v2523 = vpack.c.bf16 %v986, %v985
        %v2524 = vpack.c.bf16 %v988, %v987
        %v2525 = vpack.c.bf16 %v990, %v989
        %v2526 = vpack.c.bf16 %v992, %v991
        %v2527 = vpack.c.bf16 %v994, %v993
        %v2528 = vpack.c.bf16 %v996, %v995
        %v2529 = vpack.c.bf16 %v998, %v997
        %v2530 = vpack.c.bf16 %v1000, %v999
        %s2531 = scalar_lea.vmem [#allocation8], 256
        %v2532 = vld [vmem:[%s2531] sm:$0xf]
        %v2533 = vld [vmem:[%s2531 + $0x4] sm:$0xf]
        %v2534 = vld [vmem:[%s2531 + $0x8] sm:$0xf]
        %v2535 = vld [vmem:[%s2531 + $0xc] sm:$0xf]
        %v2536 = vld [vmem:[%s2531 + $0x10] sm:$0xf]
        %v2537 = vld [vmem:[%s2531 + $0x14] sm:$0xf]
        %v2538 = vld [vmem:[%s2531 + $0x18] sm:$0xf]
        %v2539 = vld [vmem:[%s2531 + $0x1c] sm:$0xf]
        %v2540 = vld [vmem:[%s2531 + $0x20] sm:$0xf]
        %v2541 = vld [vmem:[%s2531 + $0x24] sm:$0xf]
        %v2542 = vld [vmem:[%s2531 + $0x28] sm:$0xf]
        %v2543 = vld [vmem:[%s2531 + $0x2c] sm:$0xf]
        %v2544 = vld [vmem:[%s2531 + $0x30] sm:$0xf]
        %v2545 = vld [vmem:[%s2531 + $0x34] sm:$0xf]
        %v2546 = vld [vmem:[%s2531 + $0x38] sm:$0xf]
        %v2547 = vld [vmem:[%s2531 + $0x3c] sm:$0xf]
        %v2564 = vunpack.c.l.b16 %v2532
        %v2565 = vunpack.c.l.b16 %v2533
        %v2566 = vunpack.c.l.b16 %v2534
        %v2567 = vunpack.c.l.b16 %v2535
        %v2568 = vunpack.c.l.b16 %v2536
        %v2569 = vunpack.c.l.b16 %v2537
        %v2570 = vunpack.c.l.b16 %v2538
        %v2571 = vunpack.c.l.b16 %v2539
        %v2572 = vunpack.c.l.b16 %v2540
        %v2573 = vunpack.c.l.b16 %v2541
        %v2574 = vunpack.c.l.b16 %v2542
        %v2575 = vunpack.c.l.b16 %v2543
        %v2576 = vunpack.c.l.b16 %v2544
        %v2577 = vunpack.c.l.b16 %v2545
        %v2578 = vunpack.c.l.b16 %v2546
        %v2579 = vunpack.c.l.b16 %v2547
        %v2580 = vpack.c.b16 %v2565, %v2564
        %v2581 = vpack.c.b16 %v2567, %v2566
        %v2582 = vpack.c.b16 %v2569, %v2568
        %v2583 = vpack.c.b16 %v2571, %v2570
        %v2584 = vpack.c.b16 %v2573, %v2572
        %v2585 = vpack.c.b16 %v2575, %v2574
        %v2586 = vpack.c.b16 %v2577, %v2576
        %v2587 = vpack.c.b16 %v2579, %v2578
        %2596 = vmatpush.bf16.msra.mxu0 %v2587
        %2597 = vmatpush.bf16.msra.mxu0 %v2586
        %2598 = vmatpush.bf16.msra.mxu0 %v2585
        %2599 = vmatpush.bf16.msra.mxu0 %v2584
        %2600 = vmatpush.bf16.msra.mxu0 %v2583
        %2601 = vmatpush.bf16.msra.mxu0 %v2582
        %2602 = vmatpush.bf16.msra.mxu0 %v2581
        %2603 = vmatpush.bf16.msra.mxu0 %v2580
        %2604 = vmatmul.bf16.gmra.mxu0 %v2515
        %v2605 = vpop.f32.mrf.mxu0
        %v2606 = vadd.f32 0.0, %v2605
        %v2607 = vpop.f32.mrf.mxu0
        %v2608 = vadd.f32 0.0, %v2607
        %2609 = vmatmul.bf16.gmra.mxu0 %v2516
        %v2610 = vpop.f32.mrf.mxu0
        %v2611 = vadd.f32 0.0, %v2610
        %v2612 = vpop.f32.mrf.mxu0
        %v2613 = vadd.f32 0.0, %v2612
        %2614 = vmatmul.bf16.gmra.mxu0 %v2517
        %v2615 = vpop.f32.mrf.mxu0
        %v2616 = vadd.f32 0.0, %v2615
        %v2617 = vpop.f32.mrf.mxu0
        %v2618 = vadd.f32 0.0, %v2617
        %2619 = vmatmul.bf16.gmra.mxu0 %v2518
        %v2620 = vpop.f32.mrf.mxu0
        %v2621 = vadd.f32 0.0, %v2620
        %v2622 = vpop.f32.mrf.mxu0
        %v2623 = vadd.f32 0.0, %v2622
        %2624 = vmatmul.bf16.gmra.mxu0 %v2519
        %v2625 = vpop.f32.mrf.mxu0
        %v2626 = vadd.f32 0.0, %v2625
        %v2627 = vpop.f32.mrf.mxu0
        %v2628 = vadd.f32 0.0, %v2627
        %2629 = vmatmul.bf16.gmra.mxu0 %v2520
        %v2630 = vpop.f32.mrf.mxu0
        %v2631 = vadd.f32 0.0, %v2630
        %v2632 = vpop.f32.mrf.mxu0
        %v2633 = vadd.f32 0.0, %v2632
        %2634 = vmatmul.bf16.gmra.mxu0 %v2521
        %v2635 = vpop.f32.mrf.mxu0
        %v2636 = vadd.f32 0.0, %v2635
        %v2637 = vpop.f32.mrf.mxu0
        %v2638 = vadd.f32 0.0, %v2637
        %2639 = vmatmul.bf16.gmra.mxu0 %v2522
        %v2640 = vpop.f32.mrf.mxu0
        %v2641 = vadd.f32 0.0, %v2640
        %v2642 = vpop.f32.mrf.mxu0
        %v2643 = vadd.f32 0.0, %v2642
        %2644 = vmatmul.bf16.gmra.mxu0 %v2523
        %v2645 = vpop.f32.mrf.mxu0
        %v2646 = vadd.f32 0.0, %v2645
        %v2647 = vpop.f32.mrf.mxu0
        %v2648 = vadd.f32 0.0, %v2647
        %2649 = vmatmul.bf16.gmra.mxu0 %v2524
        %v2650 = vpop.f32.mrf.mxu0
        %v2651 = vadd.f32 0.0, %v2650
        %v2652 = vpop.f32.mrf.mxu0
        %v2653 = vadd.f32 0.0, %v2652
        %2654 = vmatmul.bf16.gmra.mxu0 %v2525
        %v2655 = vpop.f32.mrf.mxu0
        %v2656 = vadd.f32 0.0, %v2655
        %v2657 = vpop.f32.mrf.mxu0
        %v2658 = vadd.f32 0.0, %v2657
        %2659 = vmatmul.bf16.gmra.mxu0 %v2526
        %v2660 = vpop.f32.mrf.mxu0
        %v2661 = vadd.f32 0.0, %v2660
        %v2662 = vpop.f32.mrf.mxu0
        %v2663 = vadd.f32 0.0, %v2662
        %2664 = vmatmul.bf16.gmra.mxu0 %v2527
        %v2665 = vpop.f32.mrf.mxu0
        %v2666 = vadd.f32 0.0, %v2665
        %v2667 = vpop.f32.mrf.mxu0
        %v2668 = vadd.f32 0.0, %v2667
        %2669 = vmatmul.bf16.gmra.mxu0 %v2528
        %v2670 = vpop.f32.mrf.mxu0
        %v2671 = vadd.f32 0.0, %v2670
        %v2672 = vpop.f32.mrf.mxu0
        %v2673 = vadd.f32 0.0, %v2672
        %2674 = vmatmul.bf16.gmra.mxu0 %v2529
        %v2675 = vpop.f32.mrf.mxu0
        %v2676 = vadd.f32 0.0, %v2675
        %v2677 = vpop.f32.mrf.mxu0
        %v2678 = vadd.f32 0.0, %v2677
        %2679 = vmatmul.bf16.gmra.mxu0 %v2530
        %v2680 = vpop.f32.mrf.mxu0
        %v2681 = vadd.f32 0.0, %v2680
        %v2682 = vpop.f32.mrf.mxu0
        %v2683 = vadd.f32 0.0, %v2682
        %2684 = vdwg.mxu0
        %v2685 = vadd.f32 %v2483, %v2606
        %v2686 = vadd.f32 %v2484, %v2608
        %v2687 = vadd.f32 %v2485, %v2611
        %v2688 = vadd.f32 %v2486, %v2613
        %v2689 = vadd.f32 %v2487, %v2616
        %v2690 = vadd.f32 %v2488, %v2618
        %v2691 = vadd.f32 %v2489, %v2621
        %v2692 = vadd.f32 %v2490, %v2623
        %v2693 = vadd.f32 %v2491, %v2626
        %v2694 = vadd.f32 %v2492, %v2628
        %v2695 = vadd.f32 %v2493, %v2631
        %v2696 = vadd.f32 %v2494, %v2633
        %v2697 = vadd.f32 %v2495, %v2636
        %v2698 = vadd.f32 %v2496, %v2638
        %v2699 = vadd.f32 %v2497, %v2641
        %v2700 = vadd.f32 %v2498, %v2643
        %v2701 = vadd.f32 %v2499, %v2646
        %v2702 = vadd.f32 %v2500, %v2648
        %v2703 = vadd.f32 %v2501, %v2651
        %v2704 = vadd.f32 %v2502, %v2653
        %v2705 = vadd.f32 %v2503, %v2656
        %v2706 = vadd.f32 %v2504, %v2658
        %v2707 = vadd.f32 %v2505, %v2661
        %v2708 = vadd.f32 %v2506, %v2663
        %v2709 = vadd.f32 %v2507, %v2666
        %v2710 = vadd.f32 %v2508, %v2668
        %v2711 = vadd.f32 %v2509, %v2671
        %v2712 = vadd.f32 %v2510, %v2673
        %v2713 = vadd.f32 %v2511, %v2676
        %v2714 = vadd.f32 %v2512, %v2678
        %v2715 = vadd.f32 %v2513, %v2681
        %v2716 = vadd.f32 %v2514, %v2683
        %v2717 = vsel %vm1855, 1, 0
        %v2718 = vsel %vm1856, 1, 0
        %v2719 = vsel %vm1857, 1, 0
        %v2720 = vsel %vm1858, 1, 0
        %v2721 = vsel %vm1859, 1, 0
        %v2722 = vsel %vm1860, 1, 0
        %v2723 = vsel %vm1861, 1, 0
        %v2724 = vsel %vm1862, 1, 0
        %v2725 = vsel %vm1863, 1, 0
        %v2726 = vsel %vm1864, 1, 0
        %v2727 = vsel %vm1865, 1, 0
        %v2728 = vsel %vm1866, 1, 0
        %v2729 = vsel %vm1867, 1, 0
        %v2730 = vsel %vm1868, 1, 0
        %v2731 = vsel %vm1869, 1, 0
        %v2732 = vsel %vm1870, 1, 0
        %v2733 = vsel %vm1871, 1, 0
        %v2734 = vsel %vm1872, 1, 0
        %v2735 = vsel %vm1873, 1, 0
        %v2736 = vsel %vm1874, 1, 0
        %v2737 = vsel %vm1875, 1, 0
        %v2738 = vsel %vm1876, 1, 0
        %v2739 = vsel %vm1877, 1, 0
        %v2740 = vsel %vm1878, 1, 0
        %v2741 = vsel %vm1879, 1, 0
        %v2742 = vsel %vm1880, 1, 0
        %v2743 = vsel %vm1881, 1, 0
        %v2744 = vsel %vm1882, 1, 0
        %v2745 = vsel %vm1883, 1, 0
        %v2746 = vsel %vm1884, 1, 0
        %v2747 = vsel %vm1885, 1, 0
        %v2748 = vsel %vm1886, 1, 0
        %vm2749 = vcmp.eq.s32.totalorder %v2717, 1
        %vm2750 = vcmp.eq.s32.totalorder %v2718, 1
        %vm2751 = vcmp.eq.s32.totalorder %v2719, 1
        %vm2752 = vcmp.eq.s32.totalorder %v2720, 1
        %vm2753 = vcmp.eq.s32.totalorder %v2721, 1
        %vm2754 = vcmp.eq.s32.totalorder %v2722, 1
        %vm2755 = vcmp.eq.s32.totalorder %v2723, 1
        %vm2756 = vcmp.eq.s32.totalorder %v2724, 1
        %vm2757 = vcmp.eq.s32.totalorder %v2725, 1
        %vm2758 = vcmp.eq.s32.totalorder %v2726, 1
        %vm2759 = vcmp.eq.s32.totalorder %v2727, 1
        %vm2760 = vcmp.eq.s32.totalorder %v2728, 1
        %vm2761 = vcmp.eq.s32.totalorder %v2729, 1
        %vm2762 = vcmp.eq.s32.totalorder %v2730, 1
        %vm2763 = vcmp.eq.s32.totalorder %v2731, 1
        %vm2764 = vcmp.eq.s32.totalorder %v2732, 1
        %vm2765 = vcmp.eq.s32.totalorder %v2733, 1
        %vm2766 = vcmp.eq.s32.totalorder %v2734, 1
        %vm2767 = vcmp.eq.s32.totalorder %v2735, 1
        %vm2768 = vcmp.eq.s32.totalorder %v2736, 1
        %vm2769 = vcmp.eq.s32.totalorder %v2737, 1
        %vm2770 = vcmp.eq.s32.totalorder %v2738, 1
        %vm2771 = vcmp.eq.s32.totalorder %v2739, 1
        %vm2772 = vcmp.eq.s32.totalorder %v2740, 1
        %vm2773 = vcmp.eq.s32.totalorder %v2741, 1
        %vm2774 = vcmp.eq.s32.totalorder %v2742, 1
        %vm2775 = vcmp.eq.s32.totalorder %v2743, 1
        %vm2776 = vcmp.eq.s32.totalorder %v2744, 1
        %vm2777 = vcmp.eq.s32.totalorder %v2745, 1
        %vm2778 = vcmp.eq.s32.totalorder %v2746, 1
        %vm2779 = vcmp.eq.s32.totalorder %v2747, 1
        %vm2780 = vcmp.eq.s32.totalorder %v2748, 1
        %v2781 = vsel %vm2749, %v1853, 0.0
        %v2782 = vsel %vm2750, %v1852, 0.0
        %v2783 = vsel %vm2751, %v1851, 0.0
        %v2784 = vsel %vm2752, %v1850, 0.0
        %v2785 = vsel %vm2753, %v1849, 0.0
        %v2786 = vsel %vm2754, %v1848, 0.0
        %v2787 = vsel %vm2755, %v1847, 0.0
        %v2788 = vsel %vm2756, %v1846, 0.0
        %v2789 = vsel %vm2757, %v1845, 0.0
        %v2790 = vsel %vm2758, %v1844, 0.0
        %v2791 = vsel %vm2759, %v1843, 0.0
        %v2792 = vsel %vm2760, %v1842, 0.0
        %v2793 = vsel %vm2761, %v1841, 0.0
        %v2794 = vsel %vm2762, %v1840, 0.0
        %v2795 = vsel %vm2763, %v1839, 0.0
        %v2796 = vsel %vm2764, %v1838, 0.0
        %v2797 = vsel %vm2765, %v1837, 0.0
        %v2798 = vsel %vm2766, %v1836, 0.0
        %v2799 = vsel %vm2767, %v1835, 0.0
        %v2800 = vsel %vm2768, %v1834, 0.0
        %v2801 = vsel %vm2769, %v1833, 0.0
        %v2802 = vsel %vm2770, %v1832, 0.0
        %v2803 = vsel %vm2771, %v1831, 0.0
        %v2804 = vsel %vm2772, %v1830, 0.0
        %v2805 = vsel %vm2773, %v1829, 0.0
        %v2806 = vsel %vm2774, %v1828, 0.0
        %v2807 = vsel %vm2775, %v1827, 0.0
        %v2808 = vsel %vm2776, %v1826, 0.0
        %v2809 = vsel %vm2777, %v1825, 0.0
        %v2810 = vsel %vm2778, %v1824, 0.0
        %v2811 = vsel %vm2779, %v1823, 0.0
        %v2812 = vsel %vm2780, %v1854, 0.0
        %v2813 = vpack.c.bf16 %v2782, %v2781
        %v2814 = vpack.c.bf16 %v2784, %v2783
        %v2815 = vpack.c.bf16 %v2786, %v2785
        %v2816 = vpack.c.bf16 %v2788, %v2787
        %v2817 = vpack.c.bf16 %v2790, %v2789
        %v2818 = vpack.c.bf16 %v2792, %v2791
        %v2819 = vpack.c.bf16 %v2794, %v2793
        %v2820 = vpack.c.bf16 %v2796, %v2795
        %v2821 = vpack.c.bf16 %v2798, %v2797
        %v2822 = vpack.c.bf16 %v2800, %v2799
        %v2823 = vpack.c.bf16 %v2802, %v2801
        %v2824 = vpack.c.bf16 %v2804, %v2803
        %v2825 = vpack.c.bf16 %v2806, %v2805
        %v2826 = vpack.c.bf16 %v2808, %v2807
        %v2827 = vpack.c.bf16 %v2810, %v2809
        %v2828 = vpack.c.bf16 %v2812, %v2811
        %s2829 = scalar_lea.vmem [#allocation8], 320
        %v2830 = vld [vmem:[%s2829] sm:$0xf]
        %v2831 = vld [vmem:[%s2829 + $0x4] sm:$0xf]
        %v2832 = vld [vmem:[%s2829 + $0x8] sm:$0xf]
        %v2833 = vld [vmem:[%s2829 + $0xc] sm:$0xf]
        %v2834 = vld [vmem:[%s2829 + $0x10] sm:$0xf]
        %v2835 = vld [vmem:[%s2829 + $0x14] sm:$0xf]
        %v2836 = vld [vmem:[%s2829 + $0x18] sm:$0xf]
        %v2837 = vld [vmem:[%s2829 + $0x1c] sm:$0xf]
        %v2838 = vld [vmem:[%s2829 + $0x20] sm:$0xf]
        %v2839 = vld [vmem:[%s2829 + $0x24] sm:$0xf]
        %v2840 = vld [vmem:[%s2829 + $0x28] sm:$0xf]
        %v2841 = vld [vmem:[%s2829 + $0x2c] sm:$0xf]
        %v2842 = vld [vmem:[%s2829 + $0x30] sm:$0xf]
        %v2843 = vld [vmem:[%s2829 + $0x34] sm:$0xf]
        %v2844 = vld [vmem:[%s2829 + $0x38] sm:$0xf]
        %v2845 = vld [vmem:[%s2829 + $0x3c] sm:$0xf]
        %v2862 = vunpack.c.l.b16 %v2830
        %v2863 = vunpack.c.l.b16 %v2831
        %v2864 = vunpack.c.l.b16 %v2832
        %v2865 = vunpack.c.l.b16 %v2833
        %v2866 = vunpack.c.l.b16 %v2834
        %v2867 = vunpack.c.l.b16 %v2835
        %v2868 = vunpack.c.l.b16 %v2836
        %v2869 = vunpack.c.l.b16 %v2837
        %v2870 = vunpack.c.l.b16 %v2838
        %v2871 = vunpack.c.l.b16 %v2839
        %v2872 = vunpack.c.l.b16 %v2840
        %v2873 = vunpack.c.l.b16 %v2841
        %v2874 = vunpack.c.l.b16 %v2842
        %v2875 = vunpack.c.l.b16 %v2843
        %v2876 = vunpack.c.l.b16 %v2844
        %v2877 = vunpack.c.l.b16 %v2845
        %v2878 = vpack.c.b16 %v2863, %v2862
        %v2879 = vpack.c.b16 %v2865, %v2864
        %v2880 = vpack.c.b16 %v2867, %v2866
        %v2881 = vpack.c.b16 %v2869, %v2868
        %v2882 = vpack.c.b16 %v2871, %v2870
        %v2883 = vpack.c.b16 %v2873, %v2872
        %v2884 = vpack.c.b16 %v2875, %v2874
        %v2885 = vpack.c.b16 %v2877, %v2876
        %2894 = vmatpush.bf16.msra.mxu0 %v2885
        %2895 = vmatpush.bf16.msra.mxu0 %v2884
        %2896 = vmatpush.bf16.msra.mxu0 %v2883
        %2897 = vmatpush.bf16.msra.mxu0 %v2882
        %2898 = vmatpush.bf16.msra.mxu0 %v2881
        %2899 = vmatpush.bf16.msra.mxu0 %v2880
        %2900 = vmatpush.bf16.msra.mxu0 %v2879
        %2901 = vmatpush.bf16.msra.mxu0 %v2878
        %2902 = vmatmul.bf16.gmra.mxu0 %v2813
        %v2903 = vpop.f32.mrf.mxu0
        %v2904 = vadd.f32 0.0, %v2903
        %v2905 = vpop.f32.mrf.mxu0
        %v2906 = vadd.f32 0.0, %v2905
        %2907 = vmatmul.bf16.gmra.mxu0 %v2814
        %v2908 = vpop.f32.mrf.mxu0
        %v2909 = vadd.f32 0.0, %v2908
        %v2910 = vpop.f32.mrf.mxu0
        %v2911 = vadd.f32 0.0, %v2910
        %2912 = vmatmul.bf16.gmra.mxu0 %v2815
        %v2913 = vpop.f32.mrf.mxu0
        %v2914 = vadd.f32 0.0, %v2913
        %v2915 = vpop.f32.mrf.mxu0
        %v2916 = vadd.f32 0.0, %v2915
        %2917 = vmatmul.bf16.gmra.mxu0 %v2816
        %v2918 = vpop.f32.mrf.mxu0
        %v2919 = vadd.f32 0.0, %v2918
        %v2920 = vpop.f32.mrf.mxu0
        %v2921 = vadd.f32 0.0, %v2920
        %2922 = vmatmul.bf16.gmra.mxu0 %v2817
        %v2923 = vpop.f32.mrf.mxu0
        %v2924 = vadd.f32 0.0, %v2923
        %v2925 = vpop.f32.mrf.mxu0
        %v2926 = vadd.f32 0.0, %v2925
        %2927 = vmatmul.bf16.gmra.mxu0 %v2818
        %v2928 = vpop.f32.mrf.mxu0
        %v2929 = vadd.f32 0.0, %v2928
        %v2930 = vpop.f32.mrf.mxu0
        %v2931 = vadd.f32 0.0, %v2930
        %2932 = vmatmul.bf16.gmra.mxu0 %v2819
        %v2933 = vpop.f32.mrf.mxu0
        %v2934 = vadd.f32 0.0, %v2933
        %v2935 = vpop.f32.mrf.mxu0
        %v2936 = vadd.f32 0.0, %v2935
        %2937 = vmatmul.bf16.gmra.mxu0 %v2820
        %v2938 = vpop.f32.mrf.mxu0
        %v2939 = vadd.f32 0.0, %v2938
        %v2940 = vpop.f32.mrf.mxu0
        %v2941 = vadd.f32 0.0, %v2940
        %2942 = vmatmul.bf16.gmra.mxu0 %v2821
        %v2943 = vpop.f32.mrf.mxu0
        %v2944 = vadd.f32 0.0, %v2943
        %v2945 = vpop.f32.mrf.mxu0
        %v2946 = vadd.f32 0.0, %v2945
        %2947 = vmatmul.bf16.gmra.mxu0 %v2822
        %v2948 = vpop.f32.mrf.mxu0
        %v2949 = vadd.f32 0.0, %v2948
        %v2950 = vpop.f32.mrf.mxu0
        %v2951 = vadd.f32 0.0, %v2950
        %2952 = vmatmul.bf16.gmra.mxu0 %v2823
        %v2953 = vpop.f32.mrf.mxu0
        %v2954 = vadd.f32 0.0, %v2953
        %v2955 = vpop.f32.mrf.mxu0
        %v2956 = vadd.f32 0.0, %v2955
        %2957 = vmatmul.bf16.gmra.mxu0 %v2824
        %v2958 = vpop.f32.mrf.mxu0
        %v2959 = vadd.f32 0.0, %v2958
        %v2960 = vpop.f32.mrf.mxu0
        %v2961 = vadd.f32 0.0, %v2960
        %2962 = vmatmul.bf16.gmra.mxu0 %v2825
        %v2963 = vpop.f32.mrf.mxu0
        %v2964 = vadd.f32 0.0, %v2963
        %v2965 = vpop.f32.mrf.mxu0
        %v2966 = vadd.f32 0.0, %v2965
        %2967 = vmatmul.bf16.gmra.mxu0 %v2826
        %v2968 = vpop.f32.mrf.mxu0
        %v2969 = vadd.f32 0.0, %v2968
        %v2970 = vpop.f32.mrf.mxu0
        %v2971 = vadd.f32 0.0, %v2970
        %2972 = vmatmul.bf16.gmra.mxu0 %v2827
        %v2973 = vpop.f32.mrf.mxu0
        %v2974 = vadd.f32 0.0, %v2973
        %v2975 = vpop.f32.mrf.mxu0
        %v2976 = vadd.f32 0.0, %v2975
        %2977 = vmatmul.bf16.gmra.mxu0 %v2828
        %v2978 = vpop.f32.mrf.mxu0
        %v2979 = vadd.f32 0.0, %v2978
        %v2980 = vpop.f32.mrf.mxu0
        %v2981 = vadd.f32 0.0, %v2980
        %2982 = vdwg.mxu0
        %v2983 = vadd.f32 %v2685, %v2904
        %v2984 = vadd.f32 %v2686, %v2906
        %v2985 = vadd.f32 %v2687, %v2909
        %v2986 = vadd.f32 %v2688, %v2911
        %v2987 = vadd.f32 %v2689, %v2914
        %v2988 = vadd.f32 %v2690, %v2916
        %v2989 = vadd.f32 %v2691, %v2919
        %v2990 = vadd.f32 %v2692, %v2921
        %v2991 = vadd.f32 %v2693, %v2924
        %v2992 = vadd.f32 %v2694, %v2926
        %v2993 = vadd.f32 %v2695, %v2929
        %v2994 = vadd.f32 %v2696, %v2931
        %v2995 = vadd.f32 %v2697, %v2934
        %v2996 = vadd.f32 %v2698, %v2936
        %v2997 = vadd.f32 %v2699, %v2939
        %v2998 = vadd.f32 %v2700, %v2941
        %v2999 = vadd.f32 %v2701, %v2944
        %v3000 = vadd.f32 %v2702, %v2946
        %v3001 = vadd.f32 %v2703, %v2949
        %v3002 = vadd.f32 %v2704, %v2951
        %v3003 = vadd.f32 %v2705, %v2954
        %v3004 = vadd.f32 %v2706, %v2956
        %v3005 = vadd.f32 %v2707, %v2959
        %v3006 = vadd.f32 %v2708, %v2961
        %v3007 = vadd.f32 %v2709, %v2964
        %v3008 = vadd.f32 %v2710, %v2966
        %v3009 = vadd.f32 %v2711, %v2969
        %v3010 = vadd.f32 %v2712, %v2971
        %v3011 = vadd.f32 %v2713, %v2974
        %v3012 = vadd.f32 %v2714, %v2976
        %v3013 = vadd.f32 %v2715, %v2979
        %v3014 = vadd.f32 %v2716, %v2981
        %vm3015 = vcmp.le.s32.totalorder %v1034, 14
        %vm3016 = vcmp.le.s32.totalorder %v1035, 14
        %vm3017 = vcmp.le.s32.totalorder %v1036, 14
        %vm3018 = vcmp.le.s32.totalorder %v1037, 14
        %vm3019 = vcmp.le.s32.totalorder %v1038, 14
        %vm3020 = vcmp.le.s32.totalorder %v1039, 14
        %vm3021 = vcmp.le.s32.totalorder %v1040, 14
        %vm3022 = vcmp.le.s32.totalorder %v1041, 14
        %vm3023 = vcmp.le.s32.totalorder %v1042, 14
        %vm3024 = vcmp.le.s32.totalorder %v1043, 14
        %vm3025 = vcmp.le.s32.totalorder %v1044, 14
        %vm3026 = vcmp.le.s32.totalorder %v1045, 14
        %vm3027 = vcmp.le.s32.totalorder %v1046, 14
        %vm3028 = vcmp.le.s32.totalorder %v1047, 14
        %vm3029 = vcmp.le.s32.totalorder %v1048, 14
        %vm3030 = vcmp.le.s32.totalorder %v1049, 14
        %vm3031 = vcmp.le.s32.totalorder %v1050, 14
        %vm3032 = vcmp.le.s32.totalorder %v1051, 14
        %vm3033 = vcmp.le.s32.totalorder %v1052, 14
        %vm3034 = vcmp.le.s32.totalorder %v1053, 14
        %vm3035 = vcmp.le.s32.totalorder %v1054, 14
        %vm3036 = vcmp.le.s32.totalorder %v1055, 14
        %vm3037 = vcmp.le.s32.totalorder %v1056, 14
        %vm3038 = vcmp.le.s32.totalorder %v1057, 14
        %vm3039 = vcmp.le.s32.totalorder %v1058, 14
        %vm3040 = vcmp.le.s32.totalorder %v1059, 14
        %vm3041 = vcmp.le.s32.totalorder %v1060, 14
        %vm3042 = vcmp.le.s32.totalorder %v1061, 14
        %vm3043 = vcmp.le.s32.totalorder %v1062, 14
        %vm3044 = vcmp.le.s32.totalorder %v1063, 14
        %vm3045 = vcmp.le.s32.totalorder %v1064, 14
        %vm3046 = vcmp.le.s32.totalorder %v1065, 14
        %vm3047 = vmand %vm3015, %vm1195
        %vm3048 = vmand %vm3016, %vm1196
        %vm3049 = vmand %vm3017, %vm1197
        %vm3050 = vmand %vm3018, %vm1198
        %vm3051 = vmand %vm3019, %vm1199
        %vm3052 = vmand %vm3020, %vm1200
        %vm3053 = vmand %vm3021, %vm1201
        %vm3054 = vmand %vm3022, %vm1202
        %vm3055 = vmand %vm3023, %vm1203
        %vm3056 = vmand %vm3024, %vm1204
        %vm3057 = vmand %vm3025, %vm1205
        %vm3058 = vmand %vm3026, %vm1206
        %vm3059 = vmand %vm3027, %vm1207
        %vm3060 = vmand %vm3028, %vm1208
        %vm3061 = vmand %vm3029, %vm1209
        %vm3062 = vmand %vm3030, %vm1210
        %vm3063 = vmand %vm3031, %vm1211
        %vm3064 = vmand %vm3032, %vm1212
        %vm3065 = vmand %vm3033, %vm1213
        %vm3066 = vmand %vm3034, %vm1214
        %vm3067 = vmand %vm3035, %vm1215
        %vm3068 = vmand %vm3036, %vm1216
        %vm3069 = vmand %vm3037, %vm1217
        %vm3070 = vmand %vm3038, %vm1218
        %vm3071 = vmand %vm3039, %vm1219
        %vm3072 = vmand %vm3040, %vm1220
        %vm3073 = vmand %vm3041, %vm1221
        %vm3074 = vmand %vm3042, %vm1222
        %vm3075 = vmand %vm3043, %vm1223
        %vm3076 = vmand %vm3044, %vm1224
        %vm3077 = vmand %vm3045, %vm1225
        %vm3078 = vmand %vm3046, %vm1226
        %v3079 = vsel %vm3047, 1, 0
        %v3080 = vsel %vm3048, 1, 0
        %v3081 = vsel %vm3049, 1, 0
        %v3082 = vsel %vm3050, 1, 0
        %v3083 = vsel %vm3051, 1, 0
        %v3084 = vsel %vm3052, 1, 0
        %v3085 = vsel %vm3053, 1, 0
        %v3086 = vsel %vm3054, 1, 0
        %v3087 = vsel %vm3055, 1, 0
        %v3088 = vsel %vm3056, 1, 0
        %v3089 = vsel %vm3057, 1, 0
        %v3090 = vsel %vm3058, 1, 0
        %v3091 = vsel %vm3059, 1, 0
        %v3092 = vsel %vm3060, 1, 0
        %v3093 = vsel %vm3061, 1, 0
        %v3094 = vsel %vm3062, 1, 0
        %v3095 = vsel %vm3063, 1, 0
        %v3096 = vsel %vm3064, 1, 0
        %v3097 = vsel %vm3065, 1, 0
        %v3098 = vsel %vm3066, 1, 0
        %v3099 = vsel %vm3067, 1, 0
        %v3100 = vsel %vm3068, 1, 0
        %v3101 = vsel %vm3069, 1, 0
        %v3102 = vsel %vm3070, 1, 0
        %v3103 = vsel %vm3071, 1, 0
        %v3104 = vsel %vm3072, 1, 0
        %v3105 = vsel %vm3073, 1, 0
        %v3106 = vsel %vm3074, 1, 0
        %v3107 = vsel %vm3075, 1, 0
        %v3108 = vsel %vm3076, 1, 0
        %v3109 = vsel %vm3077, 1, 0
        %v3110 = vsel %vm3078, 1, 0
        %vm3111 = vcmp.eq.s32.totalorder %v3079, 1
        %vm3112 = vcmp.eq.s32.totalorder %v3080, 1
        %vm3113 = vcmp.eq.s32.totalorder %v3081, 1
        %vm3114 = vcmp.eq.s32.totalorder %v3082, 1
        %vm3115 = vcmp.eq.s32.totalorder %v3083, 1
        %vm3116 = vcmp.eq.s32.totalorder %v3084, 1
        %vm3117 = vcmp.eq.s32.totalorder %v3085, 1
        %vm3118 = vcmp.eq.s32.totalorder %v3086, 1
        %vm3119 = vcmp.eq.s32.totalorder %v3087, 1
        %vm3120 = vcmp.eq.s32.totalorder %v3088, 1
        %vm3121 = vcmp.eq.s32.totalorder %v3089, 1
        %vm3122 = vcmp.eq.s32.totalorder %v3090, 1
        %vm3123 = vcmp.eq.s32.totalorder %v3091, 1
        %vm3124 = vcmp.eq.s32.totalorder %v3092, 1
        %vm3125 = vcmp.eq.s32.totalorder %v3093, 1
        %vm3126 = vcmp.eq.s32.totalorder %v3094, 1
        %vm3127 = vcmp.eq.s32.totalorder %v3095, 1
        %vm3128 = vcmp.eq.s32.totalorder %v3096, 1
        %vm3129 = vcmp.eq.s32.totalorder %v3097, 1
        %vm3130 = vcmp.eq.s32.totalorder %v3098, 1
        %vm3131 = vcmp.eq.s32.totalorder %v3099, 1
        %vm3132 = vcmp.eq.s32.totalorder %v3100, 1
        %vm3133 = vcmp.eq.s32.totalorder %v3101, 1
        %vm3134 = vcmp.eq.s32.totalorder %v3102, 1
        %vm3135 = vcmp.eq.s32.totalorder %v3103, 1
        %vm3136 = vcmp.eq.s32.totalorder %v3104, 1
        %vm3137 = vcmp.eq.s32.totalorder %v3105, 1
        %vm3138 = vcmp.eq.s32.totalorder %v3106, 1
        %vm3139 = vcmp.eq.s32.totalorder %v3107, 1
        %vm3140 = vcmp.eq.s32.totalorder %v3108, 1
        %vm3141 = vcmp.eq.s32.totalorder %v3109, 1
        %vm3142 = vcmp.eq.s32.totalorder %v3110, 1
        %v3143 = vsel %vm3111, %v1160, 0.0
        %v3144 = vsel %vm3112, %v1159, 0.0
        %v3145 = vsel %vm3113, %v1158, 0.0
        %v3146 = vsel %vm3114, %v1157, 0.0
        %v3147 = vsel %vm3115, %v1156, 0.0
        %v3148 = vsel %vm3116, %v1155, 0.0
        %v3149 = vsel %vm3117, %v1154, 0.0
        %v3150 = vsel %vm3118, %v1153, 0.0
        %v3151 = vsel %vm3119, %v1152, 0.0
        %v3152 = vsel %vm3120, %v1151, 0.0
        %v3153 = vsel %vm3121, %v1150, 0.0
        %v3154 = vsel %vm3122, %v1149, 0.0
        %v3155 = vsel %vm3123, %v1148, 0.0
        %v3156 = vsel %vm3124, %v1147, 0.0
        %v3157 = vsel %vm3125, %v1146, 0.0
        %v3158 = vsel %vm3126, %v1145, 0.0
        %v3159 = vsel %vm3127, %v1144, 0.0
        %v3160 = vsel %vm3128, %v1143, 0.0
        %v3161 = vsel %vm3129, %v1142, 0.0
        %v3162 = vsel %vm3130, %v1141, 0.0
        %v3163 = vsel %vm3131, %v1140, 0.0
        %v3164 = vsel %vm3132, %v1139, 0.0
        %v3165 = vsel %vm3133, %v1138, 0.0
        %v3166 = vsel %vm3134, %v1137, 0.0
        %v3167 = vsel %vm3135, %v1136, 0.0
        %v3168 = vsel %vm3136, %v1135, 0.0
        %v3169 = vsel %vm3137, %v1134, 0.0
        %v3170 = vsel %vm3138, %v1133, 0.0
        %v3171 = vsel %vm3139, %v1132, 0.0
        %v3172 = vsel %vm3140, %v1131, 0.0
        %v3173 = vsel %vm3141, %v1162, 0.0
        %v3174 = vsel %vm3142, %v1161, 0.0
        %v3175 = vpack.c.bf16 %v3144, %v3143
        %v3176 = vpack.c.bf16 %v3146, %v3145
        %v3177 = vpack.c.bf16 %v3148, %v3147
        %v3178 = vpack.c.bf16 %v3150, %v3149
        %v3179 = vpack.c.bf16 %v3152, %v3151
        %v3180 = vpack.c.bf16 %v3154, %v3153
        %v3181 = vpack.c.bf16 %v3156, %v3155
        %v3182 = vpack.c.bf16 %v3158, %v3157
        %v3183 = vpack.c.bf16 %v3160, %v3159
        %v3184 = vpack.c.bf16 %v3162, %v3161
        %v3185 = vpack.c.bf16 %v3164, %v3163
        %v3186 = vpack.c.bf16 %v3166, %v3165
        %v3187 = vpack.c.bf16 %v3168, %v3167
        %v3188 = vpack.c.bf16 %v3170, %v3169
        %v3189 = vpack.c.bf16 %v3172, %v3171
        %v3190 = vpack.c.bf16 %v3174, %v3173
        %s3191 = scalar_lea.vmem [#allocation8], 384
        %v3192 = vld [vmem:[%s3191] sm:$0xf]
        %v3193 = vld [vmem:[%s3191 + $0x4] sm:$0xf]
        %v3194 = vld [vmem:[%s3191 + $0x8] sm:$0xf]
        %v3195 = vld [vmem:[%s3191 + $0xc] sm:$0xf]
        %v3196 = vld [vmem:[%s3191 + $0x10] sm:$0xf]
        %v3197 = vld [vmem:[%s3191 + $0x14] sm:$0xf]
        %v3198 = vld [vmem:[%s3191 + $0x18] sm:$0xf]
        %v3199 = vld [vmem:[%s3191 + $0x1c] sm:$0xf]
        %v3200 = vld [vmem:[%s3191 + $0x20] sm:$0xf]
        %v3201 = vld [vmem:[%s3191 + $0x24] sm:$0xf]
        %v3202 = vld [vmem:[%s3191 + $0x28] sm:$0xf]
        %v3203 = vld [vmem:[%s3191 + $0x2c] sm:$0xf]
        %v3204 = vld [vmem:[%s3191 + $0x30] sm:$0xf]
        %v3205 = vld [vmem:[%s3191 + $0x34] sm:$0xf]
        %v3206 = vld [vmem:[%s3191 + $0x38] sm:$0xf]
        %v3207 = vld [vmem:[%s3191 + $0x3c] sm:$0xf]
        %v3224 = vunpack.c.l.b16 %v3192
        %v3225 = vunpack.c.l.b16 %v3193
        %v3226 = vunpack.c.l.b16 %v3194
        %v3227 = vunpack.c.l.b16 %v3195
        %v3228 = vunpack.c.l.b16 %v3196
        %v3229 = vunpack.c.l.b16 %v3197
        %v3230 = vunpack.c.l.b16 %v3198
        %v3231 = vunpack.c.l.b16 %v3199
        %v3232 = vunpack.c.l.b16 %v3200
        %v3233 = vunpack.c.l.b16 %v3201
        %v3234 = vunpack.c.l.b16 %v3202
        %v3235 = vunpack.c.l.b16 %v3203
        %v3236 = vunpack.c.l.b16 %v3204
        %v3237 = vunpack.c.l.b16 %v3205
        %v3238 = vunpack.c.l.b16 %v3206
        %v3239 = vunpack.c.l.b16 %v3207
        %v3240 = vpack.c.b16 %v3225, %v3224
        %v3241 = vpack.c.b16 %v3227, %v3226
        %v3242 = vpack.c.b16 %v3229, %v3228
        %v3243 = vpack.c.b16 %v3231, %v3230
        %v3244 = vpack.c.b16 %v3233, %v3232
        %v3245 = vpack.c.b16 %v3235, %v3234
        %v3246 = vpack.c.b16 %v3237, %v3236
        %v3247 = vpack.c.b16 %v3239, %v3238
        %3256 = vmatpush.bf16.msra.mxu0 %v3247
        %3257 = vmatpush.bf16.msra.mxu0 %v3246
        %3258 = vmatpush.bf16.msra.mxu0 %v3245
        %3259 = vmatpush.bf16.msra.mxu0 %v3244
        %3260 = vmatpush.bf16.msra.mxu0 %v3243
        %3261 = vmatpush.bf16.msra.mxu0 %v3242
        %3262 = vmatpush.bf16.msra.mxu0 %v3241
        %3263 = vmatpush.bf16.msra.mxu0 %v3240
        %3264 = vmatmul.bf16.gmra.mxu0 %v3175
        %v3265 = vpop.f32.mrf.mxu0
        %v3266 = vadd.f32 0.0, %v3265
        %v3267 = vpop.f32.mrf.mxu0
        %v3268 = vadd.f32 0.0, %v3267
        %3269 = vmatmul.bf16.gmra.mxu0 %v3176
        %v3270 = vpop.f32.mrf.mxu0
        %v3271 = vadd.f32 0.0, %v3270
        %v3272 = vpop.f32.mrf.mxu0
        %v3273 = vadd.f32 0.0, %v3272
        %3274 = vmatmul.bf16.gmra.mxu0 %v3177
        %v3275 = vpop.f32.mrf.mxu0
        %v3276 = vadd.f32 0.0, %v3275
        %v3277 = vpop.f32.mrf.mxu0
        %v3278 = vadd.f32 0.0, %v3277
        %3279 = vmatmul.bf16.gmra.mxu0 %v3178
        %v3280 = vpop.f32.mrf.mxu0
        %v3281 = vadd.f32 0.0, %v3280
        %v3282 = vpop.f32.mrf.mxu0
        %v3283 = vadd.f32 0.0, %v3282
        %3284 = vmatmul.bf16.gmra.mxu0 %v3179
        %v3285 = vpop.f32.mrf.mxu0
        %v3286 = vadd.f32 0.0, %v3285
        %v3287 = vpop.f32.mrf.mxu0
        %v3288 = vadd.f32 0.0, %v3287
        %3289 = vmatmul.bf16.gmra.mxu0 %v3180
        %v3290 = vpop.f32.mrf.mxu0
        %v3291 = vadd.f32 0.0, %v3290
        %v3292 = vpop.f32.mrf.mxu0
        %v3293 = vadd.f32 0.0, %v3292
        %3294 = vmatmul.bf16.gmra.mxu0 %v3181
        %v3295 = vpop.f32.mrf.mxu0
        %v3296 = vadd.f32 0.0, %v3295
        %v3297 = vpop.f32.mrf.mxu0
        %v3298 = vadd.f32 0.0, %v3297
        %3299 = vmatmul.bf16.gmra.mxu0 %v3182
        %v3300 = vpop.f32.mrf.mxu0
        %v3301 = vadd.f32 0.0, %v3300
        %v3302 = vpop.f32.mrf.mxu0
        %v3303 = vadd.f32 0.0, %v3302
        %3304 = vmatmul.bf16.gmra.mxu0 %v3183
        %v3305 = vpop.f32.mrf.mxu0
        %v3306 = vadd.f32 0.0, %v3305
        %v3307 = vpop.f32.mrf.mxu0
        %v3308 = vadd.f32 0.0, %v3307
        %3309 = vmatmul.bf16.gmra.mxu0 %v3184
        %v3310 = vpop.f32.mrf.mxu0
        %v3311 = vadd.f32 0.0, %v3310
        %v3312 = vpop.f32.mrf.mxu0
        %v3313 = vadd.f32 0.0, %v3312
        %3314 = vmatmul.bf16.gmra.mxu0 %v3185
        %v3315 = vpop.f32.mrf.mxu0
        %v3316 = vadd.f32 0.0, %v3315
        %v3317 = vpop.f32.mrf.mxu0
        %v3318 = vadd.f32 0.0, %v3317
        %3319 = vmatmul.bf16.gmra.mxu0 %v3186
        %v3320 = vpop.f32.mrf.mxu0
        %v3321 = vadd.f32 0.0, %v3320
        %v3322 = vpop.f32.mrf.mxu0
        %v3323 = vadd.f32 0.0, %v3322
        %3324 = vmatmul.bf16.gmra.mxu0 %v3187
        %v3325 = vpop.f32.mrf.mxu0
        %v3326 = vadd.f32 0.0, %v3325
        %v3327 = vpop.f32.mrf.mxu0
        %v3328 = vadd.f32 0.0, %v3327
        %3329 = vmatmul.bf16.gmra.mxu0 %v3188
        %v3330 = vpop.f32.mrf.mxu0
        %v3331 = vadd.f32 0.0, %v3330
        %v3332 = vpop.f32.mrf.mxu0
        %v3333 = vadd.f32 0.0, %v3332
        %3334 = vmatmul.bf16.gmra.mxu0 %v3189
        %v3335 = vpop.f32.mrf.mxu0
        %v3336 = vadd.f32 0.0, %v3335
        %v3337 = vpop.f32.mrf.mxu0
        %v3338 = vadd.f32 0.0, %v3337
        %3339 = vmatmul.bf16.gmra.mxu0 %v3190
        %v3340 = vpop.f32.mrf.mxu0
        %v3341 = vadd.f32 0.0, %v3340
        %v3342 = vpop.f32.mrf.mxu0
        %v3343 = vadd.f32 0.0, %v3342
        %3344 = vdwg.mxu0
        %v3345 = vadd.f32 %v2983, %v3266
        %v3346 = vadd.f32 %v2984, %v3268
        %v3347 = vadd.f32 %v2985, %v3271
        %v3348 = vadd.f32 %v2986, %v3273
        %v3349 = vadd.f32 %v2987, %v3276
        %v3350 = vadd.f32 %v2988, %v3278
        %v3351 = vadd.f32 %v2989, %v3281
        %v3352 = vadd.f32 %v2990, %v3283
        %v3353 = vadd.f32 %v2991, %v3286
        %v3354 = vadd.f32 %v2992, %v3288
        %v3355 = vadd.f32 %v2993, %v3291
        %v3356 = vadd.f32 %v2994, %v3293
        %v3357 = vadd.f32 %v2995, %v3296
        %v3358 = vadd.f32 %v2996, %v3298
        %v3359 = vadd.f32 %v2997, %v3301
        %v3360 = vadd.f32 %v2998, %v3303
        %v3361 = vadd.f32 %v2999, %v3306
        %v3362 = vadd.f32 %v3000, %v3308
        %v3363 = vadd.f32 %v3001, %v3311
        %v3364 = vadd.f32 %v3002, %v3313
        %v3365 = vadd.f32 %v3003, %v3316
        %v3366 = vadd.f32 %v3004, %v3318
        %v3367 = vadd.f32 %v3005, %v3321
        %v3368 = vadd.f32 %v3006, %v3323
        %v3369 = vadd.f32 %v3007, %v3326
        %v3370 = vadd.f32 %v3008, %v3328
        %v3371 = vadd.f32 %v3009, %v3331
        %v3372 = vadd.f32 %v3010, %v3333
        %v3373 = vadd.f32 %v3011, %v3336
        %v3374 = vadd.f32 %v3012, %v3338
        %v3375 = vadd.f32 %v3013, %v3341
        %v3376 = vadd.f32 %v3014, %v3343
        %v3377 = vsel %vm3015, 1, 0
        %v3378 = vsel %vm3016, 1, 0
        %v3379 = vsel %vm3017, 1, 0
        %v3380 = vsel %vm3018, 1, 0
        %v3381 = vsel %vm3019, 1, 0
        %v3382 = vsel %vm3020, 1, 0
        %v3383 = vsel %vm3021, 1, 0
        %v3384 = vsel %vm3022, 1, 0
        %v3385 = vsel %vm3023, 1, 0
        %v3386 = vsel %vm3024, 1, 0
        %v3387 = vsel %vm3025, 1, 0
        %v3388 = vsel %vm3026, 1, 0
        %v3389 = vsel %vm3027, 1, 0
        %v3390 = vsel %vm3028, 1, 0
        %v3391 = vsel %vm3029, 1, 0
        %v3392 = vsel %vm3030, 1, 0
        %v3393 = vsel %vm3031, 1, 0
        %v3394 = vsel %vm3032, 1, 0
        %v3395 = vsel %vm3033, 1, 0
        %v3396 = vsel %vm3034, 1, 0
        %v3397 = vsel %vm3035, 1, 0
        %v3398 = vsel %vm3036, 1, 0
        %v3399 = vsel %vm3037, 1, 0
        %v3400 = vsel %vm3038, 1, 0
        %v3401 = vsel %vm3039, 1, 0
        %v3402 = vsel %vm3040, 1, 0
        %v3403 = vsel %vm3041, 1, 0
        %v3404 = vsel %vm3042, 1, 0
        %v3405 = vsel %vm3043, 1, 0
        %v3406 = vsel %vm3044, 1, 0
        %v3407 = vsel %vm3045, 1, 0
        %v3408 = vsel %vm3046, 1, 0
        %vm3409 = vcmp.eq.s32.totalorder %v3377, 1
        %vm3410 = vcmp.eq.s32.totalorder %v3378, 1
        %vm3411 = vcmp.eq.s32.totalorder %v3379, 1
        %vm3412 = vcmp.eq.s32.totalorder %v3380, 1
        %vm3413 = vcmp.eq.s32.totalorder %v3381, 1
        %vm3414 = vcmp.eq.s32.totalorder %v3382, 1
        %vm3415 = vcmp.eq.s32.totalorder %v3383, 1
        %vm3416 = vcmp.eq.s32.totalorder %v3384, 1
        %vm3417 = vcmp.eq.s32.totalorder %v3385, 1
        %vm3418 = vcmp.eq.s32.totalorder %v3386, 1
        %vm3419 = vcmp.eq.s32.totalorder %v3387, 1
        %vm3420 = vcmp.eq.s32.totalorder %v3388, 1
        %vm3421 = vcmp.eq.s32.totalorder %v3389, 1
        %vm3422 = vcmp.eq.s32.totalorder %v3390, 1
        %vm3423 = vcmp.eq.s32.totalorder %v3391, 1
        %vm3424 = vcmp.eq.s32.totalorder %v3392, 1
        %vm3425 = vcmp.eq.s32.totalorder %v3393, 1
        %vm3426 = vcmp.eq.s32.totalorder %v3394, 1
        %vm3427 = vcmp.eq.s32.totalorder %v3395, 1
        %vm3428 = vcmp.eq.s32.totalorder %v3396, 1
        %vm3429 = vcmp.eq.s32.totalorder %v3397, 1
        %vm3430 = vcmp.eq.s32.totalorder %v3398, 1
        %vm3431 = vcmp.eq.s32.totalorder %v3399, 1
        %vm3432 = vcmp.eq.s32.totalorder %v3400, 1
        %vm3433 = vcmp.eq.s32.totalorder %v3401, 1
        %vm3434 = vcmp.eq.s32.totalorder %v3402, 1
        %vm3435 = vcmp.eq.s32.totalorder %v3403, 1
        %vm3436 = vcmp.eq.s32.totalorder %v3404, 1
        %vm3437 = vcmp.eq.s32.totalorder %v3405, 1
        %vm3438 = vcmp.eq.s32.totalorder %v3406, 1
        %vm3439 = vcmp.eq.s32.totalorder %v3407, 1
        %vm3440 = vcmp.eq.s32.totalorder %v3408, 1
        %v3441 = vsel %vm3409, %v971, 0.0
        %v3442 = vsel %vm3410, %v972, 0.0
        %v3443 = vsel %vm3411, %v973, 0.0
        %v3444 = vsel %vm3412, %v974, 0.0
        %v3445 = vsel %vm3413, %v975, 0.0
        %v3446 = vsel %vm3414, %v976, 0.0
        %v3447 = vsel %vm3415, %v977, 0.0
        %v3448 = vsel %vm3416, %v978, 0.0
        %v3449 = vsel %vm3417, %v979, 0.0
        %v3450 = vsel %vm3418, %v980, 0.0
        %v3451 = vsel %vm3419, %v981, 0.0
        %v3452 = vsel %vm3420, %v982, 0.0
        %v3453 = vsel %vm3421, %v983, 0.0
        %v3454 = vsel %vm3422, %v984, 0.0
        %v3455 = vsel %vm3423, %v985, 0.0
        %v3456 = vsel %vm3424, %v986, 0.0
        %v3457 = vsel %vm3425, %v987, 0.0
        %v3458 = vsel %vm3426, %v988, 0.0
        %v3459 = vsel %vm3427, %v989, 0.0
        %v3460 = vsel %vm3428, %v990, 0.0
        %v3461 = vsel %vm3429, %v991, 0.0
        %v3462 = vsel %vm3430, %v992, 0.0
        %v3463 = vsel %vm3431, %v993, 0.0
        %v3464 = vsel %vm3432, %v994, 0.0
        %v3465 = vsel %vm3433, %v995, 0.0
        %v3466 = vsel %vm3434, %v996, 0.0
        %v3467 = vsel %vm3435, %v997, 0.0
        %v3468 = vsel %vm3436, %v998, 0.0
        %v3469 = vsel %vm3437, %v999, 0.0
        %v3470 = vsel %vm3438, %v1000, 0.0
        %v3471 = vsel %vm3439, %v969, 0.0
        %v3472 = vsel %vm3440, %v970, 0.0
        %v3473 = vpack.c.bf16 %v3442, %v3441
        %v3474 = vpack.c.bf16 %v3444, %v3443
        %v3475 = vpack.c.bf16 %v3446, %v3445
        %v3476 = vpack.c.bf16 %v3448, %v3447
        %v3477 = vpack.c.bf16 %v3450, %v3449
        %v3478 = vpack.c.bf16 %v3452, %v3451
        %v3479 = vpack.c.bf16 %v3454, %v3453
        %v3480 = vpack.c.bf16 %v3456, %v3455
        %v3481 = vpack.c.bf16 %v3458, %v3457
        %v3482 = vpack.c.bf16 %v3460, %v3459
        %v3483 = vpack.c.bf16 %v3462, %v3461
        %v3484 = vpack.c.bf16 %v3464, %v3463
        %v3485 = vpack.c.bf16 %v3466, %v3465
        %v3486 = vpack.c.bf16 %v3468, %v3467
        %v3487 = vpack.c.bf16 %v3470, %v3469
        %v3488 = vpack.c.bf16 %v3472, %v3471
        %s3489 = scalar_lea.vmem [#allocation8], 448
        %v3490 = vld [vmem:[%s3489] sm:$0xf]
        %v3491 = vld [vmem:[%s3489 + $0x4] sm:$0xf]
        %v3492 = vld [vmem:[%s3489 + $0x8] sm:$0xf]
        %v3493 = vld [vmem:[%s3489 + $0xc] sm:$0xf]
        %v3494 = vld [vmem:[%s3489 + $0x10] sm:$0xf]
        %v3495 = vld [vmem:[%s3489 + $0x14] sm:$0xf]
        %v3496 = vld [vmem:[%s3489 + $0x18] sm:$0xf]
        %v3497 = vld [vmem:[%s3489 + $0x1c] sm:$0xf]
        %v3498 = vld [vmem:[%s3489 + $0x20] sm:$0xf]
        %v3499 = vld [vmem:[%s3489 + $0x24] sm:$0xf]
        %v3500 = vld [vmem:[%s3489 + $0x28] sm:$0xf]
        %v3501 = vld [vmem:[%s3489 + $0x2c] sm:$0xf]
        %v3502 = vld [vmem:[%s3489 + $0x30] sm:$0xf]
        %v3503 = vld [vmem:[%s3489 + $0x34] sm:$0xf]
        %v3504 = vld [vmem:[%s3489 + $0x38] sm:$0xf]
        %v3505 = vld [vmem:[%s3489 + $0x3c] sm:$0xf]
        %v3522 = vunpack.c.l.b16 %v3490
        %v3523 = vunpack.c.l.b16 %v3491
        %v3524 = vunpack.c.l.b16 %v3492
        %v3525 = vunpack.c.l.b16 %v3493
        %v3526 = vunpack.c.l.b16 %v3494
        %v3527 = vunpack.c.l.b16 %v3495
        %v3528 = vunpack.c.l.b16 %v3496
        %v3529 = vunpack.c.l.b16 %v3497
        %v3530 = vunpack.c.l.b16 %v3498
        %v3531 = vunpack.c.l.b16 %v3499
        %v3532 = vunpack.c.l.b16 %v3500
        %v3533 = vunpack.c.l.b16 %v3501
        %v3534 = vunpack.c.l.b16 %v3502
        %v3535 = vunpack.c.l.b16 %v3503
        %v3536 = vunpack.c.l.b16 %v3504
        %v3537 = vunpack.c.l.b16 %v3505
        %v3538 = vpack.c.b16 %v3523, %v3522
        %v3539 = vpack.c.b16 %v3525, %v3524
        %v3540 = vpack.c.b16 %v3527, %v3526
        %v3541 = vpack.c.b16 %v3529, %v3528
        %v3542 = vpack.c.b16 %v3531, %v3530
        %v3543 = vpack.c.b16 %v3533, %v3532
        %v3544 = vpack.c.b16 %v3535, %v3534
        %v3545 = vpack.c.b16 %v3537, %v3536
        %3554 = vmatpush.bf16.msra.mxu0 %v3545
        %3555 = vmatpush.bf16.msra.mxu0 %v3544
        %3556 = vmatpush.bf16.msra.mxu0 %v3543
        %3557 = vmatpush.bf16.msra.mxu0 %v3542
        %3558 = vmatpush.bf16.msra.mxu0 %v3541
        %3559 = vmatpush.bf16.msra.mxu0 %v3540
        %3560 = vmatpush.bf16.msra.mxu0 %v3539
        %3561 = vmatpush.bf16.msra.mxu0 %v3538
        %3562 = vmatmul.bf16.gmra.mxu0 %v3473
        %v3563 = vpop.f32.mrf.mxu0
        %v3564 = vadd.f32 0.0, %v3563
        %v3565 = vpop.f32.mrf.mxu0
        %v3566 = vadd.f32 0.0, %v3565
        %3567 = vmatmul.bf16.gmra.mxu0 %v3474
        %v3568 = vpop.f32.mrf.mxu0
        %v3569 = vadd.f32 0.0, %v3568
        %v3570 = vpop.f32.mrf.mxu0
        %v3571 = vadd.f32 0.0, %v3570
        %3572 = vmatmul.bf16.gmra.mxu0 %v3475
        %v3573 = vpop.f32.mrf.mxu0
        %v3574 = vadd.f32 0.0, %v3573
        %v3575 = vpop.f32.mrf.mxu0
        %v3576 = vadd.f32 0.0, %v3575
        %3577 = vmatmul.bf16.gmra.mxu0 %v3476
        %v3578 = vpop.f32.mrf.mxu0
        %v3579 = vadd.f32 0.0, %v3578
        %v3580 = vpop.f32.mrf.mxu0
        %v3581 = vadd.f32 0.0, %v3580
        %3582 = vmatmul.bf16.gmra.mxu0 %v3477
        %v3583 = vpop.f32.mrf.mxu0
        %v3584 = vadd.f32 0.0, %v3583
        %v3585 = vpop.f32.mrf.mxu0
        %v3586 = vadd.f32 0.0, %v3585
        %3587 = vmatmul.bf16.gmra.mxu0 %v3478
        %v3588 = vpop.f32.mrf.mxu0
        %v3589 = vadd.f32 0.0, %v3588
        %v3590 = vpop.f32.mrf.mxu0
        %v3591 = vadd.f32 0.0, %v3590
        %3592 = vmatmul.bf16.gmra.mxu0 %v3479
        %v3593 = vpop.f32.mrf.mxu0
        %v3594 = vadd.f32 0.0, %v3593
        %v3595 = vpop.f32.mrf.mxu0
        %v3596 = vadd.f32 0.0, %v3595
        %3597 = vmatmul.bf16.gmra.mxu0 %v3480
        %v3598 = vpop.f32.mrf.mxu0
        %v3599 = vadd.f32 0.0, %v3598
        %v3600 = vpop.f32.mrf.mxu0
        %v3601 = vadd.f32 0.0, %v3600
        %3602 = vmatmul.bf16.gmra.mxu0 %v3481
        %v3603 = vpop.f32.mrf.mxu0
        %v3604 = vadd.f32 0.0, %v3603
        %v3605 = vpop.f32.mrf.mxu0
        %v3606 = vadd.f32 0.0, %v3605
        %3607 = vmatmul.bf16.gmra.mxu0 %v3482
        %v3608 = vpop.f32.mrf.mxu0
        %v3609 = vadd.f32 0.0, %v3608
        %v3610 = vpop.f32.mrf.mxu0
        %v3611 = vadd.f32 0.0, %v3610
        %3612 = vmatmul.bf16.gmra.mxu0 %v3483
        %v3613 = vpop.f32.mrf.mxu0
        %v3614 = vadd.f32 0.0, %v3613
        %v3615 = vpop.f32.mrf.mxu0
        %v3616 = vadd.f32 0.0, %v3615
        %3617 = vmatmul.bf16.gmra.mxu0 %v3484
        %v3618 = vpop.f32.mrf.mxu0
        %v3619 = vadd.f32 0.0, %v3618
        %v3620 = vpop.f32.mrf.mxu0
        %v3621 = vadd.f32 0.0, %v3620
        %3622 = vmatmul.bf16.gmra.mxu0 %v3485
        %v3623 = vpop.f32.mrf.mxu0
        %v3624 = vadd.f32 0.0, %v3623
        %v3625 = vpop.f32.mrf.mxu0
        %v3626 = vadd.f32 0.0, %v3625
        %3627 = vmatmul.bf16.gmra.mxu0 %v3486
        %v3628 = vpop.f32.mrf.mxu0
        %v3629 = vadd.f32 0.0, %v3628
        %v3630 = vpop.f32.mrf.mxu0
        %v3631 = vadd.f32 0.0, %v3630
        %3632 = vmatmul.bf16.gmra.mxu0 %v3487
        %v3633 = vpop.f32.mrf.mxu0
        %v3634 = vadd.f32 0.0, %v3633
        %v3635 = vpop.f32.mrf.mxu0
        %v3636 = vadd.f32 0.0, %v3635
        %3637 = vmatmul.bf16.gmra.mxu0 %v3488
        %v3638 = vpop.f32.mrf.mxu0
        %v3639 = vadd.f32 0.0, %v3638
        %v3640 = vpop.f32.mrf.mxu0
        %v3641 = vadd.f32 0.0, %v3640
        %3642 = vdwg.mxu0
        %v3643 = vadd.f32 %v3345, %v3564
        %v3644 = vadd.f32 %v3346, %v3566
        %v3645 = vadd.f32 %v3347, %v3569
        %v3646 = vadd.f32 %v3348, %v3571
        %v3647 = vadd.f32 %v3349, %v3574
        %v3648 = vadd.f32 %v3350, %v3576
        %v3649 = vadd.f32 %v3351, %v3579
        %v3650 = vadd.f32 %v3352, %v3581
        %v3651 = vadd.f32 %v3353, %v3584
        %v3652 = vadd.f32 %v3354, %v3586
        %v3653 = vadd.f32 %v3355, %v3589
        %v3654 = vadd.f32 %v3356, %v3591
        %v3655 = vadd.f32 %v3357, %v3594
        %v3656 = vadd.f32 %v3358, %v3596
        %v3657 = vadd.f32 %v3359, %v3599
        %v3658 = vadd.f32 %v3360, %v3601
        %v3659 = vadd.f32 %v3361, %v3604
        %v3660 = vadd.f32 %v3362, %v3606
        %v3661 = vadd.f32 %v3363, %v3609
        %v3662 = vadd.f32 %v3364, %v3611
        %v3663 = vadd.f32 %v3365, %v3614
        %v3664 = vadd.f32 %v3366, %v3616
        %v3665 = vadd.f32 %v3367, %v3619
        %v3666 = vadd.f32 %v3368, %v3621
        %v3667 = vadd.f32 %v3369, %v3624
        %v3668 = vadd.f32 %v3370, %v3626
        %v3669 = vadd.f32 %v3371, %v3629
        %v3670 = vadd.f32 %v3372, %v3631
        %v3671 = vadd.f32 %v3373, %v3634
        %v3672 = vadd.f32 %v3374, %v3636
        %v3673 = vadd.f32 %v3375, %v3639
        %v3674 = vadd.f32 %v3376, %v3641
        %vm3675 = vmand %vm3015, %vm1855
        %vm3676 = vmand %vm3016, %vm1856
        %vm3677 = vmand %vm3017, %vm1857
        %vm3678 = vmand %vm3018, %vm1858
        %vm3679 = vmand %vm3019, %vm1859
        %vm3680 = vmand %vm3020, %vm1860
        %vm3681 = vmand %vm3021, %vm1861
        %vm3682 = vmand %vm3022, %vm1862
        %vm3683 = vmand %vm3023, %vm1863
        %vm3684 = vmand %vm3024, %vm1864
        %vm3685 = vmand %vm3025, %vm1865
        %vm3686 = vmand %vm3026, %vm1866
        %vm3687 = vmand %vm3027, %vm1867
        %vm3688 = vmand %vm3028, %vm1868
        %vm3689 = vmand %vm3029, %vm1869
        %vm3690 = vmand %vm3030, %vm1870
        %vm3691 = vmand %vm3031, %vm1871
        %vm3692 = vmand %vm3032, %vm1872
        %vm3693 = vmand %vm3033, %vm1873
        %vm3694 = vmand %vm3034, %vm1874
        %vm3695 = vmand %vm3035, %vm1875
        %vm3696 = vmand %vm3036, %vm1876
        %vm3697 = vmand %vm3037, %vm1877
        %vm3698 = vmand %vm3038, %vm1878
        %vm3699 = vmand %vm3039, %vm1879
        %vm3700 = vmand %vm3040, %vm1880
        %vm3701 = vmand %vm3041, %vm1881
        %vm3702 = vmand %vm3042, %vm1882
        %vm3703 = vmand %vm3043, %vm1883
        %vm3704 = vmand %vm3044, %vm1884
        %vm3705 = vmand %vm3045, %vm1885
        %vm3706 = vmand %vm3046, %vm1886
        %v3707 = vsel %vm3675, 1, 0
        %v3708 = vsel %vm3676, 1, 0
        %v3709 = vsel %vm3677, 1, 0
        %v3710 = vsel %vm3678, 1, 0
        %v3711 = vsel %vm3679, 1, 0
        %v3712 = vsel %vm3680, 1, 0
        %v3713 = vsel %vm3681, 1, 0
        %v3714 = vsel %vm3682, 1, 0
        %v3715 = vsel %vm3683, 1, 0
        %v3716 = vsel %vm3684, 1, 0
        %v3717 = vsel %vm3685, 1, 0
        %v3718 = vsel %vm3686, 1, 0
        %v3719 = vsel %vm3687, 1, 0
        %v3720 = vsel %vm3688, 1, 0
        %v3721 = vsel %vm3689, 1, 0
        %v3722 = vsel %vm3690, 1, 0
        %v3723 = vsel %vm3691, 1, 0
        %v3724 = vsel %vm3692, 1, 0
        %v3725 = vsel %vm3693, 1, 0
        %v3726 = vsel %vm3694, 1, 0
        %v3727 = vsel %vm3695, 1, 0
        %v3728 = vsel %vm3696, 1, 0
        %v3729 = vsel %vm3697, 1, 0
        %v3730 = vsel %vm3698, 1, 0
        %v3731 = vsel %vm3699, 1, 0
        %v3732 = vsel %vm3700, 1, 0
        %v3733 = vsel %vm3701, 1, 0
        %v3734 = vsel %vm3702, 1, 0
        %v3735 = vsel %vm3703, 1, 0
        %v3736 = vsel %vm3704, 1, 0
        %v3737 = vsel %vm3705, 1, 0
        %v3738 = vsel %vm3706, 1, 0
        %vm3739 = vcmp.eq.s32.totalorder %v3707, 1
        %vm3740 = vcmp.eq.s32.totalorder %v3708, 1
        %vm3741 = vcmp.eq.s32.totalorder %v3709, 1
        %vm3742 = vcmp.eq.s32.totalorder %v3710, 1
        %vm3743 = vcmp.eq.s32.totalorder %v3711, 1
        %vm3744 = vcmp.eq.s32.totalorder %v3712, 1
        %vm3745 = vcmp.eq.s32.totalorder %v3713, 1
        %vm3746 = vcmp.eq.s32.totalorder %v3714, 1
        %vm3747 = vcmp.eq.s32.totalorder %v3715, 1
        %vm3748 = vcmp.eq.s32.totalorder %v3716, 1
        %vm3749 = vcmp.eq.s32.totalorder %v3717, 1
        %vm3750 = vcmp.eq.s32.totalorder %v3718, 1
        %vm3751 = vcmp.eq.s32.totalorder %v3719, 1
        %vm3752 = vcmp.eq.s32.totalorder %v3720, 1
        %vm3753 = vcmp.eq.s32.totalorder %v3721, 1
        %vm3754 = vcmp.eq.s32.totalorder %v3722, 1
        %vm3755 = vcmp.eq.s32.totalorder %v3723, 1
        %vm3756 = vcmp.eq.s32.totalorder %v3724, 1
        %vm3757 = vcmp.eq.s32.totalorder %v3725, 1
        %vm3758 = vcmp.eq.s32.totalorder %v3726, 1
        %vm3759 = vcmp.eq.s32.totalorder %v3727, 1
        %vm3760 = vcmp.eq.s32.totalorder %v3728, 1
        %vm3761 = vcmp.eq.s32.totalorder %v3729, 1
        %vm3762 = vcmp.eq.s32.totalorder %v3730, 1
        %vm3763 = vcmp.eq.s32.totalorder %v3731, 1
        %vm3764 = vcmp.eq.s32.totalorder %v3732, 1
        %vm3765 = vcmp.eq.s32.totalorder %v3733, 1
        %vm3766 = vcmp.eq.s32.totalorder %v3734, 1
        %vm3767 = vcmp.eq.s32.totalorder %v3735, 1
        %vm3768 = vcmp.eq.s32.totalorder %v3736, 1
        %vm3769 = vcmp.eq.s32.totalorder %v3737, 1
        %vm3770 = vcmp.eq.s32.totalorder %v3738, 1
        %v3771 = vsel %vm3739, %v1851, 0.0
        %v3772 = vsel %vm3740, %v1850, 0.0
        %v3773 = vsel %vm3741, %v1849, 0.0
        %v3774 = vsel %vm3742, %v1848, 0.0
        %v3775 = vsel %vm3743, %v1847, 0.0
        %v3776 = vsel %vm3744, %v1846, 0.0
        %v3777 = vsel %vm3745, %v1845, 0.0
        %v3778 = vsel %vm3746, %v1844, 0.0
        %v3779 = vsel %vm3747, %v1843, 0.0
        %v3780 = vsel %vm3748, %v1842, 0.0
        %v3781 = vsel %vm3749, %v1841, 0.0
        %v3782 = vsel %vm3750, %v1840, 0.0
        %v3783 = vsel %vm3751, %v1839, 0.0
        %v3784 = vsel %vm3752, %v1838, 0.0
        %v3785 = vsel %vm3753, %v1837, 0.0
        %v3786 = vsel %vm3754, %v1836, 0.0
        %v3787 = vsel %vm3755, %v1835, 0.0
        %v3788 = vsel %vm3756, %v1834, 0.0
        %v3789 = vsel %vm3757, %v1833, 0.0
        %v3790 = vsel %vm3758, %v1832, 0.0
        %v3791 = vsel %vm3759, %v1831, 0.0
        %v3792 = vsel %vm3760, %v1830, 0.0
        %v3793 = vsel %vm3761, %v1829, 0.0
        %v3794 = vsel %vm3762, %v1828, 0.0
        %v3795 = vsel %vm3763, %v1827, 0.0
        %v3796 = vsel %vm3764, %v1826, 0.0
        %v3797 = vsel %vm3765, %v1825, 0.0
        %v3798 = vsel %vm3766, %v1824, 0.0
        %v3799 = vsel %vm3767, %v1823, 0.0
        %v3800 = vsel %vm3768, %v1854, 0.0
        %v3801 = vsel %vm3769, %v1853, 0.0
        %v3802 = vsel %vm3770, %v1852, 0.0
        %v3803 = vpack.c.bf16 %v3772, %v3771
        %v3804 = vpack.c.bf16 %v3774, %v3773
        %v3805 = vpack.c.bf16 %v3776, %v3775
        %v3806 = vpack.c.bf16 %v3778, %v3777
        %v3807 = vpack.c.bf16 %v3780, %v3779
        %v3808 = vpack.c.bf16 %v3782, %v3781
        %v3809 = vpack.c.bf16 %v3784, %v3783
        %v3810 = vpack.c.bf16 %v3786, %v3785
        %v3811 = vpack.c.bf16 %v3788, %v3787
        %v3812 = vpack.c.bf16 %v3790, %v3789
        %v3813 = vpack.c.bf16 %v3792, %v3791
        %v3814 = vpack.c.bf16 %v3794, %v3793
        %v3815 = vpack.c.bf16 %v3796, %v3795
        %v3816 = vpack.c.bf16 %v3798, %v3797
        %v3817 = vpack.c.bf16 %v3800, %v3799
        %v3818 = vpack.c.bf16 %v3802, %v3801
        %s3819 = scalar_lea.vmem [#allocation8], 512
        %v3820 = vld [vmem:[%s3819] sm:$0xf]
        %v3821 = vld [vmem:[%s3819 + $0x4] sm:$0xf]
        %v3822 = vld [vmem:[%s3819 + $0x8] sm:$0xf]
        %v3823 = vld [vmem:[%s3819 + $0xc] sm:$0xf]
        %v3824 = vld [vmem:[%s3819 + $0x10] sm:$0xf]
        %v3825 = vld [vmem:[%s3819 + $0x14] sm:$0xf]
        %v3826 = vld [vmem:[%s3819 + $0x18] sm:$0xf]
        %v3827 = vld [vmem:[%s3819 + $0x1c] sm:$0xf]
        %v3828 = vld [vmem:[%s3819 + $0x20] sm:$0xf]
        %v3829 = vld [vmem:[%s3819 + $0x24] sm:$0xf]
        %v3830 = vld [vmem:[%s3819 + $0x28] sm:$0xf]
        %v3831 = vld [vmem:[%s3819 + $0x2c] sm:$0xf]
        %v3832 = vld [vmem:[%s3819 + $0x30] sm:$0xf]
        %v3833 = vld [vmem:[%s3819 + $0x34] sm:$0xf]
        %v3834 = vld [vmem:[%s3819 + $0x38] sm:$0xf]
        %v3835 = vld [vmem:[%s3819 + $0x3c] sm:$0xf]
        %v3852 = vunpack.c.l.b16 %v3820
        %v3853 = vunpack.c.l.b16 %v3821
        %v3854 = vunpack.c.l.b16 %v3822
        %v3855 = vunpack.c.l.b16 %v3823
        %v3856 = vunpack.c.l.b16 %v3824
        %v3857 = vunpack.c.l.b16 %v3825
        %v3858 = vunpack.c.l.b16 %v3826
        %v3859 = vunpack.c.l.b16 %v3827
        %v3860 = vunpack.c.l.b16 %v3828
        %v3861 = vunpack.c.l.b16 %v3829
        %v3862 = vunpack.c.l.b16 %v3830
        %v3863 = vunpack.c.l.b16 %v3831
        %v3864 = vunpack.c.l.b16 %v3832
        %v3865 = vunpack.c.l.b16 %v3833
        %v3866 = vunpack.c.l.b16 %v3834
        %v3867 = vunpack.c.l.b16 %v3835
        %v3868 = vpack.c.b16 %v3853, %v3852
        %v3869 = vpack.c.b16 %v3855, %v3854
        %v3870 = vpack.c.b16 %v3857, %v3856
        %v3871 = vpack.c.b16 %v3859, %v3858
        %v3872 = vpack.c.b16 %v3861, %v3860
        %v3873 = vpack.c.b16 %v3863, %v3862
        %v3874 = vpack.c.b16 %v3865, %v3864
        %v3875 = vpack.c.b16 %v3867, %v3866
        %3884 = vmatpush.bf16.msra.mxu0 %v3875
        %3885 = vmatpush.bf16.msra.mxu0 %v3874
        %3886 = vmatpush.bf16.msra.mxu0 %v3873
        %3887 = vmatpush.bf16.msra.mxu0 %v3872
        %3888 = vmatpush.bf16.msra.mxu0 %v3871
        %3889 = vmatpush.bf16.msra.mxu0 %v3870
        %3890 = vmatpush.bf16.msra.mxu0 %v3869
        %3891 = vmatpush.bf16.msra.mxu0 %v3868
        %3892 = vmatmul.bf16.gmra.mxu0 %v3803
        %v3893 = vpop.f32.mrf.mxu0
        %v3894 = vadd.f32 0.0, %v3893
        %v3895 = vpop.f32.mrf.mxu0
        %v3896 = vadd.f32 0.0, %v3895
        %3897 = vmatmul.bf16.gmra.mxu0 %v3804
        %v3898 = vpop.f32.mrf.mxu0
        %v3899 = vadd.f32 0.0, %v3898
        %v3900 = vpop.f32.mrf.mxu0
        %v3901 = vadd.f32 0.0, %v3900
        %3902 = vmatmul.bf16.gmra.mxu0 %v3805
        %v3903 = vpop.f32.mrf.mxu0
        %v3904 = vadd.f32 0.0, %v3903
        %v3905 = vpop.f32.mrf.mxu0
        %v3906 = vadd.f32 0.0, %v3905
        %3907 = vmatmul.bf16.gmra.mxu0 %v3806
        %v3908 = vpop.f32.mrf.mxu0
        %v3909 = vadd.f32 0.0, %v3908
        %v3910 = vpop.f32.mrf.mxu0
        %v3911 = vadd.f32 0.0, %v3910
        %3912 = vmatmul.bf16.gmra.mxu0 %v3807
        %v3913 = vpop.f32.mrf.mxu0
        %v3914 = vadd.f32 0.0, %v3913
        %v3915 = vpop.f32.mrf.mxu0
        %v3916 = vadd.f32 0.0, %v3915
        %3917 = vmatmul.bf16.gmra.mxu0 %v3808
        %v3918 = vpop.f32.mrf.mxu0
        %v3919 = vadd.f32 0.0, %v3918
        %v3920 = vpop.f32.mrf.mxu0
        %v3921 = vadd.f32 0.0, %v3920
        %3922 = vmatmul.bf16.gmra.mxu0 %v3809
        %v3923 = vpop.f32.mrf.mxu0
        %v3924 = vadd.f32 0.0, %v3923
        %v3925 = vpop.f32.mrf.mxu0
        %v3926 = vadd.f32 0.0, %v3925
        %3927 = vmatmul.bf16.gmra.mxu0 %v3810
        %v3928 = vpop.f32.mrf.mxu0
        %v3929 = vadd.f32 0.0, %v3928
        %v3930 = vpop.f32.mrf.mxu0
        %v3931 = vadd.f32 0.0, %v3930
        %3932 = vmatmul.bf16.gmra.mxu0 %v3811
        %v3933 = vpop.f32.mrf.mxu0
        %v3934 = vadd.f32 0.0, %v3933
        %v3935 = vpop.f32.mrf.mxu0
        %v3936 = vadd.f32 0.0, %v3935
        %3937 = vmatmul.bf16.gmra.mxu0 %v3812
        %v3938 = vpop.f32.mrf.mxu0
        %v3939 = vadd.f32 0.0, %v3938
        %v3940 = vpop.f32.mrf.mxu0
        %v3941 = vadd.f32 0.0, %v3940
        %3942 = vmatmul.bf16.gmra.mxu0 %v3813
        %v3943 = vpop.f32.mrf.mxu0
        %v3944 = vadd.f32 0.0, %v3943
        %v3945 = vpop.f32.mrf.mxu0
        %v3946 = vadd.f32 0.0, %v3945
        %3947 = vmatmul.bf16.gmra.mxu0 %v3814
        %v3948 = vpop.f32.mrf.mxu0
        %v3949 = vadd.f32 0.0, %v3948
        %v3950 = vpop.f32.mrf.mxu0
        %v3951 = vadd.f32 0.0, %v3950
        %3952 = vmatmul.bf16.gmra.mxu0 %v3815
        %v3953 = vpop.f32.mrf.mxu0
        %v3954 = vadd.f32 0.0, %v3953
        %v3955 = vpop.f32.mrf.mxu0
        %v3956 = vadd.f32 0.0, %v3955
        %3957 = vmatmul.bf16.gmra.mxu0 %v3816
        %v3958 = vpop.f32.mrf.mxu0
        %v3959 = vadd.f32 0.0, %v3958
        %v3960 = vpop.f32.mrf.mxu0
        %v3961 = vadd.f32 0.0, %v3960
        %3962 = vmatmul.bf16.gmra.mxu0 %v3817
        %v3963 = vpop.f32.mrf.mxu0
        %v3964 = vadd.f32 0.0, %v3963
        %v3965 = vpop.f32.mrf.mxu0
        %v3966 = vadd.f32 0.0, %v3965
        %3967 = vmatmul.bf16.gmra.mxu0 %v3818
        %v3968 = vpop.f32.mrf.mxu0
        %v3969 = vadd.f32 0.0, %v3968
        %v3970 = vpop.f32.mrf.mxu0
        %v3971 = vadd.f32 0.0, %v3970
        %3972 = vdwg.mxu0
        %v3973 = vadd.f32 %v3643, %v3894
        %v3974 = vadd.f32 %v3644, %v3896
        %v3975 = vadd.f32 %v3645, %v3899
        %v3976 = vadd.f32 %v3646, %v3901
        %v3977 = vadd.f32 %v3647, %v3904
        %v3978 = vadd.f32 %v3648, %v3906
        %v3979 = vadd.f32 %v3649, %v3909
        %v3980 = vadd.f32 %v3650, %v3911
        %v3981 = vadd.f32 %v3651, %v3914
        %v3982 = vadd.f32 %v3652, %v3916
        %v3983 = vadd.f32 %v3653, %v3919
        %v3984 = vadd.f32 %v3654, %v3921
        %v3985 = vadd.f32 %v3655, %v3924
        %v3986 = vadd.f32 %v3656, %v3926
        %v3987 = vadd.f32 %v3657, %v3929
        %v3988 = vadd.f32 %v3658, %v3931
        %v3989 = vadd.f32 %v3659, %v3934
        %v3990 = vadd.f32 %v3660, %v3936
        %v3991 = vadd.f32 %v3661, %v3939
        %v3992 = vadd.f32 %v3662, %v3941
        %v3993 = vadd.f32 %v3663, %v3944
        %v3994 = vadd.f32 %v3664, %v3946
        %v3995 = vadd.f32 %v3665, %v3949
        %v3996 = vadd.f32 %v3666, %v3951
        %v3997 = vadd.f32 %v3667, %v3954
        %v3998 = vadd.f32 %v3668, %v3956
        %v3999 = vadd.f32 %v3669, %v3959
        %v4000 = vadd.f32 %v3670, %v3961
        %v4001 = vadd.f32 %v3671, %v3964
        %v4002 = vadd.f32 %v3672, %v3966
        %v4003 = vadd.f32 %v3673, %v3969
        %v4004 = vadd.f32 %v3674, %v3971
        %v4005 = vadd.f32 %v3973, %v3974
        %v4006 = vadd.f32 %v4005, %v3975
        %v4007 = vadd.f32 %v4006, %v3976
        %v4008 = vadd.f32 %v4007, %v3977
        %v4009 = vadd.f32 %v4008, %v3978
        %v4010 = vadd.f32 %v4009, %v3979
        %v4011 = vadd.f32 %v4010, %v3980
        %v4012 = vadd.f32 %v4011, %v3981
        %v4013 = vadd.f32 %v4012, %v3982
        %v4014 = vadd.f32 %v4013, %v3983
        %v4015 = vadd.f32 %v4014, %v3984
        %v4016 = vadd.f32 %v4015, %v3985
        %v4017 = vadd.f32 %v4016, %v3986
        %v4018 = vadd.f32 %v4017, %v3987
        %v4019 = vadd.f32 %v4018, %v3988
        %v4020 = vadd.f32 %v4019, %v3989
        %v4021 = vadd.f32 %v4020, %v3990
        %v4022 = vadd.f32 %v4021, %v3991
        %v4023 = vadd.f32 %v4022, %v3992
        %v4024 = vadd.f32 %v4023, %v3993
        %v4025 = vadd.f32 %v4024, %v3994
        %v4026 = vadd.f32 %v4025, %v3995
        %v4027 = vadd.f32 %v4026, %v3996
        %v4028 = vadd.f32 %v4027, %v3997
        %v4029 = vadd.f32 %v4028, %v3998
        %v4030 = vadd.f32 %v4029, %v3999
        %v4031 = vadd.f32 %v4030, %v4000
        %v4032 = vadd.f32 %v4031, %v4001
        %v4033 = vadd.f32 %v4032, %v4002
        %v4034 = vadd.f32 %v4033, %v4003
        %v4035 = vadd.f32 %v4034, %v4004
        %v4036 = vrot.slane %v4035, 4
        %v4037 = vadd.f32 %v4035, %v4036
        %v4038 = vrot.slane %v4037, 2
        %v4039 = vadd.f32 %v4037, %v4038
        %v4040 = vrot.slane %v4039, 1
        %v4041 = vadd.f32 %v4039, %v4040
        %v4042 = vmul.f32 %v4041, %v394
        %v4043 = vmul.f32 %v3973, %v3973
        %v4044 = vmul.f32 %v3974, %v3974
        %v4045 = vmul.f32 %v3975, %v3975
        %v4046 = vmul.f32 %v3976, %v3976
        %v4047 = vmul.f32 %v3977, %v3977
        %v4048 = vmul.f32 %v3978, %v3978
        %v4049 = vmul.f32 %v3979, %v3979
        %v4050 = vmul.f32 %v3980, %v3980
        %v4051 = vmul.f32 %v3981, %v3981
        %v4052 = vmul.f32 %v3982, %v3982
        %v4053 = vmul.f32 %v3983, %v3983
        %v4054 = vmul.f32 %v3984, %v3984
        %v4055 = vmul.f32 %v3985, %v3985
        %v4056 = vmul.f32 %v3986, %v3986
        %v4057 = vmul.f32 %v3987, %v3987
        %v4058 = vmul.f32 %v3988, %v3988
        %v4059 = vmul.f32 %v3989, %v3989
        %v4060 = vmul.f32 %v3990, %v3990
        %v4061 = vmul.f32 %v3991, %v3991
        %v4062 = vmul.f32 %v3992, %v3992
        %v4063 = vmul.f32 %v3993, %v3993
        %v4064 = vmul.f32 %v3994, %v3994
        %v4065 = vmul.f32 %v3995, %v3995
        %v4066 = vmul.f32 %v3996, %v3996
        %v4067 = vmul.f32 %v3997, %v3997
        %v4068 = vmul.f32 %v3998, %v3998
        %v4069 = vmul.f32 %v3999, %v3999
        %v4070 = vmul.f32 %v4000, %v4000
        %v4071 = vmul.f32 %v4001, %v4001
        %v4072 = vmul.f32 %v4002, %v4002
        %v4073 = vmul.f32 %v4003, %v4003
        %v4074 = vmul.f32 %v4004, %v4004
        %v4075 = vadd.f32 %v4043, %v4044
        %v4076 = vadd.f32 %v4075, %v4045
        %v4077 = vadd.f32 %v4076, %v4046
        %v4078 = vadd.f32 %v4077, %v4047
        %v4079 = vadd.f32 %v4078, %v4048
        %v4080 = vadd.f32 %v4079, %v4049
        %v4081 = vadd.f32 %v4080, %v4050
        %v4082 = vadd.f32 %v4081, %v4051
        %v4083 = vadd.f32 %v4082, %v4052
        %v4084 = vadd.f32 %v4083, %v4053
        %v4085 = vadd.f32 %v4084, %v4054
        %v4086 = vadd.f32 %v4085, %v4055
        %v4087 = vadd.f32 %v4086, %v4056
        %v4088 = vadd.f32 %v4087, %v4057
        %v4089 = vadd.f32 %v4088, %v4058
        %v4090 = vadd.f32 %v4089, %v4059
        %v4091 = vadd.f32 %v4090, %v4060
        %v4092 = vadd.f32 %v4091, %v4061
        %v4093 = vadd.f32 %v4092, %v4062
        %v4094 = vadd.f32 %v4093, %v4063
        %v4095 = vadd.f32 %v4094, %v4064
        %v4096 = vadd.f32 %v4095, %v4065
        %v4097 = vadd.f32 %v4096, %v4066
        %v4098 = vadd.f32 %v4097, %v4067
        %v4099 = vadd.f32 %v4098, %v4068
        %v4100 = vadd.f32 %v4099, %v4069
        %v4101 = vadd.f32 %v4100, %v4070
        %v4102 = vadd.f32 %v4101, %v4071
        %v4103 = vadd.f32 %v4102, %v4072
        %v4104 = vadd.f32 %v4103, %v4073
        %v4105 = vadd.f32 %v4104, %v4074
        %v4106 = vrot.slane %v4105, 4
        %v4107 = vadd.f32 %v4105, %v4106
        %v4108 = vrot.slane %v4107, 2
        %v4109 = vadd.f32 %v4107, %v4108
        %v4110 = vrot.slane %v4109, 1
        %v4111 = vadd.f32 %v4109, %v4110
        %v4112 = vmul.f32 %v4111, %v394
        %4113 = vrot.lane.b32.xlu0 %v4042, 127
        %v4114 = vpop.permute.xlu0 %4113
        %4115 = vrot.lane.b32.xlu0 %v4042, 1
        %v4116 = vpop.permute.xlu0 %4115
        %v4117 = vsel %vm344, %v4114, %v4116
        %v4118 = vadd.f32 %v4042, %v4117
        %v4119 = vmul.f32 %v4118, 0.5
        %4120 = vrot.lane.b32.xlu0 %v4112, 127
        %v4121 = vpop.permute.xlu0 %4120
        %4122 = vrot.lane.b32.xlu0 %v4112, 1
        %v4123 = vpop.permute.xlu0 %4122
        %v4124 = vsel %vm344, %v4121, %v4123
        %v4125 = vadd.f32 %v4112, %v4124
        %v4126 = vmul.f32 %v4125, 0.5
        %v4127 = vmul.f32 %v4119, %v4119
        %v4128 = vsub.f32 %v4126, %v4127
        %v4129 = vmax.f32 %v4128, 0.0
        %v4130 = vadd.f32 %v4129, 1e-05
        %v4131 = vrsqrt.pop %v4130
        %v4132 = vmul.f32 %v4131, %v4130
        %v4133 = vmul.f32 %v4132, %v4131
        %v4134 = vmul.f32 0.5, %v4133
        %v4135 = vsub.f32 1.5, %v4134
        %v4136 = vmul.f32 %v4131, %v4135
        %vm4137 = vweird.f32 %v4130
        %vm4138 = vweird.f32 %v4131
        %vm4139 = vmor %vm4137, %vm4138
        %v4140 = vsel %vm4139, %v4131, %v4136
        %v4141 = vmul.f32 %v4140, %v349
        %v4142 = vmul.f32 %v4119, %v4141
        %v4143 = vsub.f32 %v350, %v4142
        %v4144 = vperm.slane %v4141, 0
        %v4145 = vmul.f32 %v3973, %v4144
        %v4146 = vmul.f32 %v3974, %v4144
        %v4147 = vmul.f32 %v3975, %v4144
        %v4148 = vmul.f32 %v3976, %v4144
        %v4149 = vmul.f32 %v3977, %v4144
        %v4150 = vmul.f32 %v3978, %v4144
        %v4151 = vmul.f32 %v3979, %v4144
        %v4152 = vmul.f32 %v3980, %v4144
        %v4153 = vmul.f32 %v3981, %v4144
        %v4154 = vmul.f32 %v3982, %v4144
        %v4155 = vmul.f32 %v3983, %v4144
        %v4156 = vmul.f32 %v3984, %v4144
        %v4157 = vmul.f32 %v3985, %v4144
        %v4158 = vmul.f32 %v3986, %v4144
        %v4159 = vmul.f32 %v3987, %v4144
        %v4160 = vmul.f32 %v3988, %v4144
        %v4161 = vmul.f32 %v3989, %v4144
        %v4162 = vmul.f32 %v3990, %v4144
        %v4163 = vmul.f32 %v3991, %v4144
        %v4164 = vmul.f32 %v3992, %v4144
        %v4165 = vmul.f32 %v3993, %v4144
        %v4166 = vmul.f32 %v3994, %v4144
        %v4167 = vmul.f32 %v3995, %v4144
        %v4168 = vmul.f32 %v3996, %v4144
        %v4169 = vmul.f32 %v3997, %v4144
        %v4170 = vmul.f32 %v3998, %v4144
        %v4171 = vmul.f32 %v3999, %v4144
        %v4172 = vmul.f32 %v4000, %v4144
        %v4173 = vmul.f32 %v4001, %v4144
        %v4174 = vmul.f32 %v4002, %v4144
        %v4175 = vmul.f32 %v4003, %v4144
        %v4176 = vmul.f32 %v4004, %v4144
        %v4177 = vperm.slane %v4143, 0
        %v4178 = vadd.f32 %v4145, %v4177
        %v4179 = vadd.f32 %v4146, %v4177
        %v4180 = vadd.f32 %v4147, %v4177
        %v4181 = vadd.f32 %v4148, %v4177
        %v4182 = vadd.f32 %v4149, %v4177
        %v4183 = vadd.f32 %v4150, %v4177
        %v4184 = vadd.f32 %v4151, %v4177
        %v4185 = vadd.f32 %v4152, %v4177
        %v4186 = vadd.f32 %v4153, %v4177
        %v4187 = vadd.f32 %v4154, %v4177
        %v4188 = vadd.f32 %v4155, %v4177
        %v4189 = vadd.f32 %v4156, %v4177
        %v4190 = vadd.f32 %v4157, %v4177
        %v4191 = vadd.f32 %v4158, %v4177
        %v4192 = vadd.f32 %v4159, %v4177
        %v4193 = vadd.f32 %v4160, %v4177
        %v4194 = vadd.f32 %v4161, %v4177
        %v4195 = vadd.f32 %v4162, %v4177
        %v4196 = vadd.f32 %v4163, %v4177
        %v4197 = vadd.f32 %v4164, %v4177
        %v4198 = vadd.f32 %v4165, %v4177
        %v4199 = vadd.f32 %v4166, %v4177
        %v4200 = vadd.f32 %v4167, %v4177
        %v4201 = vadd.f32 %v4168, %v4177
        %v4202 = vadd.f32 %v4169, %v4177
        %v4203 = vadd.f32 %v4170, %v4177
        %v4204 = vadd.f32 %v4171, %v4177
        %v4205 = vadd.f32 %v4172, %v4177
        %v4206 = vadd.f32 %v4173, %v4177
        %v4207 = vadd.f32 %v4174, %v4177
        %v4208 = vadd.f32 %v4175, %v4177
        %v4209 = vadd.f32 %v4176, %v4177
        %v4210 = vmax.f32 %v4178, 0.0
        %v4211 = vmax.f32 %v4179, 0.0
        %v4212 = vmax.f32 %v4180, 0.0
        %v4213 = vmax.f32 %v4181, 0.0
        %v4214 = vmax.f32 %v4182, 0.0
        %v4215 = vmax.f32 %v4183, 0.0
        %v4216 = vmax.f32 %v4184, 0.0
        %v4217 = vmax.f32 %v4185, 0.0
        %v4218 = vmax.f32 %v4186, 0.0
        %v4219 = vmax.f32 %v4187, 0.0
        %v4220 = vmax.f32 %v4188, 0.0
        %v4221 = vmax.f32 %v4189, 0.0
        %v4222 = vmax.f32 %v4190, 0.0
        %v4223 = vmax.f32 %v4191, 0.0
        %v4224 = vmax.f32 %v4192, 0.0
        %v4225 = vmax.f32 %v4193, 0.0
        %v4226 = vmax.f32 %v4194, 0.0
        %v4227 = vmax.f32 %v4195, 0.0
        %v4228 = vmax.f32 %v4196, 0.0
        %v4229 = vmax.f32 %v4197, 0.0
        %v4230 = vmax.f32 %v4198, 0.0
        %v4231 = vmax.f32 %v4199, 0.0
        %v4232 = vmax.f32 %v4200, 0.0
        %v4233 = vmax.f32 %v4201, 0.0
        %v4234 = vmax.f32 %v4202, 0.0
        %v4235 = vmax.f32 %v4203, 0.0
        %v4236 = vmax.f32 %v4204, 0.0
        %v4237 = vmax.f32 %v4205, 0.0
        %v4238 = vmax.f32 %v4206, 0.0
        %v4239 = vmax.f32 %v4207, 0.0
        %v4240 = vmax.f32 %v4208, 0.0
        %v4241 = vmax.f32 %v4209, 0.0
        %v4242 = vpack.c.bf16 %v4211, %v4210
        %v4243 = vpack.c.bf16 %v4213, %v4212
        %v4244 = vpack.c.bf16 %v4215, %v4214
        %v4245 = vpack.c.bf16 %v4217, %v4216
        %v4246 = vpack.c.bf16 %v4219, %v4218
        %v4247 = vpack.c.bf16 %v4221, %v4220
        %v4248 = vpack.c.bf16 %v4223, %v4222
        %v4249 = vpack.c.bf16 %v4225, %v4224
        %v4250 = vpack.c.bf16 %v4227, %v4226
        %v4251 = vpack.c.bf16 %v4229, %v4228
        %v4252 = vpack.c.bf16 %v4231, %v4230
        %v4253 = vpack.c.bf16 %v4233, %v4232
        %v4254 = vpack.c.bf16 %v4235, %v4234
        %v4255 = vpack.c.bf16 %v4237, %v4236
        %v4256 = vpack.c.bf16 %v4239, %v4238
        %v4257 = vpack.c.bf16 %v4241, %v4240
        %v4258 = vld [vmem:[#allocation10] sm:$0xf]
        %v4259 = vld [vmem:[#allocation10 + $0x4] sm:$0xf]
        %v4260 = vld [vmem:[#allocation10 + $0x8] sm:$0xf]
        %v4261 = vld [vmem:[#allocation10 + $0xc] sm:$0xf]
        %v4262 = vld [vmem:[#allocation10 + $0x10] sm:$0xf]
        %v4263 = vld [vmem:[#allocation10 + $0x14] sm:$0xf]
        %v4264 = vld [vmem:[#allocation10 + $0x18] sm:$0xf]
        %v4265 = vld [vmem:[#allocation10 + $0x1c] sm:$0xf]
        %v4266 = vld [vmem:[#allocation10 + $0x20] sm:$0xf]
        %v4267 = vld [vmem:[#allocation10 + $0x24] sm:$0xf]
        %v4268 = vld [vmem:[#allocation10 + $0x28] sm:$0xf]
        %v4269 = vld [vmem:[#allocation10 + $0x2c] sm:$0xf]
        %v4270 = vld [vmem:[#allocation10 + $0x30] sm:$0xf]
        %v4271 = vld [vmem:[#allocation10 + $0x34] sm:$0xf]
        %v4272 = vld [vmem:[#allocation10 + $0x38] sm:$0xf]
        %v4273 = vld [vmem:[#allocation10 + $0x3c] sm:$0xf]
        %v4290 = vunpack.c.l.b16 %v4258
        %v4291 = vunpack.c.l.b16 %v4259
        %v4292 = vunpack.c.l.b16 %v4260
        %v4293 = vunpack.c.l.b16 %v4261
        %v4294 = vunpack.c.l.b16 %v4262
        %v4295 = vunpack.c.l.b16 %v4263
        %v4296 = vunpack.c.l.b16 %v4264
        %v4297 = vunpack.c.l.b16 %v4265
        %v4298 = vunpack.c.l.b16 %v4266
        %v4299 = vunpack.c.l.b16 %v4267
        %v4300 = vunpack.c.l.b16 %v4268
        %v4301 = vunpack.c.l.b16 %v4269
        %v4302 = vunpack.c.l.b16 %v4270
        %v4303 = vunpack.c.l.b16 %v4271
        %v4304 = vunpack.c.l.b16 %v4272
        %v4305 = vunpack.c.l.b16 %v4273
        %v4306 = vpack.c.b16 %v4291, %v4290
        %v4307 = vpack.c.b16 %v4293, %v4292
        %v4308 = vpack.c.b16 %v4295, %v4294
        %v4309 = vpack.c.b16 %v4297, %v4296
        %v4310 = vpack.c.b16 %v4299, %v4298
        %v4311 = vpack.c.b16 %v4301, %v4300
        %v4312 = vpack.c.b16 %v4303, %v4302
        %v4313 = vpack.c.b16 %v4305, %v4304
        %4322 = vmatpush.bf16.msra.mxu0 %v4313
        %4323 = vmatpush.bf16.msra.mxu0 %v4312
        %4324 = vmatpush.bf16.msra.mxu0 %v4311
        %4325 = vmatpush.bf16.msra.mxu0 %v4310
        %4326 = vmatpush.bf16.msra.mxu0 %v4309
        %4327 = vmatpush.bf16.msra.mxu0 %v4308
        %4328 = vmatpush.bf16.msra.mxu0 %v4307
        %4329 = vmatpush.bf16.msra.mxu0 %v4306
        %4330 = vmatmul.bf16.gmra.mxu0 %v4242
        %v4331 = vpop.f32.mrf.mxu0
        %v4332 = vadd.f32 %v309, %v4331
        %v4333 = vpop.f32.mrf.mxu0
        %v4334 = vadd.f32 %v310, %v4333
        %4335 = vmatmul.bf16.gmra.mxu0 %v4243
        %v4336 = vpop.f32.mrf.mxu0
        %v4337 = vadd.f32 %v311, %v4336
        %v4338 = vpop.f32.mrf.mxu0
        %v4339 = vadd.f32 %v312, %v4338
        %4340 = vmatmul.bf16.gmra.mxu0 %v4244
        %v4341 = vpop.f32.mrf.mxu0
        %v4342 = vadd.f32 %v313, %v4341
        %v4343 = vpop.f32.mrf.mxu0
        %v4344 = vadd.f32 %v314, %v4343
        %4345 = vmatmul.bf16.gmra.mxu0 %v4245
        %v4346 = vpop.f32.mrf.mxu0
        %v4347 = vadd.f32 %v315, %v4346
        %v4348 = vpop.f32.mrf.mxu0
        %v4349 = vadd.f32 %v316, %v4348
        %4350 = vmatmul.bf16.gmra.mxu0 %v4246
        %v4351 = vpop.f32.mrf.mxu0
        %v4352 = vadd.f32 %v317, %v4351
        %v4353 = vpop.f32.mrf.mxu0
        %v4354 = vadd.f32 %v318, %v4353
        %4355 = vmatmul.bf16.gmra.mxu0 %v4247
        %v4356 = vpop.f32.mrf.mxu0
        %v4357 = vadd.f32 %v319, %v4356
        %v4358 = vpop.f32.mrf.mxu0
        %v4359 = vadd.f32 %v320, %v4358
        %4360 = vmatmul.bf16.gmra.mxu0 %v4248
        %v4361 = vpop.f32.mrf.mxu0
        %v4362 = vadd.f32 %v321, %v4361
        %v4363 = vpop.f32.mrf.mxu0
        %v4364 = vadd.f32 %v322, %v4363
        %4365 = vmatmul.bf16.gmra.mxu0 %v4249
        %v4366 = vpop.f32.mrf.mxu0
        %v4367 = vadd.f32 %v323, %v4366
        %v4368 = vpop.f32.mrf.mxu0
        %v4369 = vadd.f32 %v324, %v4368
        %4370 = vmatmul.bf16.gmra.mxu0 %v4250
        %v4371 = vpop.f32.mrf.mxu0
        %v4372 = vadd.f32 %v325, %v4371
        %v4373 = vpop.f32.mrf.mxu0
        %v4374 = vadd.f32 %v326, %v4373
        %4375 = vmatmul.bf16.gmra.mxu0 %v4251
        %v4376 = vpop.f32.mrf.mxu0
        %v4377 = vadd.f32 %v327, %v4376
        %v4378 = vpop.f32.mrf.mxu0
        %v4379 = vadd.f32 %v328, %v4378
        %4380 = vmatmul.bf16.gmra.mxu0 %v4252
        %v4381 = vpop.f32.mrf.mxu0
        %v4382 = vadd.f32 %v329, %v4381
        %v4383 = vpop.f32.mrf.mxu0
        %v4384 = vadd.f32 %v330, %v4383
        %4385 = vmatmul.bf16.gmra.mxu0 %v4253
        %v4386 = vpop.f32.mrf.mxu0
        %v4387 = vadd.f32 %v331, %v4386
        %v4388 = vpop.f32.mrf.mxu0
        %v4389 = vadd.f32 %v332, %v4388
        %4390 = vmatmul.bf16.gmra.mxu0 %v4254
        %v4391 = vpop.f32.mrf.mxu0
        %v4392 = vadd.f32 %v333, %v4391
        %v4393 = vpop.f32.mrf.mxu0
        %v4394 = vadd.f32 %v334, %v4393
        %4395 = vmatmul.bf16.gmra.mxu0 %v4255
        %v4396 = vpop.f32.mrf.mxu0
        %v4397 = vadd.f32 %v335, %v4396
        %v4398 = vpop.f32.mrf.mxu0
        %v4399 = vadd.f32 %v336, %v4398
        %4400 = vmatmul.bf16.gmra.mxu0 %v4256
        %v4401 = vpop.f32.mrf.mxu0
        %v4402 = vadd.f32 %v337, %v4401
        %v4403 = vpop.f32.mrf.mxu0
        %v4404 = vadd.f32 %v338, %v4403
        %4405 = vmatmul.bf16.gmra.mxu0 %v4257
        %v4406 = vpop.f32.mrf.mxu0
        %v4407 = vadd.f32 %v339, %v4406
        %v4408 = vpop.f32.mrf.mxu0
        %v4409 = vadd.f32 %v340, %v4408
        %4410 = vdwg.mxu0
        %4411 = vst [vmem:[%s308] sm:$0xff] %v4332
        %4412 = vst [vmem:[%s308 + $0x8] sm:$0xff] %v4334
        %4413 = vst [vmem:[%s308 + $0x10] sm:$0xff] %v4337
        %4414 = vst [vmem:[%s308 + $0x18] sm:$0xff] %v4339
        %4415 = vst [vmem:[%s308 + $0x20] sm:$0xff] %v4342
        %4416 = vst [vmem:[%s308 + $0x28] sm:$0xff] %v4344
        %4417 = vst [vmem:[%s308 + $0x30] sm:$0xff] %v4347
        %4418 = vst [vmem:[%s308 + $0x38] sm:$0xff] %v4349
        %4419 = vst [vmem:[%s308 + $0x40] sm:$0xff] %v4352
        %4420 = vst [vmem:[%s308 + $0x48] sm:$0xff] %v4354
        %4421 = vst [vmem:[%s308 + $0x50] sm:$0xff] %v4357
        %4422 = vst [vmem:[%s308 + $0x58] sm:$0xff] %v4359
        %4423 = vst [vmem:[%s308 + $0x60] sm:$0xff] %v4362
        %4424 = vst [vmem:[%s308 + $0x68] sm:$0xff] %v4364
        %4425 = vst [vmem:[%s308 + $0x70] sm:$0xff] %v4367
        %4426 = vst [vmem:[%s308 + $0x78] sm:$0xff] %v4369
        %4427 = vst [vmem:[%s308 + $0x80] sm:$0xff] %v4372
        %4428 = vst [vmem:[%s308 + $0x88] sm:$0xff] %v4374
        %4429 = vst [vmem:[%s308 + $0x90] sm:$0xff] %v4377
        %4430 = vst [vmem:[%s308 + $0x98] sm:$0xff] %v4379
        %4431 = vst [vmem:[%s308 + $0xa0] sm:$0xff] %v4382
        %4432 = vst [vmem:[%s308 + $0xa8] sm:$0xff] %v4384
        %4433 = vst [vmem:[%s308 + $0xb0] sm:$0xff] %v4387
        %4434 = vst [vmem:[%s308 + $0xb8] sm:$0xff] %v4389
        %4435 = vst [vmem:[%s308 + $0xc0] sm:$0xff] %v4392
        %4436 = vst [vmem:[%s308 + $0xc8] sm:$0xff] %v4394
        %4437 = vst [vmem:[%s308 + $0xd0] sm:$0xff] %v4397
        %4438 = vst [vmem:[%s308 + $0xd8] sm:$0xff] %v4399
        %4439 = vst [vmem:[%s308 + $0xe0] sm:$0xff] %v4402
        %4440 = vst [vmem:[%s308 + $0xe8] sm:$0xff] %v4404
        %4441 = vst [vmem:[%s308 + $0xf0] sm:$0xff] %v4407
        %4442 = vst [vmem:[%s308 + $0xf8] sm:$0xff] %v4409
        %s4443 = sand.u32 %s142, 1
        %s4444 = scalar_lea.sflag [#allocation4], %s4443
        %s4445 = sand.u32 %s142, 1
        %s4446 = smul.addr %s4445, 256
        %s4447 = scalar_lea.vmem [#allocation11], %s4446
        // Predicated region
        $region61: #{tpu_custom_call.1} parent=39 // pred_check
          %p4448 = pneg %p152
        $region62: #{tpu_custom_call.1} parent=39 // pred_check_branch
          %4450 = sbr.rel (%p4448) target = $region64
        $region63: #{tpu_custom_call.1} parent=39 // pred_region
          %4452 = vsyncadd %s4444, 0
          %s4453 = smul.addr %s24, 32
          %s4454 = smul.addr %s4453, 8
          %s4455 = scalar_lea.hbm %s5, %s4454
          %s4456 = sshll.u32 %s4447, 4
          %s4457 = int_to_ptr.vmem [resolvable:$true] %s4456
          %s4458 = sshll.u32 %s4455, 4
          %s4459 = int_to_ptr.hbm [resolvable:$true] %s4458
          %4464 = dma.vmem_to_hbm [thread:$0]  %s4457, 4096, %s4459, %s4444, 128, 128, 8
        $region64: #{tpu_custom_call.1} parent=39 // pred_fallthru
          _
      $region40: #{tpu_custom_call.1} parent=5 // pred_fallthru
        _
      %p4465 = scmp.le.s32.totalorder 2, %s19
      // Predicated region
      $region65: #{tpu_custom_call.1} parent=5 // pred_check
        %p4466 = pneg %p4465
      $region66: #{tpu_custom_call.1} parent=5 // pred_check_branch
        %4468 = sbr.rel (%p4466) target = $region68
      $region67: #{tpu_custom_call.1} parent=5 // pred_region
        %s4469 = ssub.s32 %s19, 2
        // Predicated region
        $region69: #{tpu_custom_call.1} parent=67 // pred_check
          %p4470 = pneg %p158
        $region70: #{tpu_custom_call.1} parent=67 // pred_check_branch
          %4472 = sbr.rel (%p4470) target = $region72
        $region71: #{tpu_custom_call.1} parent=67 // pred_region
          %s4473 = sand.u32 %s143, 1
          %s4474 = scalar_lea.sflag [#allocation4], %s4473
          %s4475 = sand.u32 %s143, 1
          %s4476 = smul.addr %s4475, 256
          %s4477 = scalar_lea.vmem [#allocation11], %s4476
          %4479 = dma.done %s4474, 4096
        $region72: #{tpu_custom_call.1} parent=67 // pred_fallthru
          _
      $region68: #{tpu_custom_call.1} parent=5 // pred_fallthru
        _
    $region6: #{tpu_custom_call.1} parent=1 // loop_footer
      %s23 = sadd.s32 1, %s19
    $region7: #{tpu_custom_call.1} parent=1 // loop_footer_branch
      %18 = sbr.rel target = $region3
    $region8: #{tpu_custom_call.1} parent=1 // loop_exit
      _
    %4480 = vsyncpa [#allocation3], 1
    %s4481 = scalar_lea.sflag [#allocation3], 1
    %4482 = vsyncpa %s4481, 1
    %4483 = vsyncpa [#allocation6], 1
    %4484 = vsyncpa [#allocation9], 1
    %4485 = vsyncpa [#allocation4], 1
    %s4486 = scalar_lea.sflag [#allocation4], 1
    %4487 = vsyncpa %s4486, 1

</llo_original>
